<compile_context>
chip_gen: v7x
topology: tpu7x:2x2x1
jax: 0.10.0
libtpu: 0.0.40
codegen_flags: <defaults>
</compile_context>

<pallas_src>
import functools

import jax
import jax.numpy as jnp
import numpy as np
from jax import lax
from jax.experimental import pallas as pl
from jax.experimental.pallas import tpu as pltpu

EPS = 1e-5


def _round_up(x, m):
    return ((x + m - 1) // m) * m


# ---------------------------------------------------------------------------
# Fused Pallas kernel (one grid step = one (branch, batch) pair):
#   conv3x3+BN+ReLU (template & search) -> depthwise xcorr -> 1x1 head
# ---------------------------------------------------------------------------
def _fused_rpn_kernel(z_ref, x_ref,
                      wk_ref, sk_ref, bk_ref,
                      ws_ref, ss_ref, bs_ref,
                      w1_ref, s1_ref, b1_ref,
                      w2_ref, b2_ref,
                      o_ref,
                      zcols, xcols, kern_scr, srch_scr, *, R):
    """Per-branch hidden size H.  Scratch row strides are padded (Wkp / Wsp).

    z_ref: (1, Hz, Wz, Cin) bf16     x_ref: (1, Hx, Wx, Cin) bf16
    wk/ws: (1, 9*Cin, H) bf16        sk/bk, ss/bs, s1/b1: (1, 1, H) f32
    w1: (1, H, H) bf16               w2: (1, H, Cp) bf16   b2: (1, 1, Cp) f32
    o_ref: (1, 1, Ho*Wsp, Cp) f32 (lane-dense, W-padded; sliced in wrapper)
    scratch: zcols (Hk, Wkp, 9*Cin) bf16, xcols (Hs, Wsp, 9*Cin) bf16,
             kern_scr (Hk*Wkp, H) f32, srch_scr (Hs*Wsp, H) f32
    """
    _, Hz, Wz, Cin = z_ref.shape
    _, Hx, Wx, _ = x_ref.shape
    Hk, Wk = Hz - 2, Wz - 2              # template features (3x3 VALID conv)
    Hs, Ws = Hx - 2, Wx - 2              # search features
    Ho = Hs - Hk + 1                     # correlation map rows
    Wkp = zcols.shape[1]                 # padded row strides (multiples of 16)
    Wsp = xcols.shape[1]
    H = kern_scr.shape[-1]               # per-branch hidden channels

    # --- im2col: 9 per-tap slab copies into bf16 scratch ----------------------
    def im2col(src_ref, cols_ref, Hc, Wc, Wcp):
        if Wcp > Wc:  # zero the W-pad once so pad conv outputs stay finite
            cols_ref[:, Wc:, :] = jnp.zeros((Hc, Wcp - Wc, 9 * Cin),
                                            cols_ref.dtype)
        for t in range(9):
            dy, dx = t // 3, t % 3
            cols_ref[:, :Wc, t * Cin:(t + 1) * Cin] = (
                src_ref[0, dy:dy + Hc, dx:dx + Wc, :])

    # --- 3x3 conv (no bias) + folded BN + ReLU as one MXU matmul --------------
    def conv_bn_relu(cols_ref, M, w, scale, shift, out_ref):
        acc = jnp.dot(cols_ref[...].reshape(M, 9 * Cin), w,
                      preferred_element_type=jnp.float32)
        out_ref[...] = jnp.maximum(acc * scale + shift, 0.0)

    im2col(z_ref, zcols, Hk, Wk, Wkp)
    conv_bn_relu(zcols, Hk * Wkp, wk_ref[0], sk_ref[0], bk_ref[0], kern_scr)
    im2col(x_ref, xcols, Hs, Ws, Wsp)
    conv_bn_relu(xcols, Hs * Wsp, ws_ref[0], ss_ref[0], bs_ref[0], srch_scr)

    # --- depthwise xcorr (R output rows / tile) fused with the 1x1 head -------
    Mt = R * Wsp
    n_tiles = Ho // R

    def tile_body(i, carry):
        h0 = i * R
        acc = jnp.zeros((Mt, H), jnp.float32)
        for dy in range(Hk):                         # taps unrolled
            base = pl.multiple_of((h0 + dy) * Wsp, 8)
            rows = srch_scr[pl.ds(base, Mt), :]      # aligned R-row slab
            for dx in range(Wk):
                kt = kern_scr[dy * Wkp + dx:dy * Wkp + dx + 1, :]   # (1, H)
                src = rows if dx == 0 else pltpu.roll(rows, shift=Mt - dx,
                                                      axis=0)
                acc = acc + src * kt                 # f32 VPU accumulate
        # head: 1x1 conv -> BN -> ReLU -> 1x1 conv (+bias), lane-dense output.
        # (MXU work hidden under the VPU/XLU-bound xcorr of the next tiles.)
        hid = jnp.dot(acc.astype(jnp.bfloat16), w1_ref[0],
                      preferred_element_type=jnp.float32)
        hid = jnp.maximum(hid * s1_ref[0] + b1_ref[0], 0.0)
        out = jnp.dot(hid.astype(jnp.bfloat16), w2_ref[0],
                      preferred_element_type=jnp.float32) + b2_ref[0]
        o_ref[0, 0, pl.ds(pl.multiple_of(h0 * Wsp, 8), Mt), :] = out
        return carry

    lax.fori_loop(0, n_tiles, tile_body, 0)


# ---------------------------------------------------------------------------
# Parameter helpers (BN folding, branch stacking, deterministic synthetic init)
# ---------------------------------------------------------------------------
def fold_bn(gamma, beta, mean, var):
    scale = gamma / jnp.sqrt(var + EPS)
    shift = beta - mean * scale
    return scale[None, :], shift[None, :]


def init_bn(key, c):
    k1, k2, k3, k4 = jax.random.split(key, 4)
    gamma = jax.random.uniform(k1, (c,), jnp.float32, 0.5, 1.5)
    beta = 0.1 * jax.random.normal(k2, (c,), jnp.float32)
    mean = 0.1 * jax.random.normal(k3, (c,), jnp.float32)
    var = jax.random.uniform(k4, (c,), jnp.float32, 0.5, 1.5)
    return gamma, beta, mean, var


def init_dwxcorr_params(key, in_ch, hidden, out_ch):
    ks = jax.random.split(key, 8)
    p = {}
    p["wk"] = 0.1 * jax.random.normal(ks[0], (3, 3, in_ch, hidden), jnp.float32)
    p["bnk"] = init_bn(ks[1], hidden)
    p["ws"] = 0.1 * jax.random.normal(ks[2], (3, 3, in_ch, hidden), jnp.float32)
    p["bns"] = init_bn(ks[3], hidden)
    p["w1"] = 0.1 * jax.random.normal(ks[4], (hidden, hidden), jnp.float32)
    p["bnh"] = init_bn(ks[5], hidden)
    p["w2"] = 0.1 * jax.random.normal(ks[6], (hidden, out_ch), jnp.float32)
    p["b2"] = 0.1 * jax.random.normal(ks[7], (out_ch,), jnp.float32)
    return p


def prepare_fused_params(params):
    """Fold BN, cast weights to bf16, pad head output to 128 lanes, stack the
    (cls, loc) branches on a leading axis (= grid axis 0).  Run ONCE, outside
    the jitted forward (pure fixed overhead otherwise)."""
    branches = (params["cls"], params["loc"])
    cin = branches[0]["wk"].shape[2]
    hidden = branches[0]["wk"].shape[3]
    out_dims = [p["w2"].shape[1] for p in branches]
    cp = max(128, _round_up(max(out_dims), 128))       # lane-dense output

    def stack(fn):
        return jnp.stack([fn(p) for p in branches], axis=0)

    def pad_w2(p):
        o = p["w2"].shape[1]
        return jnp.zeros((hidden, cp), jnp.float32).at[:, :o].set(
            p["w2"]).astype(jnp.bfloat16)

    def pad_b2(p):
        o = p["b2"].shape[0]
        return jnp.zeros((1, cp), jnp.float32).at[:, :o].set(p["b2"])

    return dict(
        wk=stack(lambda p: p["wk"].reshape(9 * cin, hidden).astype(jnp.bfloat16)),
        ws=stack(lambda p: p["ws"].reshape(9 * cin, hidden).astype(jnp.bfloat16)),
        sk=stack(lambda p: fold_bn(*p["bnk"])[0]),
        bk=stack(lambda p: fold_bn(*p["bnk"])[1]),
        ss=stack(lambda p: fold_bn(*p["bns"])[0]),
        bs=stack(lambda p: fold_bn(*p["bns"])[1]),
        s1=stack(lambda p: fold_bn(*p["bnh"])[0]),
        b1=stack(lambda p: fold_bn(*p["bnh"])[1]),
        w1=stack(lambda p: p["w1"].astype(jnp.bfloat16)),
        w2=stack(pad_w2),
        b2=stack(pad_b2),
    )


# ---------------------------------------------------------------------------
# Forward (wrapper): NCHW <-> NHWC glue + single fused pallas_call
# ---------------------------------------------------------------------------
def depthwise_rpn_forward(fp, z_f_nchw, x_f_nchw, *, out_cls, out_loc):
    z = jnp.transpose(z_f_nchw, (0, 2, 3, 1)).astype(jnp.bfloat16)
    x = jnp.transpose(x_f_nchw, (0, 2, 3, 1)).astype(jnp.bfloat16)

    B, Hz, Wz, Cin = z.shape
    _, Hx, Wx, _ = x.shape
    Hk, Wk = Hz - 2, Wz - 2
    Hs, Ws = Hx - 2, Wx - 2
    Ho, Wo = Hs - Hk + 1, Ws - Wk + 1
    Wkp = _round_up(Wk, 16)            # bf16-friendly padded row strides
    Wsp = _round_up(Ws, 16)
    H = fp["w1"].shape[-1]
    Cp = fp["w2"].shape[-1]

    # output rows per register accumulator: keep acc <= ~24 vregs, R | Ho
    R = 1
    for r in (4, 3, 2):
        if Ho % r == 0 and r * Wsp * H * 4 <= 96 * 1024:
            R = r
            break

    kernel = functools.partial(_fused_rpn_kernel, R=R)

    out = pl.pallas_call(
        kernel,
        out_shape=jax.ShapeDtypeStruct((B, 2, Ho * Wsp, Cp), jnp.float32),
        # (branch, batch): branch is the slow axis so the per-branch weights
        # only change block index once -> re-DMA'd once per branch.
        grid=(2, B),
        in_specs=[
            pl.BlockSpec((1, Hz, Wz, Cin), lambda j, b: (b, 0, 0, 0)),
            pl.BlockSpec((1, Hx, Wx, Cin), lambda j, b: (b, 0, 0, 0)),
            pl.BlockSpec((1, 9 * Cin, H), lambda j, b: (j, 0, 0)),
            pl.BlockSpec((1, 1, H), lambda j, b: (j, 0, 0)),
            pl.BlockSpec((1, 1, H), lambda j, b: (j, 0, 0)),
            pl.BlockSpec((1, 9 * Cin, H), lambda j, b: (j, 0, 0)),
            pl.BlockSpec((1, 1, H), lambda j, b: (j, 0, 0)),
            pl.BlockSpec((1, 1, H), lambda j, b: (j, 0, 0)),
            pl.BlockSpec((1, H, H), lambda j, b: (j, 0, 0)),
            pl.BlockSpec((1, 1, H), lambda j, b: (j, 0, 0)),
            pl.BlockSpec((1, 1, H), lambda j, b: (j, 0, 0)),
            pl.BlockSpec((1, H, Cp), lambda j, b: (j, 0, 0)),
            pl.BlockSpec((1, 1, Cp), lambda j, b: (j, 0, 0)),
        ],
        out_specs=pl.BlockSpec((1, 1, Ho * Wsp, Cp), lambda j, b: (b, j, 0, 0)),
        scratch_shapes=[
            pltpu.VMEM((Hk, Wkp, 9 * Cin), jnp.bfloat16),   # template im2col
            pltpu.VMEM((Hs, Wsp, 9 * Cin), jnp.bfloat16),   # search im2col
            pltpu.VMEM((Hk * Wkp, H), jnp.float32),         # template features
            pltpu.VMEM((Hs * Wsp, H), jnp.float32),         # search features
        ],
        compiler_params=pltpu.CompilerParams(
            dimension_semantics=("parallel", "parallel"),
            vmem_limit_bytes=32 * 1024 * 1024,
        ),
    )(z, x, fp["wk"], fp["sk"], fp["bk"], fp["ws"], fp["ss"], fp["bs"],
      fp["w1"], fp["s1"], fp["b1"], fp["w2"], fp["b2"])

    out = out.reshape(B, 2, Ho, Wsp, Cp)
    cls = jnp.transpose(out[:, 0, :, :Wo, :out_cls], (0, 3, 1, 2))   # NCHW
    loc = jnp.transpose(out[:, 1, :, :Wo, :out_loc], (0, 3, 1, 2))   # NCHW
    return cls, loc


# ---------------------------------------------------------------------------
# Independent plain-JAX reference (f32, HIGHEST precision) for sanity check
# ---------------------------------------------------------------------------
def _ref_conv3x3(x, w, scale, shift):
    y = lax.conv_general_dilated(x, w, (1, 1), "VALID",
                                 dimension_numbers=("NHWC", "HWIO", "NHWC"),
                                 precision=lax.Precision.HIGHEST)
    return jnp.maximum(y * scale[0] + shift[0], 0.0)


def _ref_xcorr(search, kernel):
    B, Hs, Ws, C = search.shape
    _, Hk, Wk, _ = kernel.shape
    s = jnp.transpose(search, (1, 2, 0, 3)).reshape(1, Hs, Ws, B * C)
    k = jnp.transpose(kernel, (1, 2, 0, 3)).reshape(Hk, Wk, 1, B * C)
    o = lax.conv_general_dilated(s, k, (1, 1), "VALID",
                                 dimension_numbers=("NHWC", "HWIO", "NHWC"),
                                 feature_group_count=B * C,
                                 precision=lax.Precision.HIGHEST)
    Ho, Wo = Hs - Hk + 1, Ws - Wk + 1
    return jnp.transpose(o.reshape(Ho, Wo, B, C), (2, 0, 1, 3))


def _ref_dwxcorr(p, z, x):
    sk, hk = fold_bn(*p["bnk"])
    ss, hs = fold_bn(*p["bns"])
    s1, h1 = fold_bn(*p["bnh"])
    kern = _ref_conv3x3(z, p["wk"], sk, hk)
    srch = _ref_conv3x3(x, p["ws"], ss, hs)
    feat = _ref_xcorr(srch, kern)
    h = jnp.maximum(jnp.einsum("bhwc,cd->bhwd", feat, p["w1"],
                               precision=lax.Precision.HIGHEST) * s1[0] + h1[0], 0.0)
    return jnp.einsum("bhwc,cd->bhwd", h, p["w2"],
                      precision=lax.Precision.HIGHEST) + p["b2"]


# ---------------------------------------------------------------------------
if __name__ == "__main__":
    key = jax.random.PRNGKey(0)
    k_cls, k_loc, k_z, k_x = jax.random.split(key, 4)

    # small synthetic config (PyTorch defaults are anchor=5, in=256, hidden=256)
    anchor_num = 2
    in_channels = 4
    hidden = 8          # DepthwiseRPN's "out_channels" == DepthwiseXCorr hidden
    B = 2
    z_f = jax.random.normal(k_z, (B, in_channels, 7, 7), jnp.float32)     # template (NCHW)
    x_f = jax.random.normal(k_x, (B, in_channels, 15, 15), jnp.float32)   # search   (NCHW)

    params = {
        "cls": init_dwxcorr_params(k_cls, in_channels, hidden, 2 * anchor_num),
        "loc": init_dwxcorr_params(k_loc, in_channels, hidden, 4 * anchor_num),
    }

    # hoisted out of the jitted per-call path (done once at "load" time)
    fp = jax.tree_util.tree_map(jnp.asarray, prepare_fused_params(params))

    forward = jax.jit(depthwise_rpn_forward,
                      static_argnames=("out_cls", "out_loc"))
    cls_out, loc_out = jax.block_until_ready(
        forward(fp, z_f, x_f, out_cls=2 * anchor_num, out_loc=4 * anchor_num))

    assert cls_out.shape == (B, 2 * anchor_num, 9, 9), cls_out.shape
    assert loc_out.shape == (B, 4 * anchor_num, 9, 9), loc_out.shape

    # correctness check against an independent plain-JAX reference
    z_nhwc = jnp.transpose(z_f, (0, 2, 3, 1))
    x_nhwc = jnp.transpose(x_f, (0, 2, 3, 1))
    cls_ref = jnp.transpose(_ref_dwxcorr(params["cls"], z_nhwc, x_nhwc), (0, 3, 1, 2))
    loc_ref = jnp.transpose(_ref_dwxcorr(params["loc"], z_nhwc, x_nhwc), (0, 3, 1, 2))
    np.testing.assert_allclose(np.asarray(cls_out), np.asarray(cls_ref), rtol=5e-2, atol=5e-2)
    np.testing.assert_allclose(np.asarray(loc_out), np.asarray(loc_ref), rtol=5e-2, atol=5e-2)

    print("KERNEL_OK")
</pallas_src>

<mosaic_0001>
module attributes {stable_mosaic.version = 11 : i64} {
  func.func @_fused_rpn_kernel(%arg0: i32, %arg1: i32, %arg2: memref<1x7x7x4xbf16, #tpu.memory_space<vmem>>, %arg3: memref<1x15x15x4xbf16, #tpu.memory_space<vmem>>, %arg4: memref<1x36x8xbf16, #tpu.memory_space<vmem>>, %arg5: memref<1x1x8xf32, #tpu.memory_space<vmem>>, %arg6: memref<1x1x8xf32, #tpu.memory_space<vmem>>, %arg7: memref<1x36x8xbf16, #tpu.memory_space<vmem>>, %arg8: memref<1x1x8xf32, #tpu.memory_space<vmem>>, %arg9: memref<1x1x8xf32, #tpu.memory_space<vmem>>, %arg10: memref<1x8x8xbf16, #tpu.memory_space<vmem>>, %arg11: memref<1x1x8xf32, #tpu.memory_space<vmem>>, %arg12: memref<1x1x8xf32, #tpu.memory_space<vmem>>, %arg13: memref<1x8x128xbf16, #tpu.memory_space<vmem>>, %arg14: memref<1x1x128xf32, #tpu.memory_space<vmem>>, %arg15: memref<1x1x144x128xf32, #tpu.memory_space<vmem>>, %arg16: memref<5x16x36xbf16, #tpu.memory_space<vmem>>, %arg17: memref<13x16x36xbf16, #tpu.memory_space<vmem>>, %arg18: memref<80x8xf32, #tpu.memory_space<vmem>>, %arg19: memref<208x8xf32, #tpu.memory_space<vmem>>) attributes {dimension_semantics = [#tpu.dimension_semantics<parallel>, #tpu.dimension_semantics<parallel>], iteration_bounds = array<i64: 2, 2>, scalar_prefetch = 0 : i64, scratch_operands = 4 : i64, tpu.core_type = #tpu.core_type<tc>, window_params = [{transform_indices = @transform_0, window_bounds = array<i64: 1, 7, 7, 4>}, {transform_indices = @transform_1, window_bounds = array<i64: 1, 15, 15, 4>}, {transform_indices = @transform_2, window_bounds = array<i64: 1, 36, 8>}, {transform_indices = @transform_3, window_bounds = array<i64: 1, 1, 8>}, {transform_indices = @transform_4, window_bounds = array<i64: 1, 1, 8>}, {transform_indices = @transform_5, window_bounds = array<i64: 1, 36, 8>}, {transform_indices = @transform_6, window_bounds = array<i64: 1, 1, 8>}, {transform_indices = @transform_7, window_bounds = array<i64: 1, 1, 8>}, {transform_indices = @transform_8, window_bounds = array<i64: 1, 8, 8>}, {transform_indices = @transform_9, window_bounds = array<i64: 1, 1, 8>}, {transform_indices = @transform_10, window_bounds = array<i64: 1, 1, 8>}, {transform_indices = @transform_11, window_bounds = array<i64: 1, 8, 128>}, {transform_indices = @transform_12, window_bounds = array<i64: 1, 1, 128>}, {transform_indices = @transform_13, window_bounds = array<i64: 1, 1, 144, 128>}]} {
    %cst = arith.constant 0.000000e+00 : bf16
    %0 = vector.broadcast %cst : bf16 to vector<5x11x36xbf16>
    %c0 = arith.constant 0 : index
    %c5 = arith.constant 5 : index
    %c0_0 = arith.constant 0 : index
    %1 = vector.load %arg16[%c0, %c5, %c0_0] : memref<5x16x36xbf16, #tpu.memory_space<vmem>>, vector<5x11x36xbf16>
    tpu.vector_store %arg16[%c0, %c5, %c0_0], %0 {strides = array<i32>} : memref<5x16x36xbf16, #tpu.memory_space<vmem>>, vector<5x11x36xbf16>,
    %c0_1 = arith.constant 0 : index
    %c0_2 = arith.constant 0 : index
    %c0_3 = arith.constant 0 : index
    %c0_4 = arith.constant 0 : index
    %2 = vector.load %arg2[%c0_1, %c0_2, %c0_3, %c0_4] : memref<1x7x7x4xbf16, #tpu.memory_space<vmem>>, vector<1x5x5x4xbf16>
    %3 = vector.shape_cast %2 : vector<1x5x5x4xbf16> to vector<5x5x4xbf16>
    %c0_5 = arith.constant 0 : index
    %c0_6 = arith.constant 0 : index
    %c0_7 = arith.constant 0 : index
    %4 = vector.load %arg16[%c0_5, %c0_6, %c0_7] : memref<5x16x36xbf16, #tpu.memory_space<vmem>>, vector<5x5x4xbf16>
    tpu.vector_store %arg16[%c0_5, %c0_6, %c0_7], %3 {strides = array<i32>} : memref<5x16x36xbf16, #tpu.memory_space<vmem>>, vector<5x5x4xbf16>,
    %c0_8 = arith.constant 0 : index
    %c0_9 = arith.constant 0 : index
    %c1 = arith.constant 1 : index
    %c0_10 = arith.constant 0 : index
    %5 = vector.load %arg2[%c0_8, %c0_9, %c1, %c0_10] : memref<1x7x7x4xbf16, #tpu.memory_space<vmem>>, vector<1x5x5x4xbf16>
    %6 = vector.shape_cast %5 : vector<1x5x5x4xbf16> to vector<5x5x4xbf16>
    %c0_11 = arith.constant 0 : index
    %c0_12 = arith.constant 0 : index
    %c4 = arith.constant 4 : index
    %7 = vector.load %arg16[%c0_11, %c0_12, %c4] : memref<5x16x36xbf16, #tpu.memory_space<vmem>>, vector<5x5x4xbf16>
    tpu.vector_store %arg16[%c0_11, %c0_12, %c4], %6 {strides = array<i32>} : memref<5x16x36xbf16, #tpu.memory_space<vmem>>, vector<5x5x4xbf16>,
    %c0_13 = arith.constant 0 : index
    %c0_14 = arith.constant 0 : index
    %c2 = arith.constant 2 : index
    %c0_15 = arith.constant 0 : index
    %8 = vector.load %arg2[%c0_13, %c0_14, %c2, %c0_15] : memref<1x7x7x4xbf16, #tpu.memory_space<vmem>>, vector<1x5x5x4xbf16>
    %9 = vector.shape_cast %8 : vector<1x5x5x4xbf16> to vector<5x5x4xbf16>
    %c0_16 = arith.constant 0 : index
    %c0_17 = arith.constant 0 : index
    %c8 = arith.constant 8 : index
    %10 = vector.load %arg16[%c0_16, %c0_17, %c8] : memref<5x16x36xbf16, #tpu.memory_space<vmem>>, vector<5x5x4xbf16>
    tpu.vector_store %arg16[%c0_16, %c0_17, %c8], %9 {strides = array<i32>} : memref<5x16x36xbf16, #tpu.memory_space<vmem>>, vector<5x5x4xbf16>,
    %c0_18 = arith.constant 0 : index
    %c1_19 = arith.constant 1 : index
    %c0_20 = arith.constant 0 : index
    %c0_21 = arith.constant 0 : index
    %11 = vector.load %arg2[%c0_18, %c1_19, %c0_20, %c0_21] : memref<1x7x7x4xbf16, #tpu.memory_space<vmem>>, vector<1x5x5x4xbf16>
    %12 = vector.shape_cast %11 : vector<1x5x5x4xbf16> to vector<5x5x4xbf16>
    %c0_22 = arith.constant 0 : index
    %c0_23 = arith.constant 0 : index
    %c12 = arith.constant 12 : index
    %13 = vector.load %arg16[%c0_22, %c0_23, %c12] : memref<5x16x36xbf16, #tpu.memory_space<vmem>>, vector<5x5x4xbf16>
    tpu.vector_store %arg16[%c0_22, %c0_23, %c12], %12 {strides = array<i32>} : memref<5x16x36xbf16, #tpu.memory_space<vmem>>, vector<5x5x4xbf16>,
    %c0_24 = arith.constant 0 : index
    %c1_25 = arith.constant 1 : index
    %c1_26 = arith.constant 1 : index
    %c0_27 = arith.constant 0 : index
    %14 = vector.load %arg2[%c0_24, %c1_25, %c1_26, %c0_27] : memref<1x7x7x4xbf16, #tpu.memory_space<vmem>>, vector<1x5x5x4xbf16>
    %15 = vector.shape_cast %14 : vector<1x5x5x4xbf16> to vector<5x5x4xbf16>
    %c0_28 = arith.constant 0 : index
    %c0_29 = arith.constant 0 : index
    %c16 = arith.constant 16 : index
    %16 = vector.load %arg16[%c0_28, %c0_29, %c16] : memref<5x16x36xbf16, #tpu.memory_space<vmem>>, vector<5x5x4xbf16>
    tpu.vector_store %arg16[%c0_28, %c0_29, %c16], %15 {strides = array<i32>} : memref<5x16x36xbf16, #tpu.memory_space<vmem>>, vector<5x5x4xbf16>,
    %c0_30 = arith.constant 0 : index
    %c1_31 = arith.constant 1 : index
    %c2_32 = arith.constant 2 : index
    %c0_33 = arith.constant 0 : index
    %17 = vector.load %arg2[%c0_30, %c1_31, %c2_32, %c0_33] : memref<1x7x7x4xbf16, #tpu.memory_space<vmem>>, vector<1x5x5x4xbf16>
    %18 = vector.shape_cast %17 : vector<1x5x5x4xbf16> to vector<5x5x4xbf16>
    %c0_34 = arith.constant 0 : index
    %c0_35 = arith.constant 0 : index
    %c20 = arith.constant 20 : index
    %19 = vector.load %arg16[%c0_34, %c0_35, %c20] : memref<5x16x36xbf16, #tpu.memory_space<vmem>>, vector<5x5x4xbf16>
    tpu.vector_store %arg16[%c0_34, %c0_35, %c20], %18 {strides = array<i32>} : memref<5x16x36xbf16, #tpu.memory_space<vmem>>, vector<5x5x4xbf16>,
    %c0_36 = arith.constant 0 : index
    %c2_37 = arith.constant 2 : index
    %c0_38 = arith.constant 0 : index
    %c0_39 = arith.constant 0 : index
    %20 = vector.load %arg2[%c0_36, %c2_37, %c0_38, %c0_39] : memref<1x7x7x4xbf16, #tpu.memory_space<vmem>>, vector<1x5x5x4xbf16>
    %21 = vector.shape_cast %20 : vector<1x5x5x4xbf16> to vector<5x5x4xbf16>
    %c0_40 = arith.constant 0 : index
    %c0_41 = arith.constant 0 : index
    %c24 = arith.constant 24 : index
    %22 = vector.load %arg16[%c0_40, %c0_41, %c24] : memref<5x16x36xbf16, #tpu.memory_space<vmem>>, vector<5x5x4xbf16>
    tpu.vector_store %arg16[%c0_40, %c0_41, %c24], %21 {strides = array<i32>} : memref<5x16x36xbf16, #tpu.memory_space<vmem>>, vector<5x5x4xbf16>,
    %c0_42 = arith.constant 0 : index
    %c2_43 = arith.constant 2 : index
    %c1_44 = arith.constant 1 : index
    %c0_45 = arith.constant 0 : index
    %23 = vector.load %arg2[%c0_42, %c2_43, %c1_44, %c0_45] : memref<1x7x7x4xbf16, #tpu.memory_space<vmem>>, vector<1x5x5x4xbf16>
    %24 = vector.shape_cast %23 : vector<1x5x5x4xbf16> to vector<5x5x4xbf16>
    %c0_46 = arith.constant 0 : index
    %c0_47 = arith.constant 0 : index
    %c28 = arith.constant 28 : index
    %25 = vector.load %arg16[%c0_46, %c0_47, %c28] : memref<5x16x36xbf16, #tpu.memory_space<vmem>>, vector<5x5x4xbf16>
    tpu.vector_store %arg16[%c0_46, %c0_47, %c28], %24 {strides = array<i32>} : memref<5x16x36xbf16, #tpu.memory_space<vmem>>, vector<5x5x4xbf16>,
    %c0_48 = arith.constant 0 : index
    %c2_49 = arith.constant 2 : index
    %c2_50 = arith.constant 2 : index
    %c0_51 = arith.constant 0 : index
    %26 = vector.load %arg2[%c0_48, %c2_49, %c2_50, %c0_51] : memref<1x7x7x4xbf16, #tpu.memory_space<vmem>>, vector<1x5x5x4xbf16>
    %27 = vector.shape_cast %26 : vector<1x5x5x4xbf16> to vector<5x5x4xbf16>
    %c0_52 = arith.constant 0 : index
    %c0_53 = arith.constant 0 : index
    %c32 = arith.constant 32 : index
    %28 = vector.load %arg16[%c0_52, %c0_53, %c32] : memref<5x16x36xbf16, #tpu.memory_space<vmem>>, vector<5x5x4xbf16>
    tpu.vector_store %arg16[%c0_52, %c0_53, %c32], %27 {strides = array<i32>} : memref<5x16x36xbf16, #tpu.memory_space<vmem>>, vector<5x5x4xbf16>,
    %c0_54 = arith.constant 0 : index
    %c0_55 = arith.constant 0 : index
    %c0_56 = arith.constant 0 : index
    %29 = vector.load %arg4[%c0_54, %c0_55, %c0_56] : memref<1x36x8xbf16, #tpu.memory_space<vmem>>, vector<1x36x8xbf16>
    %30 = vector.shape_cast %29 : vector<1x36x8xbf16> to vector<36x8xbf16>
    %c0_57 = arith.constant 0 : index
    %c0_58 = arith.constant 0 : index
    %c0_59 = arith.constant 0 : index
    %31 = vector.load %arg5[%c0_57, %c0_58, %c0_59] : memref<1x1x8xf32, #tpu.memory_space<vmem>>, vector<1x1x8xf32>
    %32 = vector.shape_cast %31 : vector<1x1x8xf32> to vector<1x8xf32>
    %c0_60 = arith.constant 0 : index
    %c0_61 = arith.constant 0 : index
    %c0_62 = arith.constant 0 : index
    %33 = vector.load %arg6[%c0_60, %c0_61, %c0_62] : memref<1x1x8xf32, #tpu.memory_space<vmem>>, vector<1x1x8xf32>
    %34 = vector.shape_cast %33 : vector<1x1x8xf32> to vector<1x8xf32>
    %c0_63 = arith.constant 0 : index
    %c0_64 = arith.constant 0 : index
    %c0_65 = arith.constant 0 : index
    %35 = vector.load %arg16[%c0_63, %c0_64, %c0_65] : memref<5x16x36xbf16, #tpu.memory_space<vmem>>, vector<5x16x36xbf16>
    %36 = vector.shape_cast %35 : vector<5x16x36xbf16> to vector<80x36xbf16>
    %cst_66 = arith.constant dense<0.000000e+00> : vector<80x8xf32>
    %37 = tpu.matmul %36, %30, %cst_66 {dimension_numbers = #tpu.dot_dimension_numbers<[1], [0], [0], [1], [0, 0, 1, 1], [], []>} : vector<80x36xbf16>, vector<36x8xbf16>, vector<80x8xf32> -> vector<80x8xf32>
    %38 = vector.broadcast %32 : vector<1x8xf32> to vector<80x8xf32>
    %39 = arith.mulf %37, %38 : vector<80x8xf32>
    %40 = vector.broadcast %34 : vector<1x8xf32> to vector<80x8xf32>
    %41 = arith.addf %39, %40 : vector<80x8xf32>
    %cst_67 = arith.constant 0.000000e+00 : f32
    %42 = vector.broadcast %cst_67 : f32 to vector<80x8xf32>
    %43 = arith.maximumf %41, %42 : vector<80x8xf32>
    %c0_68 = arith.constant 0 : index
    %c0_69 = arith.constant 0 : index
    %44 = vector.load %arg18[%c0_68, %c0_69] : memref<80x8xf32, #tpu.memory_space<vmem>>, vector<80x8xf32>
    tpu.vector_store %arg18[%c0_68, %c0_69], %43 {strides = array<i32>} : memref<80x8xf32, #tpu.memory_space<vmem>>, vector<80x8xf32>,
    %cst_70 = arith.constant 0.000000e+00 : bf16
    %45 = vector.broadcast %cst_70 : bf16 to vector<13x3x36xbf16>
    %c0_71 = arith.constant 0 : index
    %c13 = arith.constant 13 : index
    %c0_72 = arith.constant 0 : index
    %46 = vector.load %arg17[%c0_71, %c13, %c0_72] : memref<13x16x36xbf16, #tpu.memory_space<vmem>>, vector<13x3x36xbf16>
    tpu.vector_store %arg17[%c0_71, %c13, %c0_72], %45 {strides = array<i32>} : memref<13x16x36xbf16, #tpu.memory_space<vmem>>, vector<13x3x36xbf16>,
    %c0_73 = arith.constant 0 : index
    %c0_74 = arith.constant 0 : index
    %c0_75 = arith.constant 0 : index
    %c0_76 = arith.constant 0 : index
    %47 = vector.load %arg3[%c0_73, %c0_74, %c0_75, %c0_76] : memref<1x15x15x4xbf16, #tpu.memory_space<vmem>>, vector<1x13x13x4xbf16>
    %48 = vector.shape_cast %47 : vector<1x13x13x4xbf16> to vector<13x13x4xbf16>
    %c0_77 = arith.constant 0 : index
    %c0_78 = arith.constant 0 : index
    %c0_79 = arith.constant 0 : index
    %49 = vector.load %arg17[%c0_77, %c0_78, %c0_79] : memref<13x16x36xbf16, #tpu.memory_space<vmem>>, vector<13x13x4xbf16>
    tpu.vector_store %arg17[%c0_77, %c0_78, %c0_79], %48 {strides = array<i32>} : memref<13x16x36xbf16, #tpu.memory_space<vmem>>, vector<13x13x4xbf16>,
    %c0_80 = arith.constant 0 : index
    %c0_81 = arith.constant 0 : index
    %c1_82 = arith.constant 1 : index
    %c0_83 = arith.constant 0 : index
    %50 = vector.load %arg3[%c0_80, %c0_81, %c1_82, %c0_83] : memref<1x15x15x4xbf16, #tpu.memory_space<vmem>>, vector<1x13x13x4xbf16>
    %51 = vector.shape_cast %50 : vector<1x13x13x4xbf16> to vector<13x13x4xbf16>
    %c0_84 = arith.constant 0 : index
    %c0_85 = arith.constant 0 : index
    %c4_86 = arith.constant 4 : index
    %52 = vector.load %arg17[%c0_84, %c0_85, %c4_86] : memref<13x16x36xbf16, #tpu.memory_space<vmem>>, vector<13x13x4xbf16>
    tpu.vector_store %arg17[%c0_84, %c0_85, %c4_86], %51 {strides = array<i32>} : memref<13x16x36xbf16, #tpu.memory_space<vmem>>, vector<13x13x4xbf16>,
    %c0_87 = arith.constant 0 : index
    %c0_88 = arith.constant 0 : index
    %c2_89 = arith.constant 2 : index
    %c0_90 = arith.constant 0 : index
    %53 = vector.load %arg3[%c0_87, %c0_88, %c2_89, %c0_90] : memref<1x15x15x4xbf16, #tpu.memory_space<vmem>>, vector<1x13x13x4xbf16>
    %54 = vector.shape_cast %53 : vector<1x13x13x4xbf16> to vector<13x13x4xbf16>
    %c0_91 = arith.constant 0 : index
    %c0_92 = arith.constant 0 : index
    %c8_93 = arith.constant 8 : index
    %55 = vector.load %arg17[%c0_91, %c0_92, %c8_93] : memref<13x16x36xbf16, #tpu.memory_space<vmem>>, vector<13x13x4xbf16>
    tpu.vector_store %arg17[%c0_91, %c0_92, %c8_93], %54 {strides = array<i32>} : memref<13x16x36xbf16, #tpu.memory_space<vmem>>, vector<13x13x4xbf16>,
    %c0_94 = arith.constant 0 : index
    %c1_95 = arith.constant 1 : index
    %c0_96 = arith.constant 0 : index
    %c0_97 = arith.constant 0 : index
    %56 = vector.load %arg3[%c0_94, %c1_95, %c0_96, %c0_97] : memref<1x15x15x4xbf16, #tpu.memory_space<vmem>>, vector<1x13x13x4xbf16>
    %57 = vector.shape_cast %56 : vector<1x13x13x4xbf16> to vector<13x13x4xbf16>
    %c0_98 = arith.constant 0 : index
    %c0_99 = arith.constant 0 : index
    %c12_100 = arith.constant 12 : index
    %58 = vector.load %arg17[%c0_98, %c0_99, %c12_100] : memref<13x16x36xbf16, #tpu.memory_space<vmem>>, vector<13x13x4xbf16>
    tpu.vector_store %arg17[%c0_98, %c0_99, %c12_100], %57 {strides = array<i32>} : memref<13x16x36xbf16, #tpu.memory_space<vmem>>, vector<13x13x4xbf16>,
    %c0_101 = arith.constant 0 : index
    %c1_102 = arith.constant 1 : index
    %c1_103 = arith.constant 1 : index
    %c0_104 = arith.constant 0 : index
    %59 = vector.load %arg3[%c0_101, %c1_102, %c1_103, %c0_104] : memref<1x15x15x4xbf16, #tpu.memory_space<vmem>>, vector<1x13x13x4xbf16>
    %60 = vector.shape_cast %59 : vector<1x13x13x4xbf16> to vector<13x13x4xbf16>
    %c0_105 = arith.constant 0 : index
    %c0_106 = arith.constant 0 : index
    %c16_107 = arith.constant 16 : index
    %61 = vector.load %arg17[%c0_105, %c0_106, %c16_107] : memref<13x16x36xbf16, #tpu.memory_space<vmem>>, vector<13x13x4xbf16>
    tpu.vector_store %arg17[%c0_105, %c0_106, %c16_107], %60 {strides = array<i32>} : memref<13x16x36xbf16, #tpu.memory_space<vmem>>, vector<13x13x4xbf16>,
    %c0_108 = arith.constant 0 : index
    %c1_109 = arith.constant 1 : index
    %c2_110 = arith.constant 2 : index
    %c0_111 = arith.constant 0 : index
    %62 = vector.load %arg3[%c0_108, %c1_109, %c2_110, %c0_111] : memref<1x15x15x4xbf16, #tpu.memory_space<vmem>>, vector<1x13x13x4xbf16>
    %63 = vector.shape_cast %62 : vector<1x13x13x4xbf16> to vector<13x13x4xbf16>
    %c0_112 = arith.constant 0 : index
    %c0_113 = arith.constant 0 : index
    %c20_114 = arith.constant 20 : index
    %64 = vector.load %arg17[%c0_112, %c0_113, %c20_114] : memref<13x16x36xbf16, #tpu.memory_space<vmem>>, vector<13x13x4xbf16>
    tpu.vector_store %arg17[%c0_112, %c0_113, %c20_114], %63 {strides = array<i32>} : memref<13x16x36xbf16, #tpu.memory_space<vmem>>, vector<13x13x4xbf16>,
    %c0_115 = arith.constant 0 : index
    %c2_116 = arith.constant 2 : index
    %c0_117 = arith.constant 0 : index
    %c0_118 = arith.constant 0 : index
    %65 = vector.load %arg3[%c0_115, %c2_116, %c0_117, %c0_118] : memref<1x15x15x4xbf16, #tpu.memory_space<vmem>>, vector<1x13x13x4xbf16>
    %66 = vector.shape_cast %65 : vector<1x13x13x4xbf16> to vector<13x13x4xbf16>
    %c0_119 = arith.constant 0 : index
    %c0_120 = arith.constant 0 : index
    %c24_121 = arith.constant 24 : index
    %67 = vector.load %arg17[%c0_119, %c0_120, %c24_121] : memref<13x16x36xbf16, #tpu.memory_space<vmem>>, vector<13x13x4xbf16>
    tpu.vector_store %arg17[%c0_119, %c0_120, %c24_121], %66 {strides = array<i32>} : memref<13x16x36xbf16, #tpu.memory_space<vmem>>, vector<13x13x4xbf16>,
    %c0_122 = arith.constant 0 : index
    %c2_123 = arith.constant 2 : index
    %c1_124 = arith.constant 1 : index
    %c0_125 = arith.constant 0 : index
    %68 = vector.load %arg3[%c0_122, %c2_123, %c1_124, %c0_125] : memref<1x15x15x4xbf16, #tpu.memory_space<vmem>>, vector<1x13x13x4xbf16>
    %69 = vector.shape_cast %68 : vector<1x13x13x4xbf16> to vector<13x13x4xbf16>
    %c0_126 = arith.constant 0 : index
    %c0_127 = arith.constant 0 : index
    %c28_128 = arith.constant 28 : index
    %70 = vector.load %arg17[%c0_126, %c0_127, %c28_128] : memref<13x16x36xbf16, #tpu.memory_space<vmem>>, vector<13x13x4xbf16>
    tpu.vector_store %arg17[%c0_126, %c0_127, %c28_128], %69 {strides = array<i32>} : memref<13x16x36xbf16, #tpu.memory_space<vmem>>, vector<13x13x4xbf16>,
    %c0_129 = arith.constant 0 : index
    %c2_130 = arith.constant 2 : index
    %c2_131 = arith.constant 2 : index
    %c0_132 = arith.constant 0 : index
    %71 = vector.load %arg3[%c0_129, %c2_130, %c2_131, %c0_132] : memref<1x15x15x4xbf16, #tpu.memory_space<vmem>>, vector<1x13x13x4xbf16>
    %72 = vector.shape_cast %71 : vector<1x13x13x4xbf16> to vector<13x13x4xbf16>
    %c0_133 = arith.constant 0 : index
    %c0_134 = arith.constant 0 : index
    %c32_135 = arith.constant 32 : index
    %73 = vector.load %arg17[%c0_133, %c0_134, %c32_135] : memref<13x16x36xbf16, #tpu.memory_space<vmem>>, vector<13x13x4xbf16>
    tpu.vector_store %arg17[%c0_133, %c0_134, %c32_135], %72 {strides = array<i32>} : memref<13x16x36xbf16, #tpu.memory_space<vmem>>, vector<13x13x4xbf16>,
    %c0_136 = arith.constant 0 : index
    %c0_137 = arith.constant 0 : index
    %c0_138 = arith.constant 0 : index
    %74 = vector.load %arg7[%c0_136, %c0_137, %c0_138] : memref<1x36x8xbf16, #tpu.memory_space<vmem>>, vector<1x36x8xbf16>
    %75 = vector.shape_cast %74 : vector<1x36x8xbf16> to vector<36x8xbf16>
    %c0_139 = arith.constant 0 : index
    %c0_140 = arith.constant 0 : index
    %c0_141 = arith.constant 0 : index
    %76 = vector.load %arg8[%c0_139, %c0_140, %c0_141] : memref<1x1x8xf32, #tpu.memory_space<vmem>>, vector<1x1x8xf32>
    %77 = vector.shape_cast %76 : vector<1x1x8xf32> to vector<1x8xf32>
    %c0_142 = arith.constant 0 : index
    %c0_143 = arith.constant 0 : index
    %c0_144 = arith.constant 0 : index
    %78 = vector.load %arg9[%c0_142, %c0_143, %c0_144] : memref<1x1x8xf32, #tpu.memory_space<vmem>>, vector<1x1x8xf32>
    %79 = vector.shape_cast %78 : vector<1x1x8xf32> to vector<1x8xf32>
    %c0_145 = arith.constant 0 : index
    %c0_146 = arith.constant 0 : index
    %c0_147 = arith.constant 0 : index
    %80 = vector.load %arg17[%c0_145, %c0_146, %c0_147] : memref<13x16x36xbf16, #tpu.memory_space<vmem>>, vector<13x16x36xbf16>
    %81 = vector.shape_cast %80 : vector<13x16x36xbf16> to vector<208x36xbf16>
    %cst_148 = arith.constant dense<0.000000e+00> : vector<208x8xf32>
    %82 = tpu.matmul %81, %75, %cst_148 {dimension_numbers = #tpu.dot_dimension_numbers<[1], [0], [0], [1], [0, 0, 1, 1], [], []>} : vector<208x36xbf16>, vector<36x8xbf16>, vector<208x8xf32> -> vector<208x8xf32>
    %83 = vector.broadcast %77 : vector<1x8xf32> to vector<208x8xf32>
    %84 = arith.mulf %82, %83 : vector<208x8xf32>
    %85 = vector.broadcast %79 : vector<1x8xf32> to vector<208x8xf32>
    %86 = arith.addf %84, %85 : vector<208x8xf32>
    %cst_149 = arith.constant 0.000000e+00 : f32
    %87 = vector.broadcast %cst_149 : f32 to vector<208x8xf32>
    %88 = arith.maximumf %86, %87 : vector<208x8xf32>
    %c0_150 = arith.constant 0 : index
    %c0_151 = arith.constant 0 : index
    %89 = vector.load %arg19[%c0_150, %c0_151] : memref<208x8xf32, #tpu.memory_space<vmem>>, vector<208x8xf32>
    tpu.vector_store %arg19[%c0_150, %c0_151], %88 {strides = array<i32>} : memref<208x8xf32, #tpu.memory_space<vmem>>, vector<208x8xf32>,
    %c0_i32 = arith.constant 0 : i32
    %c3_i32 = arith.constant 3 : i32
    %90 = arith.addi %c0_i32, %c3_i32 : i32
    %c1_i32 = arith.constant 1 : i32
    scf.for %arg20 = %c0_i32 to %90 step %c1_i32  : i32 {
      %c3_i32_153 = arith.constant 3 : i32
      %91 = arith.muli %arg20, %c3_i32_153 : i32
      %cst_154 = arith.constant 0.000000e+00 : f32
      %92 = vector.broadcast %cst_154 : f32 to vector<48x8xf32>
      %c0_i32_155 = arith.constant 0 : i32
      %93 = arith.addi %91, %c0_i32_155 : i32
      %c16_i32 = arith.constant 16 : i32
      %94 = arith.muli %93, %c16_i32 : i32
      %95 = tpu.assume_multiple %94, 8 : i32
      %96 = arith.index_cast %95 : i32 to index
      %c0_156 = arith.constant 0 : index
      %97 = vector.load %arg19[%96, %c0_156] : memref<208x8xf32, #tpu.memory_space<vmem>>, vector<48x8xf32>
      %c0_157 = arith.constant 0 : index
      %c0_158 = arith.constant 0 : index
      %98 = vector.load %arg18[%c0_157, %c0_158] : memref<80x8xf32, #tpu.memory_space<vmem>>, vector<1x8xf32>
      %99 = vector.broadcast %98 : vector<1x8xf32> to vector<48x8xf32>
      %100 = arith.mulf %97, %99 : vector<48x8xf32>
      %101 = arith.addf %92, %100 : vector<48x8xf32>
      %c1_159 = arith.constant 1 : index
      %c0_160 = arith.constant 0 : index
      %102 = vector.load %arg18[%c1_159, %c0_160] : memref<80x8xf32, #tpu.memory_space<vmem>>, vector<1x8xf32>
      %c47_i32 = arith.constant 47 : i32
      %103 = tpu.dynamic_rotate %97 by %c47_i32 dim 0 : vector<48x8xf32>, i32 -> vector<48x8xf32>
      %104 = vector.broadcast %102 : vector<1x8xf32> to vector<48x8xf32>
      %105 = arith.mulf %103, %104 : vector<48x8xf32>
      %106 = arith.addf %101, %105 : vector<48x8xf32>
      %c2_161 = arith.constant 2 : index
      %c0_162 = arith.constant 0 : index
      %107 = vector.load %arg18[%c2_161, %c0_162] : memref<80x8xf32, #tpu.memory_space<vmem>>, vector<1x8xf32>
      %c46_i32 = arith.constant 46 : i32
      %108 = tpu.dynamic_rotate %97 by %c46_i32 dim 0 : vector<48x8xf32>, i32 -> vector<48x8xf32>
      %109 = vector.broadcast %107 : vector<1x8xf32> to vector<48x8xf32>
      %110 = arith.mulf %108, %109 : vector<48x8xf32>
      %111 = arith.addf %106, %110 : vector<48x8xf32>
      %c3 = arith.constant 3 : index
      %c0_163 = arith.constant 0 : index
      %112 = vector.load %arg18[%c3, %c0_163] : memref<80x8xf32, #tpu.memory_space<vmem>>, vector<1x8xf32>
      %c45_i32 = arith.constant 45 : i32
      %113 = tpu.dynamic_rotate %97 by %c45_i32 dim 0 : vector<48x8xf32>, i32 -> vector<48x8xf32>
      %114 = vector.broadcast %112 : vector<1x8xf32> to vector<48x8xf32>
      %115 = arith.mulf %113, %114 : vector<48x8xf32>
      %116 = arith.addf %111, %115 : vector<48x8xf32>
      %c4_164 = arith.constant 4 : index
      %c0_165 = arith.constant 0 : index
      %117 = vector.load %arg18[%c4_164, %c0_165] : memref<80x8xf32, #tpu.memory_space<vmem>>, vector<1x8xf32>
      %c44_i32 = arith.constant 44 : i32
      %118 = tpu.dynamic_rotate %97 by %c44_i32 dim 0 : vector<48x8xf32>, i32 -> vector<48x8xf32>
      %119 = vector.broadcast %117 : vector<1x8xf32> to vector<48x8xf32>
      %120 = arith.mulf %118, %119 : vector<48x8xf32>
      %121 = arith.addf %116, %120 : vector<48x8xf32>
      %c1_i32_166 = arith.constant 1 : i32
      %122 = arith.addi %91, %c1_i32_166 : i32
      %c16_i32_167 = arith.constant 16 : i32
      %123 = arith.muli %122, %c16_i32_167 : i32
      %124 = tpu.assume_multiple %123, 8 : i32
      %125 = arith.index_cast %124 : i32 to index
      %c0_168 = arith.constant 0 : index
      %126 = vector.load %arg19[%125, %c0_168] : memref<208x8xf32, #tpu.memory_space<vmem>>, vector<48x8xf32>
      %c16_169 = arith.constant 16 : index
      %c0_170 = arith.constant 0 : index
      %127 = vector.load %arg18[%c16_169, %c0_170] : memref<80x8xf32, #tpu.memory_space<vmem>>, vector<1x8xf32>
      %128 = vector.broadcast %127 : vector<1x8xf32> to vector<48x8xf32>
      %129 = arith.mulf %126, %128 : vector<48x8xf32>
      %130 = arith.addf %121, %129 : vector<48x8xf32>
      %c17 = arith.constant 17 : index
      %c0_171 = arith.constant 0 : index
      %131 = vector.load %arg18[%c17, %c0_171] : memref<80x8xf32, #tpu.memory_space<vmem>>, vector<1x8xf32>
      %c47_i32_172 = arith.constant 47 : i32
      %132 = tpu.dynamic_rotate %126 by %c47_i32_172 dim 0 : vector<48x8xf32>, i32 -> vector<48x8xf32>
      %133 = vector.broadcast %131 : vector<1x8xf32> to vector<48x8xf32>
      %134 = arith.mulf %132, %133 : vector<48x8xf32>
      %135 = arith.addf %130, %134 : vector<48x8xf32>
      %c18 = arith.constant 18 : index
      %c0_173 = arith.constant 0 : index
      %136 = vector.load %arg18[%c18, %c0_173] : memref<80x8xf32, #tpu.memory_space<vmem>>, vector<1x8xf32>
      %c46_i32_174 = arith.constant 46 : i32
      %137 = tpu.dynamic_rotate %126 by %c46_i32_174 dim 0 : vector<48x8xf32>, i32 -> vector<48x8xf32>
      %138 = vector.broadcast %136 : vector<1x8xf32> to vector<48x8xf32>
      %139 = arith.mulf %137, %138 : vector<48x8xf32>
      %140 = arith.addf %135, %139 : vector<48x8xf32>
      %c19 = arith.constant 19 : index
      %c0_175 = arith.constant 0 : index
      %141 = vector.load %arg18[%c19, %c0_175] : memref<80x8xf32, #tpu.memory_space<vmem>>, vector<1x8xf32>
      %c45_i32_176 = arith.constant 45 : i32
      %142 = tpu.dynamic_rotate %126 by %c45_i32_176 dim 0 : vector<48x8xf32>, i32 -> vector<48x8xf32>
      %143 = vector.broadcast %141 : vector<1x8xf32> to vector<48x8xf32>
      %144 = arith.mulf %142, %143 : vector<48x8xf32>
      %145 = arith.addf %140, %144 : vector<48x8xf32>
      %c20_177 = arith.constant 20 : index
      %c0_178 = arith.constant 0 : index
      %146 = vector.load %arg18[%c20_177, %c0_178] : memref<80x8xf32, #tpu.memory_space<vmem>>, vector<1x8xf32>
      %c44_i32_179 = arith.constant 44 : i32
      %147 = tpu.dynamic_rotate %126 by %c44_i32_179 dim 0 : vector<48x8xf32>, i32 -> vector<48x8xf32>
      %148 = vector.broadcast %146 : vector<1x8xf32> to vector<48x8xf32>
      %149 = arith.mulf %147, %148 : vector<48x8xf32>
      %150 = arith.addf %145, %149 : vector<48x8xf32>
      %c2_i32 = arith.constant 2 : i32
      %151 = arith.addi %91, %c2_i32 : i32
      %c16_i32_180 = arith.constant 16 : i32
      %152 = arith.muli %151, %c16_i32_180 : i32
      %153 = tpu.assume_multiple %152, 8 : i32
      %154 = arith.index_cast %153 : i32 to index
      %c0_181 = arith.constant 0 : index
      %155 = vector.load %arg19[%154, %c0_181] : memref<208x8xf32, #tpu.memory_space<vmem>>, vector<48x8xf32>
      %c32_182 = arith.constant 32 : index
      %c0_183 = arith.constant 0 : index
      %156 = vector.load %arg18[%c32_182, %c0_183] : memref<80x8xf32, #tpu.memory_space<vmem>>, vector<1x8xf32>
      %157 = vector.broadcast %156 : vector<1x8xf32> to vector<48x8xf32>
      %158 = arith.mulf %155, %157 : vector<48x8xf32>
      %159 = arith.addf %150, %158 : vector<48x8xf32>
      %c33 = arith.constant 33 : index
      %c0_184 = arith.constant 0 : index
      %160 = vector.load %arg18[%c33, %c0_184] : memref<80x8xf32, #tpu.memory_space<vmem>>, vector<1x8xf32>
      %c47_i32_185 = arith.constant 47 : i32
      %161 = tpu.dynamic_rotate %155 by %c47_i32_185 dim 0 : vector<48x8xf32>, i32 -> vector<48x8xf32>
      %162 = vector.broadcast %160 : vector<1x8xf32> to vector<48x8xf32>
      %163 = arith.mulf %161, %162 : vector<48x8xf32>
      %164 = arith.addf %159, %163 : vector<48x8xf32>
      %c34 = arith.constant 34 : index
      %c0_186 = arith.constant 0 : index
      %165 = vector.load %arg18[%c34, %c0_186] : memref<80x8xf32, #tpu.memory_space<vmem>>, vector<1x8xf32>
      %c46_i32_187 = arith.constant 46 : i32
      %166 = tpu.dynamic_rotate %155 by %c46_i32_187 dim 0 : vector<48x8xf32>, i32 -> vector<48x8xf32>
      %167 = vector.broadcast %165 : vector<1x8xf32> to vector<48x8xf32>
      %168 = arith.mulf %166, %167 : vector<48x8xf32>
      %169 = arith.addf %164, %168 : vector<48x8xf32>
      %c35 = arith.constant 35 : index
      %c0_188 = arith.constant 0 : index
      %170 = vector.load %arg18[%c35, %c0_188] : memref<80x8xf32, #tpu.memory_space<vmem>>, vector<1x8xf32>
      %c45_i32_189 = arith.constant 45 : i32
      %171 = tpu.dynamic_rotate %155 by %c45_i32_189 dim 0 : vector<48x8xf32>, i32 -> vector<48x8xf32>
      %172 = vector.broadcast %170 : vector<1x8xf32> to vector<48x8xf32>
      %173 = arith.mulf %171, %172 : vector<48x8xf32>
      %174 = arith.addf %169, %173 : vector<48x8xf32>
      %c36 = arith.constant 36 : index
      %c0_190 = arith.constant 0 : index
      %175 = vector.load %arg18[%c36, %c0_190] : memref<80x8xf32, #tpu.memory_space<vmem>>, vector<1x8xf32>
      %c44_i32_191 = arith.constant 44 : i32
      %176 = tpu.dynamic_rotate %155 by %c44_i32_191 dim 0 : vector<48x8xf32>, i32 -> vector<48x8xf32>
      %177 = vector.broadcast %175 : vector<1x8xf32> to vector<48x8xf32>
      %178 = arith.mulf %176, %177 : vector<48x8xf32>
      %179 = arith.addf %174, %178 : vector<48x8xf32>
      %c3_i32_192 = arith.constant 3 : i32
      %180 = arith.addi %91, %c3_i32_192 : i32
      %c16_i32_193 = arith.constant 16 : i32
      %181 = arith.muli %180, %c16_i32_193 : i32
      %182 = tpu.assume_multiple %181, 8 : i32
      %183 = arith.index_cast %182 : i32 to index
      %c0_194 = arith.constant 0 : index
      %184 = vector.load %arg19[%183, %c0_194] : memref<208x8xf32, #tpu.memory_space<vmem>>, vector<48x8xf32>
      %c48 = arith.constant 48 : index
      %c0_195 = arith.constant 0 : index
      %185 = vector.load %arg18[%c48, %c0_195] : memref<80x8xf32, #tpu.memory_space<vmem>>, vector<1x8xf32>
      %186 = vector.broadcast %185 : vector<1x8xf32> to vector<48x8xf32>
      %187 = arith.mulf %184, %186 : vector<48x8xf32>
      %188 = arith.addf %179, %187 : vector<48x8xf32>
      %c49 = arith.constant 49 : index
      %c0_196 = arith.constant 0 : index
      %189 = vector.load %arg18[%c49, %c0_196] : memref<80x8xf32, #tpu.memory_space<vmem>>, vector<1x8xf32>
      %c47_i32_197 = arith.constant 47 : i32
      %190 = tpu.dynamic_rotate %184 by %c47_i32_197 dim 0 : vector<48x8xf32>, i32 -> vector<48x8xf32>
      %191 = vector.broadcast %189 : vector<1x8xf32> to vector<48x8xf32>
      %192 = arith.mulf %190, %191 : vector<48x8xf32>
      %193 = arith.addf %188, %192 : vector<48x8xf32>
      %c50 = arith.constant 50 : index
      %c0_198 = arith.constant 0 : index
      %194 = vector.load %arg18[%c50, %c0_198] : memref<80x8xf32, #tpu.memory_space<vmem>>, vector<1x8xf32>
      %c46_i32_199 = arith.constant 46 : i32
      %195 = tpu.dynamic_rotate %184 by %c46_i32_199 dim 0 : vector<48x8xf32>, i32 -> vector<48x8xf32>
      %196 = vector.broadcast %194 : vector<1x8xf32> to vector<48x8xf32>
      %197 = arith.mulf %195, %196 : vector<48x8xf32>
      %198 = arith.addf %193, %197 : vector<48x8xf32>
      %c51 = arith.constant 51 : index
      %c0_200 = arith.constant 0 : index
      %199 = vector.load %arg18[%c51, %c0_200] : memref<80x8xf32, #tpu.memory_space<vmem>>, vector<1x8xf32>
      %c45_i32_201 = arith.constant 45 : i32
      %200 = tpu.dynamic_rotate %184 by %c45_i32_201 dim 0 : vector<48x8xf32>, i32 -> vector<48x8xf32>
      %201 = vector.broadcast %199 : vector<1x8xf32> to vector<48x8xf32>
      %202 = arith.mulf %200, %201 : vector<48x8xf32>
      %203 = arith.addf %198, %202 : vector<48x8xf32>
      %c52 = arith.constant 52 : index
      %c0_202 = arith.constant 0 : index
      %204 = vector.load %arg18[%c52, %c0_202] : memref<80x8xf32, #tpu.memory_space<vmem>>, vector<1x8xf32>
      %c44_i32_203 = arith.constant 44 : i32
      %205 = tpu.dynamic_rotate %184 by %c44_i32_203 dim 0 : vector<48x8xf32>, i32 -> vector<48x8xf32>
      %206 = vector.broadcast %204 : vector<1x8xf32> to vector<48x8xf32>
      %207 = arith.mulf %205, %206 : vector<48x8xf32>
      %208 = arith.addf %203, %207 : vector<48x8xf32>
      %c4_i32 = arith.constant 4 : i32
      %209 = arith.addi %91, %c4_i32 : i32
      %c16_i32_204 = arith.constant 16 : i32
      %210 = arith.muli %209, %c16_i32_204 : i32
      %211 = tpu.assume_multiple %210, 8 : i32
      %212 = arith.index_cast %211 : i32 to index
      %c0_205 = arith.constant 0 : index
      %213 = vector.load %arg19[%212, %c0_205] : memref<208x8xf32, #tpu.memory_space<vmem>>, vector<48x8xf32>
      %c64 = arith.constant 64 : index
      %c0_206 = arith.constant 0 : index
      %214 = vector.load %arg18[%c64, %c0_206] : memref<80x8xf32, #tpu.memory_space<vmem>>, vector<1x8xf32>
      %215 = vector.broadcast %214 : vector<1x8xf32> to vector<48x8xf32>
      %216 = arith.mulf %213, %215 : vector<48x8xf32>
      %217 = arith.addf %208, %216 : vector<48x8xf32>
      %c65 = arith.constant 65 : index
      %c0_207 = arith.constant 0 : index
      %218 = vector.load %arg18[%c65, %c0_207] : memref<80x8xf32, #tpu.memory_space<vmem>>, vector<1x8xf32>
      %c47_i32_208 = arith.constant 47 : i32
      %219 = tpu.dynamic_rotate %213 by %c47_i32_208 dim 0 : vector<48x8xf32>, i32 -> vector<48x8xf32>
      %220 = vector.broadcast %218 : vector<1x8xf32> to vector<48x8xf32>
      %221 = arith.mulf %219, %220 : vector<48x8xf32>
      %222 = arith.addf %217, %221 : vector<48x8xf32>
      %c66 = arith.constant 66 : index
      %c0_209 = arith.constant 0 : index
      %223 = vector.load %arg18[%c66, %c0_209] : memref<80x8xf32, #tpu.memory_space<vmem>>, vector<1x8xf32>
      %c46_i32_210 = arith.constant 46 : i32
      %224 = tpu.dynamic_rotate %213 by %c46_i32_210 dim 0 : vector<48x8xf32>, i32 -> vector<48x8xf32>
      %225 = vector.broadcast %223 : vector<1x8xf32> to vector<48x8xf32>
      %226 = arith.mulf %224, %225 : vector<48x8xf32>
      %227 = arith.addf %222, %226 : vector<48x8xf32>
      %c67 = arith.constant 67 : index
      %c0_211 = arith.constant 0 : index
      %228 = vector.load %arg18[%c67, %c0_211] : memref<80x8xf32, #tpu.memory_space<vmem>>, vector<1x8xf32>
      %c45_i32_212 = arith.constant 45 : i32
      %229 = tpu.dynamic_rotate %213 by %c45_i32_212 dim 0 : vector<48x8xf32>, i32 -> vector<48x8xf32>
      %230 = vector.broadcast %228 : vector<1x8xf32> to vector<48x8xf32>
      %231 = arith.mulf %229, %230 : vector<48x8xf32>
      %232 = arith.addf %227, %231 : vector<48x8xf32>
      %c68 = arith.constant 68 : index
      %c0_213 = arith.constant 0 : index
      %233 = vector.load %arg18[%c68, %c0_213] : memref<80x8xf32, #tpu.memory_space<vmem>>, vector<1x8xf32>
      %c44_i32_214 = arith.constant 44 : i32
      %234 = tpu.dynamic_rotate %213 by %c44_i32_214 dim 0 : vector<48x8xf32>, i32 -> vector<48x8xf32>
      %235 = vector.broadcast %233 : vector<1x8xf32> to vector<48x8xf32>
      %236 = arith.mulf %234, %235 : vector<48x8xf32>
      %237 = arith.addf %232, %236 : vector<48x8xf32>
      %238 = arith.truncf %237 : vector<48x8xf32> to vector<48x8xbf16>
      %c0_215 = arith.constant 0 : index
      %c0_216 = arith.constant 0 : index
      %c0_217 = arith.constant 0 : index
      %239 = vector.load %arg10[%c0_215, %c0_216, %c0_217] : memref<1x8x8xbf16, #tpu.memory_space<vmem>>, vector<1x8x8xbf16>
      %240 = vector.shape_cast %239 : vector<1x8x8xbf16> to vector<8x8xbf16>
      %cst_218 = arith.constant dense<0.000000e+00> : vector<48x8xf32>
      %241 = tpu.matmul %238, %240, %cst_218 {dimension_numbers = #tpu.dot_dimension_numbers<[1], [0], [0], [1], [0, 0, 1, 1], [], []>} : vector<48x8xbf16>, vector<8x8xbf16>, vector<48x8xf32> -> vector<48x8xf32>
      %c0_219 = arith.constant 0 : index
      %c0_220 = arith.constant 0 : index
      %c0_221 = arith.constant 0 : index
      %242 = vector.load %arg11[%c0_219, %c0_220, %c0_221] : memref<1x1x8xf32, #tpu.memory_space<vmem>>, vector<1x1x8xf32>
      %243 = vector.shape_cast %242 : vector<1x1x8xf32> to vector<1x8xf32>
      %244 = vector.broadcast %243 : vector<1x8xf32> to vector<48x8xf32>
      %245 = arith.mulf %241, %244 : vector<48x8xf32>
      %c0_222 = arith.constant 0 : index
      %c0_223 = arith.constant 0 : index
      %c0_224 = arith.constant 0 : index
      %246 = vector.load %arg12[%c0_222, %c0_223, %c0_224] : memref<1x1x8xf32, #tpu.memory_space<vmem>>, vector<1x1x8xf32>
      %247 = vector.shape_cast %246 : vector<1x1x8xf32> to vector<1x8xf32>
      %248 = vector.broadcast %247 : vector<1x8xf32> to vector<48x8xf32>
      %249 = arith.addf %245, %248 : vector<48x8xf32>
      %cst_225 = arith.constant 0.000000e+00 : f32
      %250 = vector.broadcast %cst_225 : f32 to vector<48x8xf32>
      %251 = arith.maximumf %249, %250 : vector<48x8xf32>
      %252 = arith.truncf %251 : vector<48x8xf32> to vector<48x8xbf16>
      %c0_226 = arith.constant 0 : index
      %c0_227 = arith.constant 0 : index
      %c0_228 = arith.constant 0 : index
      %253 = vector.load %arg13[%c0_226, %c0_227, %c0_228] : memref<1x8x128xbf16, #tpu.memory_space<vmem>>, vector<1x8x128xbf16>
      %254 = vector.shape_cast %253 : vector<1x8x128xbf16> to vector<8x128xbf16>
      %cst_229 = arith.constant dense<0.000000e+00> : vector<48x128xf32>
      %255 = tpu.matmul %252, %254, %cst_229 {dimension_numbers = #tpu.dot_dimension_numbers<[1], [0], [0], [1], [0, 0, 1, 1], [], []>} : vector<48x8xbf16>, vector<8x128xbf16>, vector<48x128xf32> -> vector<48x128xf32>
      %c0_230 = arith.constant 0 : index
      %c0_231 = arith.constant 0 : index
      %c0_232 = arith.constant 0 : index
      %256 = vector.load %arg14[%c0_230, %c0_231, %c0_232] : memref<1x1x128xf32, #tpu.memory_space<vmem>>, vector<1x1x128xf32>
      %257 = vector.shape_cast %256 : vector<1x1x128xf32> to vector<1x128xf32>
      %258 = vector.broadcast %257 : vector<1x128xf32> to vector<48x128xf32>
      %259 = arith.addf %255, %258 : vector<48x128xf32>
      %c16_i32_233 = arith.constant 16 : i32
      %260 = arith.muli %91, %c16_i32_233 : i32
      %261 = tpu.assume_multiple %260, 8 : i32
      %c0_234 = arith.constant 0 : index
      %c0_235 = arith.constant 0 : index
      %262 = arith.index_cast %261 : i32 to index
      %c0_236 = arith.constant 0 : index
      %263 = vector.load %arg15[%c0_234, %c0_235, %262, %c0_236] : memref<1x1x144x128xf32, #tpu.memory_space<vmem>>, vector<1x1x48x128xf32>
      %264 = vector.shape_cast %263 : vector<1x1x48x128xf32> to vector<48x128xf32>
      %265 = vector.shape_cast %259 : vector<48x128xf32> to vector<1x1x48x128xf32>
      tpu.vector_store %arg15[%c0_234, %c0_235, %262, %c0_236], %265 {strides = array<i32>} : memref<1x1x144x128xf32, #tpu.memory_space<vmem>>, vector<1x1x48x128xf32>,
    }
    %c3_i32_152 = arith.constant 3 : i32
    return
  }
  func.func @transform_0(%arg0: i32, %arg1: i32) -> (i32, i32, i32, i32) {
    %c0_i32 = arith.constant 0 : i32
    %c0_i32_0 = arith.constant 0 : i32
    %c0_i32_1 = arith.constant 0 : i32
    %c0_i32_2 = arith.constant 0 : i32
    return %arg1, %c0_i32, %c0_i32_0, %c0_i32_1 : i32, i32, i32, i32
  }
  func.func @transform_1(%arg0: i32, %arg1: i32) -> (i32, i32, i32, i32) {
    %c0_i32 = arith.constant 0 : i32
    %c0_i32_0 = arith.constant 0 : i32
    %c0_i32_1 = arith.constant 0 : i32
    %c0_i32_2 = arith.constant 0 : i32
    return %arg1, %c0_i32, %c0_i32_0, %c0_i32_1 : i32, i32, i32, i32
  }
  func.func @transform_2(%arg0: i32, %arg1: i32) -> (i32, i32, i32) {
    %c0_i32 = arith.constant 0 : i32
    %c0_i32_0 = arith.constant 0 : i32
    %c0_i32_1 = arith.constant 0 : i32
    return %arg0, %c0_i32, %c0_i32_0 : i32, i32, i32
  }
  func.func @transform_3(%arg0: i32, %arg1: i32) -> (i32, i32, i32) {
    %c0_i32 = arith.constant 0 : i32
    %c0_i32_0 = arith.constant 0 : i32
    %c0_i32_1 = arith.constant 0 : i32
    return %arg0, %c0_i32, %c0_i32_0 : i32, i32, i32
  }
  func.func @transform_4(%arg0: i32, %arg1: i32) -> (i32, i32, i32) {
    %c0_i32 = arith.constant 0 : i32
    %c0_i32_0 = arith.constant 0 : i32
    %c0_i32_1 = arith.constant 0 : i32
    return %arg0, %c0_i32, %c0_i32_0 : i32, i32, i32
  }
  func.func @transform_5(%arg0: i32, %arg1: i32) -> (i32, i32, i32) {
    %c0_i32 = arith.constant 0 : i32
    %c0_i32_0 = arith.constant 0 : i32
    %c0_i32_1 = arith.constant 0 : i32
    return %arg0, %c0_i32, %c0_i32_0 : i32, i32, i32
  }
  func.func @transform_6(%arg0: i32, %arg1: i32) -> (i32, i32, i32) {
    %c0_i32 = arith.constant 0 : i32
    %c0_i32_0 = arith.constant 0 : i32
    %c0_i32_1 = arith.constant 0 : i32
    return %arg0, %c0_i32, %c0_i32_0 : i32, i32, i32
  }
  func.func @transform_7(%arg0: i32, %arg1: i32) -> (i32, i32, i32) {
    %c0_i32 = arith.constant 0 : i32
    %c0_i32_0 = arith.constant 0 : i32
    %c0_i32_1 = arith.constant 0 : i32
    return %arg0, %c0_i32, %c0_i32_0 : i32, i32, i32
  }
  func.func @transform_8(%arg0: i32, %arg1: i32) -> (i32, i32, i32) {
    %c0_i32 = arith.constant 0 : i32
    %c0_i32_0 = arith.constant 0 : i32
    %c0_i32_1 = arith.constant 0 : i32
    return %arg0, %c0_i32, %c0_i32_0 : i32, i32, i32
  }
  func.func @transform_9(%arg0: i32, %arg1: i32) -> (i32, i32, i32) {
    %c0_i32 = arith.constant 0 : i32
    %c0_i32_0 = arith.constant 0 : i32
    %c0_i32_1 = arith.constant 0 : i32
    return %arg0, %c0_i32, %c0_i32_0 : i32, i32, i32
  }
  func.func @transform_10(%arg0: i32, %arg1: i32) -> (i32, i32, i32) {
    %c0_i32 = arith.constant 0 : i32
    %c0_i32_0 = arith.constant 0 : i32
    %c0_i32_1 = arith.constant 0 : i32
    return %arg0, %c0_i32, %c0_i32_0 : i32, i32, i32
  }
  func.func @transform_11(%arg0: i32, %arg1: i32) -> (i32, i32, i32) {
    %c0_i32 = arith.constant 0 : i32
    %c0_i32_0 = arith.constant 0 : i32
    %c0_i32_1 = arith.constant 0 : i32
    return %arg0, %c0_i32, %c0_i32_0 : i32, i32, i32
  }
  func.func @transform_12(%arg0: i32, %arg1: i32) -> (i32, i32, i32) {
    %c0_i32 = arith.constant 0 : i32
    %c0_i32_0 = arith.constant 0 : i32
    %c0_i32_1 = arith.constant 0 : i32
    return %arg0, %c0_i32, %c0_i32_0 : i32, i32, i32
  }
  func.func @transform_13(%arg0: i32, %arg1: i32) -> (i32, i32, i32, i32) {
    %c0_i32 = arith.constant 0 : i32
    %c0_i32_0 = arith.constant 0 : i32
    %c0_i32_1 = arith.constant 0 : i32
    return %arg1, %arg0, %c0_i32, %c0_i32_0 : i32, i32, i32, i32
  }
}

</mosaic_0001>

<llo_original>
// kernel: depthwise_rpn_forward.1
$region0: #{depthwise_rpn_forward.1}
  #allocation0 [shape = 'u32[]', space=smem, size = 0x4, offset = 0x4, fixed_abs, tag = 'smem constant byte address 0x4 - core index']
  #allocation1 [shape = 'u32[144,128]{1,0:T(1,128)}', space=vmem, size = 0x12000, scoped, tag = 'internal scratch']
  #allocation2 [shape = 'bf16[5,16,36]{2,1,0:T(16,128)(2,1)}', space=vmem, size = 0x5000, scoped, tag = 'scratch operand']
  #allocation3 [shape = 'bf16[13,16,36]{2,1,0:T(16,128)(2,1)}', space=vmem, size = 0xd000, scoped, tag = 'scratch operand']
  #allocation4 [shape = 'f32[80,8]{1,0:T(8,128)}', space=vmem, size = 0xa000, scoped, tag = 'scratch operand']
  #allocation5 [shape = 'f32[208,8]{1,0:T(8,128)}', space=vmem, size = 0x1a000, scoped, tag = 'scratch operand']
  %s0 = inlined_call_operand.vmem [shape: bf16[2,7,7,4], index: 0, kind: input, shape index: {}]
  %s1 = inlined_call_operand.vmem [shape: bf16[2,15,15,4], index: 1, kind: input, shape index: {}]
  %s2 = inlined_call_operand.vmem [shape: bf16[2,36,8], index: 2, kind: input, shape index: {}]
  %s3 = inlined_call_operand.vmem [shape: f32[2,1,8], index: 3, kind: input, shape index: {}]
  %s4 = inlined_call_operand.vmem [shape: f32[2,1,8], index: 4, kind: input, shape index: {}]
  %s5 = inlined_call_operand.vmem [shape: bf16[2,36,8], index: 5, kind: input, shape index: {}]
  %s6 = inlined_call_operand.vmem [shape: f32[2,1,8], index: 6, kind: input, shape index: {}]
  %s7 = inlined_call_operand.vmem [shape: f32[2,1,8], index: 7, kind: input, shape index: {}]
  %s8 = inlined_call_operand.vmem [shape: bf16[2,8,8], index: 8, kind: input, shape index: {}]
  %s9 = inlined_call_operand.vmem [shape: f32[2,1,8], index: 9, kind: input, shape index: {}]
  %s10 = inlined_call_operand.vmem [shape: f32[2,1,8], index: 10, kind: input, shape index: {}]
  %s11 = inlined_call_operand.vmem [shape: bf16[2,8,128], index: 11, kind: input, shape index: {}]
  %s12 = inlined_call_operand.vmem [shape: f32[2,1,128], index: 12, kind: input, shape index: {}]
  %s13 = inlined_call_operand.vmem [shape: f32[2,2,144,128], index: 13, kind: output, shape index: {}]
  %s14 = sld [smem:[#allocation0]]
  $region92: #{depthwise_rpn_forward.1} parent=0
    _
  %s16 = ssub.s32 1, %s14
  %s17 = scalar_select 0, %s16, %s14
  loop: start=0, step=1, limit=6
  $region2: #{depthwise_rpn_forward.1} parent=0 // loop_pre_header
    _
  $region3: #{depthwise_rpn_forward.1} parent=0 // loop_header
    %s19 = sphi 0, %s23
    %p20 = scmp.ge.s32.totalorder %s19, 6
    %s26 = sphi 0, %s38
    %s27 = sphi 0, %s34
    %s28 = sphi 0, %s26
    %s29 = sphi 0, %s27
    %s30 = sphi 0, %s28
    %s31 = sphi 0, %s29
    %s41 = sphi 0, %s43
    %s44 = sphi 0, %s41
    %s45 = sphi 0, %s44
    %s61 = sphi 0, %s45
    %s67 = sphi 0, %s69
    %s70 = sphi 0, %s67
    %s71 = sphi 0, %s70
    %s87 = sphi 0, %s71
    %s93 = sphi 0, %s95
    %s96 = sphi 0, %s93
    %s97 = sphi 0, %s96
    %s113 = sphi 0, %s97
    %s119 = sphi 0, %s121
    %s122 = sphi 0, %s119
    %s123 = sphi 0, %s122
    %s139 = sphi 0, %s123
    %s145 = sphi 0, %s147
    %s148 = sphi 0, %s145
    %s149 = sphi 0, %s148
    %s165 = sphi 0, %s149
    %s171 = sphi 0, %s173
    %s174 = sphi 0, %s171
    %s175 = sphi 0, %s174
    %s191 = sphi 0, %s175
    %s197 = sphi 0, %s199
    %s200 = sphi 0, %s197
    %s201 = sphi 0, %s200
    %s217 = sphi 0, %s201
    %s223 = sphi 0, %s225
    %s226 = sphi 0, %s223
    %s227 = sphi 0, %s226
    %s243 = sphi 0, %s227
    %s249 = sphi 0, %s251
    %s252 = sphi 0, %s249
    %s253 = sphi 0, %s252
    %s269 = sphi 0, %s253
    %s275 = sphi 0, %s277
    %s278 = sphi 0, %s275
    %s279 = sphi 0, %s278
    %s295 = sphi 0, %s279
    %s301 = sphi 0, %s303
    %s304 = sphi 0, %s301
    %s305 = sphi 0, %s304
    %s321 = sphi 0, %s305
    %s327 = sphi 0, %s329
    %s330 = sphi 0, %s327
    %s331 = sphi 0, %s330
    %s347 = sphi 0, %s331
    %s353 = sphi 0, %s355
    %s356 = sphi 0, %s353
    %s357 = sphi 0, %s356
    %s373 = sphi 0, %s357
    %s381 = sphi 0, %s383
    %s384 = sphi 0, %s381
    %s385 = sphi 0, %s384
    %s401 = sphi 0, %s385
  $region4: #{depthwise_rpn_forward.1} parent=0 // loop_header_branch
    %22 = sbr.rel (%p20) target = $region8
  $region5: #{depthwise_rpn_forward.1} parent=0 // loop_body
    %s24 = ssub.s32 %s19, 1
    %s25 = ssub.s32 %s19, 2
    %s32 = sadd.s32 1, %s27
    %p33 = scmp.ge.s32.totalorder %s32, 2
    %s34 = scalar_select %p33, 0, %s32
    %s35 = sadd.s32 1, %s26
    %s36 = scalar_select %p33, %s35, %s26
    %p37 = scmp.ge.s32.totalorder %s36, 2
    %s38 = scalar_select %p37, 0, %s36
    %s39 = ssub.s32 %s27, %s34
    %p40 = scmp.eq.s32.totalorder %s39, 0
    %s42 = sadd.s32 %s41, 1
    %s43 = scalar_select %p40, %s41, %s42
    %p46 = pneg %p40
    %p47 = scmp.eq.s32.totalorder %s19, 3
    %p48 = por %p46, %p47
    %p49 = scmp.ne.s32.totalorder %s41, %s44
    %p50 = scmp.eq.s32.totalorder %s19, 0
    %p51 = por %p49, %p50
    %p52 = scmp.ne.s32.totalorder %s41, %s44
    %p53 = scmp.eq.s32.totalorder %s24, 3
    %p54 = por %p52, %p53
    %p55 = scmp.ne.s32.totalorder %s44, %s45
    %p56 = scmp.eq.s32.totalorder %s24, 0
    %p57 = por %p55, %p56
    %p58 = scmp.ne.s32.totalorder %s44, %s45
    %p59 = scmp.eq.s32.totalorder %s25, 3
    %p60 = por %p58, %p59
    %p62 = scmp.ne.s32.totalorder %s45, %s61
    %p63 = scmp.eq.s32.totalorder %s25, 0
    %p64 = por %p62, %p63
    %s65 = ssub.s32 %s27, %s34
    %p66 = scmp.eq.s32.totalorder %s65, 0
    %s68 = sadd.s32 %s67, 1
    %s69 = scalar_select %p66, %s67, %s68
    %p72 = pneg %p66
    %p73 = scmp.eq.s32.totalorder %s19, 3
    %p74 = por %p72, %p73
    %p75 = scmp.ne.s32.totalorder %s67, %s70
    %p76 = scmp.eq.s32.totalorder %s19, 0
    %p77 = por %p75, %p76
    %p78 = scmp.ne.s32.totalorder %s67, %s70
    %p79 = scmp.eq.s32.totalorder %s24, 3
    %p80 = por %p78, %p79
    %p81 = scmp.ne.s32.totalorder %s70, %s71
    %p82 = scmp.eq.s32.totalorder %s24, 0
    %p83 = por %p81, %p82
    %p84 = scmp.ne.s32.totalorder %s70, %s71
    %p85 = scmp.eq.s32.totalorder %s25, 3
    %p86 = por %p84, %p85
    %p88 = scmp.ne.s32.totalorder %s71, %s87
    %p89 = scmp.eq.s32.totalorder %s25, 0
    %p90 = por %p88, %p89
    %s91 = ssub.s32 %s26, %s38
    %p92 = scmp.eq.s32.totalorder %s91, 0
    %s94 = sadd.s32 %s93, 1
    %s95 = scalar_select %p92, %s93, %s94
    %p98 = pneg %p92
    %p99 = scmp.eq.s32.totalorder %s19, 3
    %p100 = por %p98, %p99
    %p101 = scmp.ne.s32.totalorder %s93, %s96
    %p102 = scmp.eq.s32.totalorder %s19, 0
    %p103 = por %p101, %p102
    %p104 = scmp.ne.s32.totalorder %s93, %s96
    %p105 = scmp.eq.s32.totalorder %s24, 3
    %p106 = por %p104, %p105
    %p107 = scmp.ne.s32.totalorder %s96, %s97
    %p108 = scmp.eq.s32.totalorder %s24, 0
    %p109 = por %p107, %p108
    %p110 = scmp.ne.s32.totalorder %s96, %s97
    %p111 = scmp.eq.s32.totalorder %s25, 3
    %p112 = por %p110, %p111
    %p114 = scmp.ne.s32.totalorder %s97, %s113
    %p115 = scmp.eq.s32.totalorder %s25, 0
    %p116 = por %p114, %p115
    %s117 = ssub.s32 %s26, %s38
    %p118 = scmp.eq.s32.totalorder %s117, 0
    %s120 = sadd.s32 %s119, 1
    %s121 = scalar_select %p118, %s119, %s120
    %p124 = pneg %p118
    %p125 = scmp.eq.s32.totalorder %s19, 3
    %p126 = por %p124, %p125
    %p127 = scmp.ne.s32.totalorder %s119, %s122
    %p128 = scmp.eq.s32.totalorder %s19, 0
    %p129 = por %p127, %p128
    %p130 = scmp.ne.s32.totalorder %s119, %s122
    %p131 = scmp.eq.s32.totalorder %s24, 3
    %p132 = por %p130, %p131
    %p133 = scmp.ne.s32.totalorder %s122, %s123
    %p134 = scmp.eq.s32.totalorder %s24, 0
    %p135 = por %p133, %p134
    %p136 = scmp.ne.s32.totalorder %s122, %s123
    %p137 = scmp.eq.s32.totalorder %s25, 3
    %p138 = por %p136, %p137
    %p140 = scmp.ne.s32.totalorder %s123, %s139
    %p141 = scmp.eq.s32.totalorder %s25, 0
    %p142 = por %p140, %p141
    %s143 = ssub.s32 %s26, %s38
    %p144 = scmp.eq.s32.totalorder %s143, 0
    %s146 = sadd.s32 %s145, 1
    %s147 = scalar_select %p144, %s145, %s146
    %p150 = pneg %p144
    %p151 = scmp.eq.s32.totalorder %s19, 3
    %p152 = por %p150, %p151
    %p153 = scmp.ne.s32.totalorder %s145, %s148
    %p154 = scmp.eq.s32.totalorder %s19, 0
    %p155 = por %p153, %p154
    %p156 = scmp.ne.s32.totalorder %s145, %s148
    %p157 = scmp.eq.s32.totalorder %s24, 3
    %p158 = por %p156, %p157
    %p159 = scmp.ne.s32.totalorder %s148, %s149
    %p160 = scmp.eq.s32.totalorder %s24, 0
    %p161 = por %p159, %p160
    %p162 = scmp.ne.s32.totalorder %s148, %s149
    %p163 = scmp.eq.s32.totalorder %s25, 3
    %p164 = por %p162, %p163
    %p166 = scmp.ne.s32.totalorder %s149, %s165
    %p167 = scmp.eq.s32.totalorder %s25, 0
    %p168 = por %p166, %p167
    %s169 = ssub.s32 %s26, %s38
    %p170 = scmp.eq.s32.totalorder %s169, 0
    %s172 = sadd.s32 %s171, 1
    %s173 = scalar_select %p170, %s171, %s172
    %p176 = pneg %p170
    %p177 = scmp.eq.s32.totalorder %s19, 3
    %p178 = por %p176, %p177
    %p179 = scmp.ne.s32.totalorder %s171, %s174
    %p180 = scmp.eq.s32.totalorder %s19, 0
    %p181 = por %p179, %p180
    %p182 = scmp.ne.s32.totalorder %s171, %s174
    %p183 = scmp.eq.s32.totalorder %s24, 3
    %p184 = por %p182, %p183
    %p185 = scmp.ne.s32.totalorder %s174, %s175
    %p186 = scmp.eq.s32.totalorder %s24, 0
    %p187 = por %p185, %p186
    %p188 = scmp.ne.s32.totalorder %s174, %s175
    %p189 = scmp.eq.s32.totalorder %s25, 3
    %p190 = por %p188, %p189
    %p192 = scmp.ne.s32.totalorder %s175, %s191
    %p193 = scmp.eq.s32.totalorder %s25, 0
    %p194 = por %p192, %p193
    %s195 = ssub.s32 %s26, %s38
    %p196 = scmp.eq.s32.totalorder %s195, 0
    %s198 = sadd.s32 %s197, 1
    %s199 = scalar_select %p196, %s197, %s198
    %p202 = pneg %p196
    %p203 = scmp.eq.s32.totalorder %s19, 3
    %p204 = por %p202, %p203
    %p205 = scmp.ne.s32.totalorder %s197, %s200
    %p206 = scmp.eq.s32.totalorder %s19, 0
    %p207 = por %p205, %p206
    %p208 = scmp.ne.s32.totalorder %s197, %s200
    %p209 = scmp.eq.s32.totalorder %s24, 3
    %p210 = por %p208, %p209
    %p211 = scmp.ne.s32.totalorder %s200, %s201
    %p212 = scmp.eq.s32.totalorder %s24, 0
    %p213 = por %p211, %p212
    %p214 = scmp.ne.s32.totalorder %s200, %s201
    %p215 = scmp.eq.s32.totalorder %s25, 3
    %p216 = por %p214, %p215
    %p218 = scmp.ne.s32.totalorder %s201, %s217
    %p219 = scmp.eq.s32.totalorder %s25, 0
    %p220 = por %p218, %p219
    %s221 = ssub.s32 %s26, %s38
    %p222 = scmp.eq.s32.totalorder %s221, 0
    %s224 = sadd.s32 %s223, 1
    %s225 = scalar_select %p222, %s223, %s224
    %p228 = pneg %p222
    %p229 = scmp.eq.s32.totalorder %s19, 3
    %p230 = por %p228, %p229
    %p231 = scmp.ne.s32.totalorder %s223, %s226
    %p232 = scmp.eq.s32.totalorder %s19, 0
    %p233 = por %p231, %p232
    %p234 = scmp.ne.s32.totalorder %s223, %s226
    %p235 = scmp.eq.s32.totalorder %s24, 3
    %p236 = por %p234, %p235
    %p237 = scmp.ne.s32.totalorder %s226, %s227
    %p238 = scmp.eq.s32.totalorder %s24, 0
    %p239 = por %p237, %p238
    %p240 = scmp.ne.s32.totalorder %s226, %s227
    %p241 = scmp.eq.s32.totalorder %s25, 3
    %p242 = por %p240, %p241
    %p244 = scmp.ne.s32.totalorder %s227, %s243
    %p245 = scmp.eq.s32.totalorder %s25, 0
    %p246 = por %p244, %p245
    %s247 = ssub.s32 %s26, %s38
    %p248 = scmp.eq.s32.totalorder %s247, 0
    %s250 = sadd.s32 %s249, 1
    %s251 = scalar_select %p248, %s249, %s250
    %p254 = pneg %p248
    %p255 = scmp.eq.s32.totalorder %s19, 3
    %p256 = por %p254, %p255
    %p257 = scmp.ne.s32.totalorder %s249, %s252
    %p258 = scmp.eq.s32.totalorder %s19, 0
    %p259 = por %p257, %p258
    %p260 = scmp.ne.s32.totalorder %s249, %s252
    %p261 = scmp.eq.s32.totalorder %s24, 3
    %p262 = por %p260, %p261
    %p263 = scmp.ne.s32.totalorder %s252, %s253
    %p264 = scmp.eq.s32.totalorder %s24, 0
    %p265 = por %p263, %p264
    %p266 = scmp.ne.s32.totalorder %s252, %s253
    %p267 = scmp.eq.s32.totalorder %s25, 3
    %p268 = por %p266, %p267
    %p270 = scmp.ne.s32.totalorder %s253, %s269
    %p271 = scmp.eq.s32.totalorder %s25, 0
    %p272 = por %p270, %p271
    %s273 = ssub.s32 %s26, %s38
    %p274 = scmp.eq.s32.totalorder %s273, 0
    %s276 = sadd.s32 %s275, 1
    %s277 = scalar_select %p274, %s275, %s276
    %p280 = pneg %p274
    %p281 = scmp.eq.s32.totalorder %s19, 3
    %p282 = por %p280, %p281
    %p283 = scmp.ne.s32.totalorder %s275, %s278
    %p284 = scmp.eq.s32.totalorder %s19, 0
    %p285 = por %p283, %p284
    %p286 = scmp.ne.s32.totalorder %s275, %s278
    %p287 = scmp.eq.s32.totalorder %s24, 3
    %p288 = por %p286, %p287
    %p289 = scmp.ne.s32.totalorder %s278, %s279
    %p290 = scmp.eq.s32.totalorder %s24, 0
    %p291 = por %p289, %p290
    %p292 = scmp.ne.s32.totalorder %s278, %s279
    %p293 = scmp.eq.s32.totalorder %s25, 3
    %p294 = por %p292, %p293
    %p296 = scmp.ne.s32.totalorder %s279, %s295
    %p297 = scmp.eq.s32.totalorder %s25, 0
    %p298 = por %p296, %p297
    %s299 = ssub.s32 %s26, %s38
    %p300 = scmp.eq.s32.totalorder %s299, 0
    %s302 = sadd.s32 %s301, 1
    %s303 = scalar_select %p300, %s301, %s302
    %p306 = pneg %p300
    %p307 = scmp.eq.s32.totalorder %s19, 3
    %p308 = por %p306, %p307
    %p309 = scmp.ne.s32.totalorder %s301, %s304
    %p310 = scmp.eq.s32.totalorder %s19, 0
    %p311 = por %p309, %p310
    %p312 = scmp.ne.s32.totalorder %s301, %s304
    %p313 = scmp.eq.s32.totalorder %s24, 3
    %p314 = por %p312, %p313
    %p315 = scmp.ne.s32.totalorder %s304, %s305
    %p316 = scmp.eq.s32.totalorder %s24, 0
    %p317 = por %p315, %p316
    %p318 = scmp.ne.s32.totalorder %s304, %s305
    %p319 = scmp.eq.s32.totalorder %s25, 3
    %p320 = por %p318, %p319
    %p322 = scmp.ne.s32.totalorder %s305, %s321
    %p323 = scmp.eq.s32.totalorder %s25, 0
    %p324 = por %p322, %p323
    %s325 = ssub.s32 %s26, %s38
    %p326 = scmp.eq.s32.totalorder %s325, 0
    %s328 = sadd.s32 %s327, 1
    %s329 = scalar_select %p326, %s327, %s328
    %p332 = pneg %p326
    %p333 = scmp.eq.s32.totalorder %s19, 3
    %p334 = por %p332, %p333
    %p335 = scmp.ne.s32.totalorder %s327, %s330
    %p336 = scmp.eq.s32.totalorder %s19, 0
    %p337 = por %p335, %p336
    %p338 = scmp.ne.s32.totalorder %s327, %s330
    %p339 = scmp.eq.s32.totalorder %s24, 3
    %p340 = por %p338, %p339
    %p341 = scmp.ne.s32.totalorder %s330, %s331
    %p342 = scmp.eq.s32.totalorder %s24, 0
    %p343 = por %p341, %p342
    %p344 = scmp.ne.s32.totalorder %s330, %s331
    %p345 = scmp.eq.s32.totalorder %s25, 3
    %p346 = por %p344, %p345
    %p348 = scmp.ne.s32.totalorder %s331, %s347
    %p349 = scmp.eq.s32.totalorder %s25, 0
    %p350 = por %p348, %p349
    %s351 = ssub.s32 %s26, %s38
    %p352 = scmp.eq.s32.totalorder %s351, 0
    %s354 = sadd.s32 %s353, 1
    %s355 = scalar_select %p352, %s353, %s354
    %p358 = pneg %p352
    %p359 = scmp.eq.s32.totalorder %s19, 3
    %p360 = por %p358, %p359
    %p361 = scmp.ne.s32.totalorder %s353, %s356
    %p362 = scmp.eq.s32.totalorder %s19, 0
    %p363 = por %p361, %p362
    %p364 = scmp.ne.s32.totalorder %s353, %s356
    %p365 = scmp.eq.s32.totalorder %s24, 3
    %p366 = por %p364, %p365
    %p367 = scmp.ne.s32.totalorder %s356, %s357
    %p368 = scmp.eq.s32.totalorder %s24, 0
    %p369 = por %p367, %p368
    %p370 = scmp.ne.s32.totalorder %s356, %s357
    %p371 = scmp.eq.s32.totalorder %s25, 3
    %p372 = por %p370, %p371
    %p374 = scmp.ne.s32.totalorder %s357, %s373
    %p375 = scmp.eq.s32.totalorder %s25, 0
    %p376 = por %p374, %p375
    %s377 = ssub.s32 %s27, %s34
    %s378 = ssub.s32 %s26, %s38
    %s379 = sor.u32 %s377, %s378
    %p380 = scmp.eq.s32.totalorder %s379, 0
    %s382 = sadd.s32 %s381, 1
    %s383 = scalar_select %p380, %s381, %s382
    %p386 = pneg %p380
    %p387 = scmp.eq.s32.totalorder %s19, 3
    %p388 = por %p386, %p387
    %p389 = scmp.ne.s32.totalorder %s381, %s384
    %p390 = scmp.eq.s32.totalorder %s19, 0
    %p391 = por %p389, %p390
    %p392 = scmp.ne.s32.totalorder %s381, %s384
    %p393 = scmp.eq.s32.totalorder %s24, 3
    %p394 = por %p392, %p393
    %p395 = scmp.ne.s32.totalorder %s384, %s385
    %p396 = scmp.eq.s32.totalorder %s24, 0
    %p397 = por %p395, %p396
    %p398 = scmp.ne.s32.totalorder %s384, %s385
    %p399 = scmp.eq.s32.totalorder %s25, 3
    %p400 = por %p398, %p399
    %p402 = scmp.ne.s32.totalorder %s385, %s401
    %p403 = scmp.eq.s32.totalorder %s25, 0
    %p404 = por %p402, %p403
    %p405 = scmp.le.s32.totalorder 1, %s19
    %p406 = scmp.lt.s32.totalorder %s19, 5
    %p407 = pnand %p405, %p406
    %p408 = pneg %p407
    // Predicated region
    $region9: #{depthwise_rpn_forward.1} parent=5 // pred_check
      _
    $region10: #{depthwise_rpn_forward.1} parent=5 // pred_check_branch
      %410 = sbr.rel (%p407) target = $region12
    $region11: #{depthwise_rpn_forward.1} parent=5 // pred_region
      %s411 = ssub.s32 %s19, 1
    $region12: #{depthwise_rpn_forward.1} parent=5 // pred_fallthru
      _
    %p412 = scmp.lt.s32.totalorder %s19, 4
    // Predicated region
    $region13: #{depthwise_rpn_forward.1} parent=5 // pred_check
      %p413 = pneg %p412
    $region14: #{depthwise_rpn_forward.1} parent=5 // pred_check_branch
      %415 = sbr.rel (%p413) target = $region16
    $region15: #{depthwise_rpn_forward.1} parent=5 // pred_region
      // Predicated region
      $region17: #{depthwise_rpn_forward.1} parent=15 // pred_check
        %p416 = pneg %p51
      $region18: #{depthwise_rpn_forward.1} parent=15 // pred_check_branch
        %418 = sbr.rel (%p416) target = $region20
      $region19: #{depthwise_rpn_forward.1} parent=15 // pred_region
        %p419 = scmp.lt.s32.totalorder %s27, 1
        %s420 = scalar_select %p419, %s27, 1
        %s421 = smul.addr %s420, 7
        %s422 = smul.addr %s421, 4
        %s423 = scalar_lea.vmem %s0, %s422
      $region20: #{depthwise_rpn_forward.1} parent=15 // pred_fallthru
        _
      // Predicated region
      $region21: #{depthwise_rpn_forward.1} parent=15 // pred_check
        %p424 = pneg %p77
      $region22: #{depthwise_rpn_forward.1} parent=15 // pred_check_branch
        %426 = sbr.rel (%p424) target = $region24
      $region23: #{depthwise_rpn_forward.1} parent=15 // pred_region
        %p427 = scmp.lt.s32.totalorder %s27, 1
        %s428 = scalar_select %p427, %s27, 1
        %s429 = smul.addr %s428, 30
        %s430 = smul.addr %s429, 4
        %s431 = scalar_lea.vmem %s1, %s430
      $region24: #{depthwise_rpn_forward.1} parent=15 // pred_fallthru
        _
      // Predicated region
      $region25: #{depthwise_rpn_forward.1} parent=15 // pred_check
        %p432 = pneg %p103
      $region26: #{depthwise_rpn_forward.1} parent=15 // pred_check_branch
        %434 = sbr.rel (%p432) target = $region28
      $region27: #{depthwise_rpn_forward.1} parent=15 // pred_region
        %p435 = scmp.lt.s32.totalorder %s26, 1
        %s436 = scalar_select %p435, %s26, 1
        %s437 = smul.addr %s436, 5
        %s438 = smul.addr %s437, 4
        %s439 = scalar_lea.vmem %s2, %s438
      $region28: #{depthwise_rpn_forward.1} parent=15 // pred_fallthru
        _
      // Predicated region
      $region29: #{depthwise_rpn_forward.1} parent=15 // pred_check
        %p440 = pneg %p129
      $region30: #{depthwise_rpn_forward.1} parent=15 // pred_check_branch
        %442 = sbr.rel (%p440) target = $region32
      $region31: #{depthwise_rpn_forward.1} parent=15 // pred_region
        %p443 = scmp.lt.s32.totalorder %s26, 1
        %s444 = scalar_select %p443, %s26, 1
        %s445 = scalar_lea.vmem %s3, %s444
      $region32: #{depthwise_rpn_forward.1} parent=15 // pred_fallthru
        _
      // Predicated region
      $region33: #{depthwise_rpn_forward.1} parent=15 // pred_check
        %p446 = pneg %p155
      $region34: #{depthwise_rpn_forward.1} parent=15 // pred_check_branch
        %448 = sbr.rel (%p446) target = $region36
      $region35: #{depthwise_rpn_forward.1} parent=15 // pred_region
        %p449 = scmp.lt.s32.totalorder %s26, 1
        %s450 = scalar_select %p449, %s26, 1
        %s451 = scalar_lea.vmem %s4, %s450
      $region36: #{depthwise_rpn_forward.1} parent=15 // pred_fallthru
        _
      // Predicated region
      $region37: #{depthwise_rpn_forward.1} parent=15 // pred_check
        %p452 = pneg %p181
      $region38: #{depthwise_rpn_forward.1} parent=15 // pred_check_branch
        %454 = sbr.rel (%p452) target = $region40
      $region39: #{depthwise_rpn_forward.1} parent=15 // pred_region
        %p455 = scmp.lt.s32.totalorder %s26, 1
        %s456 = scalar_select %p455, %s26, 1
        %s457 = smul.addr %s456, 5
        %s458 = smul.addr %s457, 4
        %s459 = scalar_lea.vmem %s5, %s458
      $region40: #{depthwise_rpn_forward.1} parent=15 // pred_fallthru
        _
      // Predicated region
      $region41: #{depthwise_rpn_forward.1} parent=15 // pred_check
        %p460 = pneg %p207
      $region42: #{depthwise_rpn_forward.1} parent=15 // pred_check_branch
        %462 = sbr.rel (%p460) target = $region44
      $region43: #{depthwise_rpn_forward.1} parent=15 // pred_region
        %p463 = scmp.lt.s32.totalorder %s26, 1
        %s464 = scalar_select %p463, %s26, 1
        %s465 = scalar_lea.vmem %s6, %s464
      $region44: #{depthwise_rpn_forward.1} parent=15 // pred_fallthru
        _
      // Predicated region
      $region45: #{depthwise_rpn_forward.1} parent=15 // pred_check
        %p466 = pneg %p233
      $region46: #{depthwise_rpn_forward.1} parent=15 // pred_check_branch
        %468 = sbr.rel (%p466) target = $region48
      $region47: #{depthwise_rpn_forward.1} parent=15 // pred_region
        %p469 = scmp.lt.s32.totalorder %s26, 1
        %s470 = scalar_select %p469, %s26, 1
        %s471 = scalar_lea.vmem %s7, %s470
      $region48: #{depthwise_rpn_forward.1} parent=15 // pred_fallthru
        _
      // Predicated region
      $region49: #{depthwise_rpn_forward.1} parent=15 // pred_check
        %p472 = pneg %p259
      $region50: #{depthwise_rpn_forward.1} parent=15 // pred_check_branch
        %474 = sbr.rel (%p472) target = $region52
      $region51: #{depthwise_rpn_forward.1} parent=15 // pred_region
        %p475 = scmp.lt.s32.totalorder %s26, 1
        %s476 = scalar_select %p475, %s26, 1
        %s477 = smul.addr %s476, 4
        %s478 = scalar_lea.vmem %s8, %s477
      $region52: #{depthwise_rpn_forward.1} parent=15 // pred_fallthru
        _
      // Predicated region
      $region53: #{depthwise_rpn_forward.1} parent=15 // pred_check
        %p479 = pneg %p285
      $region54: #{depthwise_rpn_forward.1} parent=15 // pred_check_branch
        %481 = sbr.rel (%p479) target = $region56
      $region55: #{depthwise_rpn_forward.1} parent=15 // pred_region
        %p482 = scmp.lt.s32.totalorder %s26, 1
        %s483 = scalar_select %p482, %s26, 1
        %s484 = scalar_lea.vmem %s9, %s483
      $region56: #{depthwise_rpn_forward.1} parent=15 // pred_fallthru
        _
      // Predicated region
      $region57: #{depthwise_rpn_forward.1} parent=15 // pred_check
        %p485 = pneg %p311
      $region58: #{depthwise_rpn_forward.1} parent=15 // pred_check_branch
        %487 = sbr.rel (%p485) target = $region60
      $region59: #{depthwise_rpn_forward.1} parent=15 // pred_region
        %p488 = scmp.lt.s32.totalorder %s26, 1
        %s489 = scalar_select %p488, %s26, 1
        %s490 = scalar_lea.vmem %s10, %s489
      $region60: #{depthwise_rpn_forward.1} parent=15 // pred_fallthru
        _
      // Predicated region
      $region61: #{depthwise_rpn_forward.1} parent=15 // pred_check
        %p491 = pneg %p337
      $region62: #{depthwise_rpn_forward.1} parent=15 // pred_check_branch
        %493 = sbr.rel (%p491) target = $region64
      $region63: #{depthwise_rpn_forward.1} parent=15 // pred_region
        %p494 = scmp.lt.s32.totalorder %s26, 1
        %s495 = scalar_select %p494, %s26, 1
        %s496 = smul.addr %s495, 4
        %s497 = scalar_lea.vmem %s11, %s496
      $region64: #{depthwise_rpn_forward.1} parent=15 // pred_fallthru
        _
      // Predicated region
      $region65: #{depthwise_rpn_forward.1} parent=15 // pred_check
        %p498 = pneg %p363
      $region66: #{depthwise_rpn_forward.1} parent=15 // pred_check_branch
        %500 = sbr.rel (%p498) target = $region68
      $region67: #{depthwise_rpn_forward.1} parent=15 // pred_region
        %p501 = scmp.lt.s32.totalorder %s26, 1
        %s502 = scalar_select %p501, %s26, 1
        %s503 = scalar_lea.vmem %s12, %s502
      $region68: #{depthwise_rpn_forward.1} parent=15 // pred_fallthru
        _
    $region16: #{depthwise_rpn_forward.1} parent=5 // pred_fallthru
      _
    %p504 = scmp.le.s32.totalorder 1, %s19
    %p505 = scmp.lt.s32.totalorder %s19, 5
    %p506 = pnand %p504, %p505
    %p507 = pneg %p506
    // Predicated region
    $region69: #{depthwise_rpn_forward.1} parent=5 // pred_check
      _
    $region70: #{depthwise_rpn_forward.1} parent=5 // pred_check_branch
      %509 = sbr.rel (%p506) target = $region72
    $region71: #{depthwise_rpn_forward.1} parent=5 // pred_region
      %s510 = ssub.s32 %s19, 1
      %p511 = scmp.lt.s32.totalorder %s29, 1
      %s512 = scalar_select %p511, %s29, 1
      %s513 = smul.addr %s512, 7
      %s514 = smul.addr %s513, 4
      %s515 = scalar_lea.vmem %s0, %s514
      %p516 = pneg %p57
      %p517 = pneg %p54
      %p518 = scmp.lt.s32.totalorder %s29, 1
      %s519 = scalar_select %p518, %s29, 1
      %s520 = smul.addr %s519, 30
      %s521 = smul.addr %s520, 4
      %s522 = scalar_lea.vmem %s1, %s521
      %p523 = pneg %p83
      %p524 = pneg %p80
      %p525 = scmp.lt.s32.totalorder %s28, 1
      %s526 = scalar_select %p525, %s28, 1
      %s527 = smul.addr %s526, 5
      %s528 = smul.addr %s527, 4
      %s529 = scalar_lea.vmem %s2, %s528
      %p530 = pneg %p109
      %p531 = pneg %p106
      %p532 = scmp.lt.s32.totalorder %s28, 1
      %s533 = scalar_select %p532, %s28, 1
      %s534 = scalar_lea.vmem %s3, %s533
      %p535 = pneg %p135
      %p536 = pneg %p132
      %p537 = scmp.lt.s32.totalorder %s28, 1
      %s538 = scalar_select %p537, %s28, 1
      %s539 = scalar_lea.vmem %s4, %s538
      %p540 = pneg %p161
      %p541 = pneg %p158
      %p542 = scmp.lt.s32.totalorder %s28, 1
      %s543 = scalar_select %p542, %s28, 1
      %s544 = smul.addr %s543, 5
      %s545 = smul.addr %s544, 4
      %s546 = scalar_lea.vmem %s5, %s545
      %p547 = pneg %p187
      %p548 = pneg %p184
      %p549 = scmp.lt.s32.totalorder %s28, 1
      %s550 = scalar_select %p549, %s28, 1
      %s551 = scalar_lea.vmem %s6, %s550
      %p552 = pneg %p213
      %p553 = pneg %p210
      %p554 = scmp.lt.s32.totalorder %s28, 1
      %s555 = scalar_select %p554, %s28, 1
      %s556 = scalar_lea.vmem %s7, %s555
      %p557 = pneg %p239
      %p558 = pneg %p236
      %p559 = scmp.lt.s32.totalorder %s28, 1
      %s560 = scalar_select %p559, %s28, 1
      %s561 = smul.addr %s560, 4
      %s562 = scalar_lea.vmem %s8, %s561
      %p563 = pneg %p265
      %p564 = pneg %p262
      %p565 = scmp.lt.s32.totalorder %s28, 1
      %s566 = scalar_select %p565, %s28, 1
      %s567 = scalar_lea.vmem %s9, %s566
      %p568 = pneg %p291
      %p569 = pneg %p288
      %p570 = scmp.lt.s32.totalorder %s28, 1
      %s571 = scalar_select %p570, %s28, 1
      %s572 = scalar_lea.vmem %s10, %s571
      %p573 = pneg %p317
      %p574 = pneg %p314
      %p575 = scmp.lt.s32.totalorder %s28, 1
      %s576 = scalar_select %p575, %s28, 1
      %s577 = smul.addr %s576, 4
      %s578 = scalar_lea.vmem %s11, %s577
      %p579 = pneg %p343
      %p580 = pneg %p340
      %p581 = scmp.lt.s32.totalorder %s28, 1
      %s582 = scalar_select %p581, %s28, 1
      %s583 = scalar_lea.vmem %s12, %s582
      %p584 = pneg %p369
      %p585 = pneg %p366
      %p586 = pneg %p397
      %p587 = pneg %p394
      %p588 = scmp.lt.s32.totalorder %s29, 1
      %s589 = scalar_select %p588, %s29, 1
      %p590 = scmp.lt.s32.totalorder %s28, 1
      %s591 = scalar_select %p590, %s28, 1
      %s592 = smul.addr %s591, 18
      %s593 = smul.addr %s589, 36
      %s594 = sadd.s32 %s592, %s593
      %s595 = smul.addr %s594, 8
      %s596 = scalar_lea.vmem %s13, %s595
      %p597 = scmp.lt.s32.totalorder %s29, 1
      %s598 = scalar_select %p597, %s29, 1
      %s599 = smul.addr %s598, 7
      %s600 = smul.addr %s599, 4
      %s601 = scalar_lea.vmem %s0, %s600
      %p602 = scmp.lt.s32.totalorder %s29, 1
      %s603 = scalar_select %p602, %s29, 1
      %s604 = smul.addr %s603, 30
      %s605 = smul.addr %s604, 4
      %s606 = scalar_lea.vmem %s1, %s605
      %p607 = scmp.lt.s32.totalorder %s28, 1
      %s608 = scalar_select %p607, %s28, 1
      %s609 = smul.addr %s608, 5
      %s610 = smul.addr %s609, 4
      %s611 = scalar_lea.vmem %s2, %s610
      %p612 = scmp.lt.s32.totalorder %s28, 1
      %s613 = scalar_select %p612, %s28, 1
      %s614 = scalar_lea.vmem %s3, %s613
      %p615 = scmp.lt.s32.totalorder %s28, 1
      %s616 = scalar_select %p615, %s28, 1
      %s617 = scalar_lea.vmem %s4, %s616
      %p618 = scmp.lt.s32.totalorder %s28, 1
      %s619 = scalar_select %p618, %s28, 1
      %s620 = smul.addr %s619, 5
      %s621 = smul.addr %s620, 4
      %s622 = scalar_lea.vmem %s5, %s621
      %p623 = scmp.lt.s32.totalorder %s28, 1
      %s624 = scalar_select %p623, %s28, 1
      %s625 = scalar_lea.vmem %s6, %s624
      %p626 = scmp.lt.s32.totalorder %s28, 1
      %s627 = scalar_select %p626, %s28, 1
      %s628 = scalar_lea.vmem %s7, %s627
      %p629 = scmp.lt.s32.totalorder %s28, 1
      %s630 = scalar_select %p629, %s28, 1
      %s631 = smul.addr %s630, 4
      %s632 = scalar_lea.vmem %s8, %s631
      %p633 = scmp.lt.s32.totalorder %s28, 1
      %s634 = scalar_select %p633, %s28, 1
      %s635 = scalar_lea.vmem %s9, %s634
      %p636 = scmp.lt.s32.totalorder %s28, 1
      %s637 = scalar_select %p636, %s28, 1
      %s638 = scalar_lea.vmem %s10, %s637
      %p639 = scmp.lt.s32.totalorder %s28, 1
      %s640 = scalar_select %p639, %s28, 1
      %s641 = smul.addr %s640, 4
      %s642 = scalar_lea.vmem %s11, %s641
      %p643 = scmp.lt.s32.totalorder %s28, 1
      %s644 = scalar_select %p643, %s28, 1
      %s645 = scalar_lea.vmem %s12, %s644
      %p646 = scmp.lt.s32.totalorder %s29, 1
      %s647 = scalar_select %p646, %s29, 1
      %p648 = scmp.lt.s32.totalorder %s28, 1
      %s649 = scalar_select %p648, %s28, 1
      %s650 = smul.addr %s649, 18
      %s651 = smul.addr %s647, 36
      %s652 = sadd.s32 %s650, %s651
      %s653 = smul.addr %s652, 8
      %s654 = scalar_lea.vmem %s13, %s653
      %vm656 = vcmask 293890
      %vm657 = vsmask.f32 7946
      %vm658 = vmand %vm656, %vm657
      %v659 = vld [vmem:[#allocation2] sm:$0xfc]
      %v660 = vsel %vm658, 0, %v659
      %661 = vst [vmem:[#allocation2] sm:$0xfc] %v660
      %v662 = vld [vmem:[#allocation2 + $0x8] sm:$0xfc]
      %v663 = vsel %vm658, 0, %v662
      %664 = vst [vmem:[#allocation2 + $0x8] sm:$0xfc] %v663
      %v665 = vld [vmem:[#allocation2 + $0x10] sm:$0xfc]
      %v666 = vsel %vm658, 0, %v665
      %667 = vst [vmem:[#allocation2 + $0x10] sm:$0xfc] %v666
      %v668 = vld [vmem:[#allocation2 + $0x18] sm:$0xfc]
      %v669 = vsel %vm658, 0, %v668
      %670 = vst [vmem:[#allocation2 + $0x18] sm:$0xfc] %v669
      %v671 = vld [vmem:[#allocation2 + $0x20] sm:$0xfc]
      %v672 = vsel %vm658, 0, %v671
      %673 = vst [vmem:[#allocation2 + $0x20] sm:$0xfc] %v672
      %v674 = vld [vmem:[%s601] sm:$0x7]
      %v675 = vld [vmem:[%s601 + $0x4] sm:$0x7]
      %v676 = vld [vmem:[%s601 + $0x8] sm:$0x7]
      %v677 = vld [vmem:[%s601 + $0xc] sm:$0x7]
      %v678 = vld [vmem:[%s601 + $0x10] sm:$0x7]
      %vm679 = vcmask 26624
      %vm680 = vsmask.f32 2304
      %vm681 = vmand %vm679, %vm680
      %v682 = vld [vmem:[#allocation2] sm:$0x7]
      %v683 = vsel %vm681, %v674, %v682
      %684 = vst [vmem:[#allocation2] sm:$0x7] %v683
      %v685 = vld [vmem:[#allocation2 + $0x8] sm:$0x7]
      %v686 = vsel %vm681, %v675, %v685
      %687 = vst [vmem:[#allocation2 + $0x8] sm:$0x7] %v686
      %v688 = vld [vmem:[#allocation2 + $0x10] sm:$0x7]
      %v689 = vsel %vm681, %v676, %v688
      %690 = vst [vmem:[#allocation2 + $0x10] sm:$0x7] %v689
      %v691 = vld [vmem:[#allocation2 + $0x18] sm:$0x7]
      %v692 = vsel %vm681, %v677, %v691
      %693 = vst [vmem:[#allocation2 + $0x18] sm:$0x7] %v692
      %v694 = vld [vmem:[#allocation2 + $0x20] sm:$0x7]
      %v695 = vsel %vm681, %v678, %v694
      %696 = vst [vmem:[#allocation2 + $0x20] sm:$0x7] %v695
      %v697 = vld [vmem:[%s601] sm:$0x7]
      %v698 = vld [vmem:[%s601 + $0x4] sm:$0x7]
      %v699 = vld [vmem:[%s601 + $0x8] sm:$0x7]
      %v700 = vld [vmem:[%s601 + $0xc] sm:$0x7]
      %v701 = vld [vmem:[%s601 + $0x10] sm:$0x7]
      %v707 = vunpack.c.l.b16 %v697
      %v708 = vunpack.c.l.b16 %v698
      %v709 = vunpack.c.l.b16 %v699
      %v710 = vunpack.c.l.b16 %v700
      %v711 = vunpack.c.l.b16 %v701
      %v712 = vpack.c.b16 %v707, %v707
      %v713 = vpack.c.b16 %v708, %v708
      %v714 = vpack.c.b16 %v709, %v709
      %v715 = vpack.c.b16 %v710, %v710
      %v716 = vpack.c.b16 %v711, %v711
      %v718 = vshrl.u32 %v712, 16
      %v720 = vshll.u32 %v712, 16
      %v722 = vrot.slane %v720, 1
      %v723 = vor.u32 %v718, %v722
      %v725 = vshrl.u32 %v713, 16
      %v727 = vshll.u32 %v713, 16
      %v729 = vrot.slane %v727, 1
      %v730 = vor.u32 %v725, %v729
      %v732 = vshrl.u32 %v714, 16
      %v734 = vshll.u32 %v714, 16
      %v736 = vrot.slane %v734, 1
      %v737 = vor.u32 %v732, %v736
      %v739 = vshrl.u32 %v715, 16
      %v741 = vshll.u32 %v715, 16
      %v743 = vrot.slane %v741, 1
      %v744 = vor.u32 %v739, %v743
      %v746 = vshrl.u32 %v716, 16
      %v748 = vshll.u32 %v716, 16
      %v750 = vrot.slane %v748, 1
      %v751 = vor.u32 %v746, %v750
      %752 = vrot.lane.b32.xlu0 %v723, 4
      %v753 = vpop.permute.xlu0 %752
      %754 = vrot.lane.b32.xlu0 %v730, 4
      %v755 = vpop.permute.xlu0 %754
      %756 = vrot.lane.b32.xlu0 %v737, 4
      %v757 = vpop.permute.xlu0 %756
      %758 = vrot.lane.b32.xlu0 %v744, 4
      %v759 = vpop.permute.xlu0 %758
      %760 = vrot.lane.b32.xlu0 %v751, 4
      %v761 = vpop.permute.xlu0 %760
      %vm767 = vcmask 59424
      %vm768 = vmand %vm767, %vm680
      %v769 = vld [vmem:[#allocation2] sm:$0x7]
      %v770 = vsel %vm768, %v753, %v769
      %771 = vst [vmem:[#allocation2] sm:$0x7] %v770
      %v772 = vld [vmem:[#allocation2 + $0x8] sm:$0x7]
      %v773 = vsel %vm768, %v755, %v772
      %774 = vst [vmem:[#allocation2 + $0x8] sm:$0x7] %v773
      %v775 = vld [vmem:[#allocation2 + $0x10] sm:$0x7]
      %v776 = vsel %vm768, %v757, %v775
      %777 = vst [vmem:[#allocation2 + $0x10] sm:$0x7] %v776
      %v778 = vld [vmem:[#allocation2 + $0x18] sm:$0x7]
      %v779 = vsel %vm768, %v759, %v778
      %780 = vst [vmem:[#allocation2 + $0x18] sm:$0x7] %v779
      %v781 = vld [vmem:[#allocation2 + $0x20] sm:$0x7]
      %v782 = vsel %vm768, %v761, %v781
      %783 = vst [vmem:[#allocation2 + $0x20] sm:$0x7] %v782
      %v784 = vld [vmem:[%s601] sm:$0xe]
      %v785 = vld [vmem:[%s601 + $0x4] sm:$0xe]
      %v786 = vld [vmem:[%s601 + $0x8] sm:$0xe]
      %v787 = vld [vmem:[%s601 + $0xc] sm:$0xe]
      %v788 = vld [vmem:[%s601 + $0x10] sm:$0xe]
      %v794 = vunpack.c.l.b16 %v784
      %v795 = vunpack.c.l.b16 %v785
      %v796 = vunpack.c.l.b16 %v786
      %v797 = vunpack.c.l.b16 %v787
      %v798 = vunpack.c.l.b16 %v788
      %v799 = vpack.c.b16 %v794, %v794
      %v800 = vpack.c.b16 %v795, %v795
      %v801 = vpack.c.b16 %v796, %v796
      %v802 = vpack.c.b16 %v797, %v797
      %v803 = vpack.c.b16 %v798, %v798
      %v804 = vrot.slane %v799, 1
      %v805 = vrot.slane %v800, 1
      %v806 = vrot.slane %v801, 1
      %v807 = vrot.slane %v802, 1
      %v808 = vrot.slane %v803, 1
      %809 = vrot.lane.b32.xlu0 %v804, 8
      %v810 = vpop.permute.xlu0 %809
      %811 = vrot.lane.b32.xlu0 %v805, 8
      %v812 = vpop.permute.xlu0 %811
      %813 = vrot.lane.b32.xlu0 %v806, 8
      %v814 = vpop.permute.xlu0 %813
      %815 = vrot.lane.b32.xlu0 %v807, 8
      %v816 = vpop.permute.xlu0 %815
      %817 = vrot.lane.b32.xlu0 %v808, 8
      %v818 = vpop.permute.xlu0 %817
      %vm824 = vcmask 92224
      %vm825 = vmand %vm824, %vm680
      %v826 = vld [vmem:[#allocation2] sm:$0x7]
      %v827 = vsel %vm825, %v810, %v826
      %828 = vst [vmem:[#allocation2] sm:$0x7] %v827
      %v829 = vld [vmem:[#allocation2 + $0x8] sm:$0x7]
      %v830 = vsel %vm825, %v812, %v829
      %831 = vst [vmem:[#allocation2 + $0x8] sm:$0x7] %v830
      %v832 = vld [vmem:[#allocation2 + $0x10] sm:$0x7]
      %v833 = vsel %vm825, %v814, %v832
      %834 = vst [vmem:[#allocation2 + $0x10] sm:$0x7] %v833
      %v835 = vld [vmem:[#allocation2 + $0x18] sm:$0x7]
      %v836 = vsel %vm825, %v816, %v835
      %837 = vst [vmem:[#allocation2 + $0x18] sm:$0x7] %v836
      %v838 = vld [vmem:[#allocation2 + $0x20] sm:$0x7]
      %v839 = vsel %vm825, %v818, %v838
      %840 = vst [vmem:[#allocation2 + $0x20] sm:$0x7] %v839
      %s841 = scalar_lea.vmem %s601, 4
      %v842 = vld [vmem:[%s841] sm:$0x7]
      %v843 = vld [vmem:[%s841 + $0x4] sm:$0x7]
      %v844 = vld [vmem:[%s841 + $0x8] sm:$0x7]
      %v845 = vld [vmem:[%s841 + $0xc] sm:$0x7]
      %v846 = vld [vmem:[%s841 + $0x10] sm:$0x7]
      %v852 = vunpack.c.l.b16 %v842
      %v853 = vunpack.c.l.b16 %v843
      %v854 = vunpack.c.l.b16 %v844
      %v855 = vunpack.c.l.b16 %v845
      %v856 = vunpack.c.l.b16 %v846
      %v857 = vpack.c.b16 %v852, %v852
      %v858 = vpack.c.b16 %v853, %v853
      %v859 = vpack.c.b16 %v854, %v854
      %v860 = vpack.c.b16 %v855, %v855
      %v861 = vpack.c.b16 %v856, %v856
      %862 = vrot.lane.b32.xlu0 %v857, 12
      %v863 = vpop.permute.xlu0 %862
      %864 = vrot.lane.b32.xlu0 %v858, 12
      %v865 = vpop.permute.xlu0 %864
      %866 = vrot.lane.b32.xlu0 %v859, 12
      %v867 = vpop.permute.xlu0 %866
      %868 = vrot.lane.b32.xlu0 %v860, 12
      %v869 = vpop.permute.xlu0 %868
      %870 = vrot.lane.b32.xlu0 %v861, 12
      %v871 = vpop.permute.xlu0 %870
      %vm877 = vcmask 125024
      %vm878 = vmand %vm877, %vm680
      %v879 = vld [vmem:[#allocation2] sm:$0x7]
      %v880 = vsel %vm878, %v863, %v879
      %881 = vst [vmem:[#allocation2] sm:$0x7] %v880
      %v882 = vld [vmem:[#allocation2 + $0x8] sm:$0x7]
      %v883 = vsel %vm878, %v865, %v882
      %884 = vst [vmem:[#allocation2 + $0x8] sm:$0x7] %v883
      %v885 = vld [vmem:[#allocation2 + $0x10] sm:$0x7]
      %v886 = vsel %vm878, %v867, %v885
      %887 = vst [vmem:[#allocation2 + $0x10] sm:$0x7] %v886
      %v888 = vld [vmem:[#allocation2 + $0x18] sm:$0x7]
      %v889 = vsel %vm878, %v869, %v888
      %890 = vst [vmem:[#allocation2 + $0x18] sm:$0x7] %v889
      %v891 = vld [vmem:[#allocation2 + $0x20] sm:$0x7]
      %v892 = vsel %vm878, %v871, %v891
      %893 = vst [vmem:[#allocation2 + $0x20] sm:$0x7] %v892
      %v894 = vld [vmem:[%s841] sm:$0x7]
      %v895 = vld [vmem:[%s841 + $0x4] sm:$0x7]
      %v896 = vld [vmem:[%s841 + $0x8] sm:$0x7]
      %v897 = vld [vmem:[%s841 + $0xc] sm:$0x7]
      %v898 = vld [vmem:[%s841 + $0x10] sm:$0x7]
      %v904 = vunpack.c.l.b16 %v894
      %v905 = vunpack.c.l.b16 %v895
      %v906 = vunpack.c.l.b16 %v896
      %v907 = vunpack.c.l.b16 %v897
      %v908 = vunpack.c.l.b16 %v898
      %v909 = vpack.c.b16 %v904, %v904
      %v910 = vpack.c.b16 %v905, %v905
      %v911 = vpack.c.b16 %v906, %v906
      %v912 = vpack.c.b16 %v907, %v907
      %v913 = vpack.c.b16 %v908, %v908
      %v915 = vshrl.u32 %v909, 16
      %v917 = vshll.u32 %v909, 16
      %v919 = vrot.slane %v917, 1
      %v920 = vor.u32 %v915, %v919
      %v922 = vshrl.u32 %v910, 16
      %v924 = vshll.u32 %v910, 16
      %v926 = vrot.slane %v924, 1
      %v927 = vor.u32 %v922, %v926
      %v929 = vshrl.u32 %v911, 16
      %v931 = vshll.u32 %v911, 16
      %v933 = vrot.slane %v931, 1
      %v934 = vor.u32 %v929, %v933
      %v936 = vshrl.u32 %v912, 16
      %v938 = vshll.u32 %v912, 16
      %v940 = vrot.slane %v938, 1
      %v941 = vor.u32 %v936, %v940
      %v943 = vshrl.u32 %v913, 16
      %v945 = vshll.u32 %v913, 16
      %v947 = vrot.slane %v945, 1
      %v948 = vor.u32 %v943, %v947
      %949 = vrot.lane.b32.xlu0 %v920, 16
      %v950 = vpop.permute.xlu0 %949
      %951 = vrot.lane.b32.xlu0 %v927, 16
      %v952 = vpop.permute.xlu0 %951
      %953 = vrot.lane.b32.xlu0 %v934, 16
      %v954 = vpop.permute.xlu0 %953
      %955 = vrot.lane.b32.xlu0 %v941, 16
      %v956 = vpop.permute.xlu0 %955
      %957 = vrot.lane.b32.xlu0 %v948, 16
      %v958 = vpop.permute.xlu0 %957
      %vm964 = vcmask 157824
      %vm965 = vmand %vm964, %vm680
      %v966 = vld [vmem:[#allocation2] sm:$0x7]
      %v967 = vsel %vm965, %v950, %v966
      %968 = vst [vmem:[#allocation2] sm:$0x7] %v967
      %v969 = vld [vmem:[#allocation2 + $0x8] sm:$0x7]
      %v970 = vsel %vm965, %v952, %v969
      %971 = vst [vmem:[#allocation2 + $0x8] sm:$0x7] %v970
      %v972 = vld [vmem:[#allocation2 + $0x10] sm:$0x7]
      %v973 = vsel %vm965, %v954, %v972
      %974 = vst [vmem:[#allocation2 + $0x10] sm:$0x7] %v973
      %v975 = vld [vmem:[#allocation2 + $0x18] sm:$0x7]
      %v976 = vsel %vm965, %v956, %v975
      %977 = vst [vmem:[#allocation2 + $0x18] sm:$0x7] %v976
      %v978 = vld [vmem:[#allocation2 + $0x20] sm:$0x7]
      %v979 = vsel %vm965, %v958, %v978
      %980 = vst [vmem:[#allocation2 + $0x20] sm:$0x7] %v979
      %v981 = vld [vmem:[%s841] sm:$0xe]
      %v982 = vld [vmem:[%s841 + $0x4] sm:$0xe]
      %v983 = vld [vmem:[%s841 + $0x8] sm:$0xe]
      %v984 = vld [vmem:[%s841 + $0xc] sm:$0xe]
      %v985 = vld [vmem:[%s841 + $0x10] sm:$0xe]
      %v991 = vunpack.c.l.b16 %v981
      %v992 = vunpack.c.l.b16 %v982
      %v993 = vunpack.c.l.b16 %v983
      %v994 = vunpack.c.l.b16 %v984
      %v995 = vunpack.c.l.b16 %v985
      %v996 = vpack.c.b16 %v991, %v991
      %v997 = vpack.c.b16 %v992, %v992
      %v998 = vpack.c.b16 %v993, %v993
      %v999 = vpack.c.b16 %v994, %v994
      %v1000 = vpack.c.b16 %v995, %v995
      %v1001 = vrot.slane %v996, 1
      %v1002 = vrot.slane %v997, 1
      %v1003 = vrot.slane %v998, 1
      %v1004 = vrot.slane %v999, 1
      %v1005 = vrot.slane %v1000, 1
      %1006 = vrot.lane.b32.xlu0 %v1001, 20
      %v1007 = vpop.permute.xlu0 %1006
      %1008 = vrot.lane.b32.xlu0 %v1002, 20
      %v1009 = vpop.permute.xlu0 %1008
      %1010 = vrot.lane.b32.xlu0 %v1003, 20
      %v1011 = vpop.permute.xlu0 %1010
      %1012 = vrot.lane.b32.xlu0 %v1004, 20
      %v1013 = vpop.permute.xlu0 %1012
      %1014 = vrot.lane.b32.xlu0 %v1005, 20
      %v1015 = vpop.permute.xlu0 %1014
      %vm1021 = vcmask 190624
      %vm1022 = vmand %vm1021, %vm680
      %v1023 = vld [vmem:[#allocation2] sm:$0x7]
      %v1024 = vsel %vm1022, %v1007, %v1023
      %1025 = vst [vmem:[#allocation2] sm:$0x7] %v1024
      %v1026 = vld [vmem:[#allocation2 + $0x8] sm:$0x7]
      %v1027 = vsel %vm1022, %v1009, %v1026
      %1028 = vst [vmem:[#allocation2 + $0x8] sm:$0x7] %v1027
      %v1029 = vld [vmem:[#allocation2 + $0x10] sm:$0x7]
      %v1030 = vsel %vm1022, %v1011, %v1029
      %1031 = vst [vmem:[#allocation2 + $0x10] sm:$0x7] %v1030
      %v1032 = vld [vmem:[#allocation2 + $0x18] sm:$0x7]
      %v1033 = vsel %vm1022, %v1013, %v1032
      %1034 = vst [vmem:[#allocation2 + $0x18] sm:$0x7] %v1033
      %v1035 = vld [vmem:[#allocation2 + $0x20] sm:$0x7]
      %v1036 = vsel %vm1022, %v1015, %v1035
      %1037 = vst [vmem:[#allocation2 + $0x20] sm:$0x7] %v1036
      %s1038 = scalar_lea.vmem %s601, 8
      %v1039 = vld [vmem:[%s1038] sm:$0x7]
      %v1040 = vld [vmem:[%s1038 + $0x4] sm:$0x7]
      %v1041 = vld [vmem:[%s1038 + $0x8] sm:$0x7]
      %v1042 = vld [vmem:[%s1038 + $0xc] sm:$0x7]
      %v1043 = vld [vmem:[%s1038 + $0x10] sm:$0x7]
      %v1049 = vunpack.c.l.b16 %v1039
      %v1050 = vunpack.c.l.b16 %v1040
      %v1051 = vunpack.c.l.b16 %v1041
      %v1052 = vunpack.c.l.b16 %v1042
      %v1053 = vunpack.c.l.b16 %v1043
      %v1054 = vpack.c.b16 %v1049, %v1049
      %v1055 = vpack.c.b16 %v1050, %v1050
      %v1056 = vpack.c.b16 %v1051, %v1051
      %v1057 = vpack.c.b16 %v1052, %v1052
      %v1058 = vpack.c.b16 %v1053, %v1053
      %1059 = vrot.lane.b32.xlu0 %v1054, 24
      %v1060 = vpop.permute.xlu0 %1059
      %1061 = vrot.lane.b32.xlu0 %v1055, 24
      %v1062 = vpop.permute.xlu0 %1061
      %1063 = vrot.lane.b32.xlu0 %v1056, 24
      %v1064 = vpop.permute.xlu0 %1063
      %1065 = vrot.lane.b32.xlu0 %v1057, 24
      %v1066 = vpop.permute.xlu0 %1065
      %1067 = vrot.lane.b32.xlu0 %v1058, 24
      %v1068 = vpop.permute.xlu0 %1067
      %vm1074 = vcmask 223424
      %vm1075 = vmand %vm1074, %vm680
      %v1076 = vld [vmem:[#allocation2] sm:$0x7]
      %v1077 = vsel %vm1075, %v1060, %v1076
      %1078 = vst [vmem:[#allocation2] sm:$0x7] %v1077
      %v1079 = vld [vmem:[#allocation2 + $0x8] sm:$0x7]
      %v1080 = vsel %vm1075, %v1062, %v1079
      %1081 = vst [vmem:[#allocation2 + $0x8] sm:$0x7] %v1080
      %v1082 = vld [vmem:[#allocation2 + $0x10] sm:$0x7]
      %v1083 = vsel %vm1075, %v1064, %v1082
      %1084 = vst [vmem:[#allocation2 + $0x10] sm:$0x7] %v1083
      %v1085 = vld [vmem:[#allocation2 + $0x18] sm:$0x7]
      %v1086 = vsel %vm1075, %v1066, %v1085
      %1087 = vst [vmem:[#allocation2 + $0x18] sm:$0x7] %v1086
      %v1088 = vld [vmem:[#allocation2 + $0x20] sm:$0x7]
      %v1089 = vsel %vm1075, %v1068, %v1088
      %1090 = vst [vmem:[#allocation2 + $0x20] sm:$0x7] %v1089
      %v1091 = vld [vmem:[%s1038] sm:$0x7]
      %v1092 = vld [vmem:[%s1038 + $0x4] sm:$0x7]
      %v1093 = vld [vmem:[%s1038 + $0x8] sm:$0x7]
      %v1094 = vld [vmem:[%s1038 + $0xc] sm:$0x7]
      %v1095 = vld [vmem:[%s1038 + $0x10] sm:$0x7]
      %v1101 = vunpack.c.l.b16 %v1091
      %v1102 = vunpack.c.l.b16 %v1092
      %v1103 = vunpack.c.l.b16 %v1093
      %v1104 = vunpack.c.l.b16 %v1094
      %v1105 = vunpack.c.l.b16 %v1095
      %v1106 = vpack.c.b16 %v1101, %v1101
      %v1107 = vpack.c.b16 %v1102, %v1102
      %v1108 = vpack.c.b16 %v1103, %v1103
      %v1109 = vpack.c.b16 %v1104, %v1104
      %v1110 = vpack.c.b16 %v1105, %v1105
      %v1112 = vshrl.u32 %v1106, 16
      %v1114 = vshll.u32 %v1106, 16
      %v1116 = vrot.slane %v1114, 1
      %v1117 = vor.u32 %v1112, %v1116
      %v1119 = vshrl.u32 %v1107, 16
      %v1121 = vshll.u32 %v1107, 16
      %v1123 = vrot.slane %v1121, 1
      %v1124 = vor.u32 %v1119, %v1123
      %v1126 = vshrl.u32 %v1108, 16
      %v1128 = vshll.u32 %v1108, 16
      %v1130 = vrot.slane %v1128, 1
      %v1131 = vor.u32 %v1126, %v1130
      %v1133 = vshrl.u32 %v1109, 16
      %v1135 = vshll.u32 %v1109, 16
      %v1137 = vrot.slane %v1135, 1
      %v1138 = vor.u32 %v1133, %v1137
      %v1140 = vshrl.u32 %v1110, 16
      %v1142 = vshll.u32 %v1110, 16
      %v1144 = vrot.slane %v1142, 1
      %v1145 = vor.u32 %v1140, %v1144
      %1146 = vrot.lane.b32.xlu0 %v1117, 28
      %v1147 = vpop.permute.xlu0 %1146
      %1148 = vrot.lane.b32.xlu0 %v1124, 28
      %v1149 = vpop.permute.xlu0 %1148
      %1150 = vrot.lane.b32.xlu0 %v1131, 28
      %v1151 = vpop.permute.xlu0 %1150
      %1152 = vrot.lane.b32.xlu0 %v1138, 28
      %v1153 = vpop.permute.xlu0 %1152
      %1154 = vrot.lane.b32.xlu0 %v1145, 28
      %v1155 = vpop.permute.xlu0 %1154
      %vm1161 = vcmask 256224
      %vm1162 = vmand %vm1161, %vm680
      %v1163 = vld [vmem:[#allocation2] sm:$0x7]
      %v1164 = vsel %vm1162, %v1147, %v1163
      %1165 = vst [vmem:[#allocation2] sm:$0x7] %v1164
      %v1166 = vld [vmem:[#allocation2 + $0x8] sm:$0x7]
      %v1167 = vsel %vm1162, %v1149, %v1166
      %1168 = vst [vmem:[#allocation2 + $0x8] sm:$0x7] %v1167
      %v1169 = vld [vmem:[#allocation2 + $0x10] sm:$0x7]
      %v1170 = vsel %vm1162, %v1151, %v1169
      %1171 = vst [vmem:[#allocation2 + $0x10] sm:$0x7] %v1170
      %v1172 = vld [vmem:[#allocation2 + $0x18] sm:$0x7]
      %v1173 = vsel %vm1162, %v1153, %v1172
      %1174 = vst [vmem:[#allocation2 + $0x18] sm:$0x7] %v1173
      %v1175 = vld [vmem:[#allocation2 + $0x20] sm:$0x7]
      %v1176 = vsel %vm1162, %v1155, %v1175
      %1177 = vst [vmem:[#allocation2 + $0x20] sm:$0x7] %v1176
      %v1178 = vld [vmem:[%s1038] sm:$0xe]
      %v1179 = vld [vmem:[%s1038 + $0x4] sm:$0xe]
      %v1180 = vld [vmem:[%s1038 + $0x8] sm:$0xe]
      %v1181 = vld [vmem:[%s1038 + $0xc] sm:$0xe]
      %v1182 = vld [vmem:[%s1038 + $0x10] sm:$0xe]
      %v1188 = vunpack.c.l.b16 %v1178
      %v1189 = vunpack.c.l.b16 %v1179
      %v1190 = vunpack.c.l.b16 %v1180
      %v1191 = vunpack.c.l.b16 %v1181
      %v1192 = vunpack.c.l.b16 %v1182
      %v1193 = vpack.c.b16 %v1188, %v1188
      %v1194 = vpack.c.b16 %v1189, %v1189
      %v1195 = vpack.c.b16 %v1190, %v1190
      %v1196 = vpack.c.b16 %v1191, %v1191
      %v1197 = vpack.c.b16 %v1192, %v1192
      %v1198 = vrot.slane %v1193, 1
      %v1199 = vrot.slane %v1194, 1
      %v1200 = vrot.slane %v1195, 1
      %v1201 = vrot.slane %v1196, 1
      %v1202 = vrot.slane %v1197, 1
      %1203 = vrot.lane.b32.xlu0 %v1198, 32
      %v1204 = vpop.permute.xlu0 %1203
      %1205 = vrot.lane.b32.xlu0 %v1199, 32
      %v1206 = vpop.permute.xlu0 %1205
      %1207 = vrot.lane.b32.xlu0 %v1200, 32
      %v1208 = vpop.permute.xlu0 %1207
      %1209 = vrot.lane.b32.xlu0 %v1201, 32
      %v1210 = vpop.permute.xlu0 %1209
      %1211 = vrot.lane.b32.xlu0 %v1202, 32
      %v1212 = vpop.permute.xlu0 %1211
      %vm1218 = vcmask 289024
      %vm1219 = vmand %vm1218, %vm680
      %v1220 = vld [vmem:[#allocation2] sm:$0x7]
      %v1221 = vsel %vm1219, %v1204, %v1220
      %1222 = vst [vmem:[#allocation2] sm:$0x7] %v1221
      %v1223 = vld [vmem:[#allocation2 + $0x8] sm:$0x7]
      %v1224 = vsel %vm1219, %v1206, %v1223
      %1225 = vst [vmem:[#allocation2 + $0x8] sm:$0x7] %v1224
      %v1226 = vld [vmem:[#allocation2 + $0x10] sm:$0x7]
      %v1227 = vsel %vm1219, %v1208, %v1226
      %1228 = vst [vmem:[#allocation2 + $0x10] sm:$0x7] %v1227
      %v1229 = vld [vmem:[#allocation2 + $0x18] sm:$0x7]
      %v1230 = vsel %vm1219, %v1210, %v1229
      %1231 = vst [vmem:[#allocation2 + $0x18] sm:$0x7] %v1230
      %v1232 = vld [vmem:[#allocation2 + $0x20] sm:$0x7]
      %v1233 = vsel %vm1219, %v1212, %v1232
      %1234 = vst [vmem:[#allocation2 + $0x20] sm:$0x7] %v1233
      %v1235 = vld [vmem:[%s611] sm:$0xf]
      %v1236 = vld [vmem:[%s611 + $0x4] sm:$0xf]
      %v1237 = vld [vmem:[%s611 + $0x8] sm:$0xf]
      %v1238 = vld [vmem:[%s611 + $0xc] sm:$0xf]
      %v1239 = vld [vmem:[%s611 + $0x10] sm:$0x3]
      %v1240 = vld [vmem:[%s614] sm:$0x1]
      %v1241 = vld [vmem:[%s617] sm:$0x1]
      %v1242 = vld [vmem:[#allocation2] sm:$0xff]
      %v1243 = vld [vmem:[#allocation2 + $0x8] sm:$0xff]
      %v1244 = vld [vmem:[#allocation2 + $0x10] sm:$0xff]
      %v1245 = vld [vmem:[#allocation2 + $0x18] sm:$0xff]
      %v1246 = vld [vmem:[#allocation2 + $0x20] sm:$0xff]
      %v1252 = vunpack.c.l.b16 %v1235
      %v1253 = vunpack.c.l.b16 %v1236
      %v1254 = vunpack.c.l.b16 %v1237
      %v1255 = vunpack.c.l.b16 %v1238
      %v1256 = vunpack.c.l.b16 %v1239
      %v1257 = vpack.c.b16 %v1253, %v1252
      %v1258 = vpack.c.b16 %v1255, %v1254
      %v1259 = vpack.c.b16 %v1256, %v1256
      %vm1262 = vcmask 293888
      %v1264 = vsel %vm1262, %v1242, 0
      %v1267 = vsel %vm1262, %v1243, 0
      %v1270 = vsel %vm1262, %v1244, 0
      %v1273 = vsel %vm1262, %v1245, 0
      %v1276 = vsel %vm1262, %v1246, 0
      %vm1278 = vcmask 1041408
      %v1280 = vsel %vm1278, %v1259, 0
      %1282 = vmatprep.subr.bf16.mxu0 0
      %1283 = vmatpush1.bf16.msra.mxu0 %v1257
      %1284 = vmatprep.subr.bf16.mxu0 0
      %1285 = vmatpush1.bf16.msra.mxu0 %v1258
      %1286 = vmatprep.subr.bf16.mxu0 0
      %1287 = vmatpush1.bf16.msra.mxu0 %v1280
      %1288 = vmatprep.subr.bf16.mxu0 0
      %1289 = vmatpush1.bf16.msra.mxu0 0
      %1290 = vmatprep.subr.bf16.mxu0 0
      %1291 = vmatpush1.bf16.msra.mxu0 0
      %1292 = vmatprep.subr.bf16.mxu0 0
      %1293 = vmatpush1.bf16.msra.mxu0 0
      %1294 = vmatprep.subr.bf16.mxu0 0
      %1295 = vmatpush1.bf16.msra.mxu0 0
      %1296 = vmatprep.subr.bf16.mxu0 0
      %1297 = vmatpush1.bf16.msra.mxu0 0
      %1298 = vmatprep.subr.bf16.mxu0 0
      %1299 = vmatpush1.bf16.msra.mxu0 0
      %1300 = vmatprep.subr.bf16.mxu0 0
      %1301 = vmatpush1.bf16.msra.mxu0 0
      %1302 = vmatprep.subr.bf16.mxu0 0
      %1303 = vmatpush1.bf16.msra.mxu0 0
      %1304 = vmatprep.subr.bf16.mxu0 0
      %1305 = vmatpush1.bf16.msra.mxu0 0
      %1306 = vmatprep.subr.bf16.mxu0 0
      %1307 = vmatpush1.bf16.msra.mxu0 0
      %1308 = vmatprep.subr.bf16.mxu0 0
      %1309 = vmatpush1.bf16.msra.mxu0 0
      %1310 = vmatprep.subr.bf16.mxu0 0
      %1311 = vmatpush1.bf16.msra.mxu0 0
      %1312 = vmatprep.subr.bf16.mxu0 0
      %1313 = vmatpush1.bf16.msra.mxu0 0
      %1314 = vmatprep.mubr.bf16.mxu0 0
      %1315 = vmatmul.mubr.bf16.gmra.mrb[0].mxu0 %v1264
      %v1316 = vpop.f32.mrb[0].mxu0
      %v1317 = vadd.f32 0.0, %v1316
      %v1318 = vpop.f32.mrb[0].mxu0
      %v1319 = vpop.f32.mrb[0].mxu0
      %v1320 = vadd.f32 0.0, %v1319
      %v1321 = vpop.f32.mrb[0].mxu0
      %1322 = vmatprep.mubr.bf16.mxu0 0
      %1323 = vmatmul.mubr.bf16.gmra.mrb[0].mxu0 %v1267
      %v1324 = vpop.f32.mrb[0].mxu0
      %v1325 = vadd.f32 0.0, %v1324
      %v1326 = vpop.f32.mrb[0].mxu0
      %v1327 = vpop.f32.mrb[0].mxu0
      %v1328 = vadd.f32 0.0, %v1327
      %v1329 = vpop.f32.mrb[0].mxu0
      %1330 = vmatprep.mubr.bf16.mxu0 0
      %1331 = vmatmul.mubr.bf16.gmra.mrb[0].mxu0 %v1270
      %v1332 = vpop.f32.mrb[0].mxu0
      %v1333 = vadd.f32 0.0, %v1332
      %v1334 = vpop.f32.mrb[0].mxu0
      %v1335 = vpop.f32.mrb[0].mxu0
      %v1336 = vadd.f32 0.0, %v1335
      %v1337 = vpop.f32.mrb[0].mxu0
      %1338 = vmatprep.mubr.bf16.mxu0 0
      %1339 = vmatmul.mubr.bf16.gmra.mrb[0].mxu0 %v1273
      %v1340 = vpop.f32.mrb[0].mxu0
      %v1341 = vadd.f32 0.0, %v1340
      %v1342 = vpop.f32.mrb[0].mxu0
      %v1343 = vpop.f32.mrb[0].mxu0
      %v1344 = vadd.f32 0.0, %v1343
      %v1345 = vpop.f32.mrb[0].mxu0
      %1346 = vmatprep.mubr.bf16.mxu0 0
      %1347 = vmatmul.mubr.bf16.gmra.mrb[0].mxu0 %v1276
      %v1348 = vpop.f32.mrb[0].mxu0
      %v1349 = vadd.f32 0.0, %v1348
      %v1350 = vpop.f32.mrb[0].mxu0
      %v1351 = vpop.f32.mrb[0].mxu0
      %v1352 = vadd.f32 0.0, %v1351
      %v1353 = vpop.f32.mrb[0].mxu0
      %1354 = vdwg.mxu0
      %v1356 = vlaneseq
      %v1357 = vshrl.u32 %v1356, 7
      %v1358 = vsub.s32 0, %v1357
      %v1359 = vrot.slane %v1240, %v1358
      %v1361 = vmul.f32 %v1317, %v1359
      %v1362 = vmul.f32 %v1320, %v1359
      %v1363 = vmul.f32 %v1325, %v1359
      %v1364 = vmul.f32 %v1328, %v1359
      %v1365 = vmul.f32 %v1333, %v1359
      %v1366 = vmul.f32 %v1336, %v1359
      %v1367 = vmul.f32 %v1341, %v1359
      %v1368 = vmul.f32 %v1344, %v1359
      %v1369 = vmul.f32 %v1349, %v1359
      %v1370 = vmul.f32 %v1352, %v1359
      %v1372 = vlaneseq
      %v1373 = vshrl.u32 %v1372, 7
      %v1374 = vsub.s32 0, %v1373
      %v1375 = vrot.slane %v1241, %v1374
      %v1377 = vadd.f32 %v1361, %v1375
      %v1378 = vadd.f32 %v1362, %v1375
      %v1379 = vadd.f32 %v1363, %v1375
      %v1380 = vadd.f32 %v1364, %v1375
      %v1381 = vadd.f32 %v1365, %v1375
      %v1382 = vadd.f32 %v1366, %v1375
      %v1383 = vadd.f32 %v1367, %v1375
      %v1384 = vadd.f32 %v1368, %v1375
      %v1385 = vadd.f32 %v1369, %v1375
      %v1386 = vadd.f32 %v1370, %v1375
      %v1387 = vmax.f32 %v1377, 0.0
      %v1388 = vmax.f32 %v1378, 0.0
      %v1389 = vmax.f32 %v1379, 0.0
      %v1390 = vmax.f32 %v1380, 0.0
      %v1391 = vmax.f32 %v1381, 0.0
      %v1392 = vmax.f32 %v1382, 0.0
      %v1393 = vmax.f32 %v1383, 0.0
      %v1394 = vmax.f32 %v1384, 0.0
      %v1395 = vmax.f32 %v1385, 0.0
      %v1396 = vmax.f32 %v1386, 0.0
      %vm1397 = vcmask 64512
      %1398 = vst.msk [vmem:[#allocation4] sm:$0xff] %vm1397, %v1387
      %1399 = vst.msk [vmem:[#allocation4 + $0x8] sm:$0xff] %vm1397, %v1388
      %1400 = vst.msk [vmem:[#allocation4 + $0x10] sm:$0xff] %vm1397, %v1389
      %1401 = vst.msk [vmem:[#allocation4 + $0x18] sm:$0xff] %vm1397, %v1390
      %1402 = vst.msk [vmem:[#allocation4 + $0x20] sm:$0xff] %vm1397, %v1391
      %1403 = vst.msk [vmem:[#allocation4 + $0x28] sm:$0xff] %vm1397, %v1392
      %1404 = vst.msk [vmem:[#allocation4 + $0x30] sm:$0xff] %vm1397, %v1393
      %1405 = vst.msk [vmem:[#allocation4 + $0x38] sm:$0xff] %vm1397, %v1394
      %1406 = vst.msk [vmem:[#allocation4 + $0x40] sm:$0xff] %vm1397, %v1395
      %1407 = vst.msk [vmem:[#allocation4 + $0x48] sm:$0xff] %vm1397, %v1396
      %vm1408 = vcmask 293894
      %vm1409 = vsmask.f32 7962
      %vm1410 = vmand %vm1408, %vm1409
      %v1411 = vld [vmem:[#allocation3] sm:$0xc0]
      %v1412 = vsel %vm1410, 0, %v1411
      %1413 = vst [vmem:[#allocation3] sm:$0xc0] %v1412
      %v1414 = vld [vmem:[#allocation3 + $0x8] sm:$0xc0]
      %v1415 = vsel %vm1410, 0, %v1414
      %1416 = vst [vmem:[#allocation3 + $0x8] sm:$0xc0] %v1415
      %v1417 = vld [vmem:[#allocation3 + $0x10] sm:$0xc0]
      %v1418 = vsel %vm1410, 0, %v1417
      %1419 = vst [vmem:[#allocation3 + $0x10] sm:$0xc0] %v1418
      %v1420 = vld [vmem:[#allocation3 + $0x18] sm:$0xc0]
      %v1421 = vsel %vm1410, 0, %v1420
      %1422 = vst [vmem:[#allocation3 + $0x18] sm:$0xc0] %v1421
      %v1423 = vld [vmem:[#allocation3 + $0x20] sm:$0xc0]
      %v1424 = vsel %vm1410, 0, %v1423
      %1425 = vst [vmem:[#allocation3 + $0x20] sm:$0xc0] %v1424
      %v1426 = vld [vmem:[#allocation3 + $0x28] sm:$0xc0]
      %v1427 = vsel %vm1410, 0, %v1426
      %1428 = vst [vmem:[#allocation3 + $0x28] sm:$0xc0] %v1427
      %v1429 = vld [vmem:[#allocation3 + $0x30] sm:$0xc0]
      %v1430 = vsel %vm1410, 0, %v1429
      %1431 = vst [vmem:[#allocation3 + $0x30] sm:$0xc0] %v1430
      %v1432 = vld [vmem:[#allocation3 + $0x38] sm:$0xc0]
      %v1433 = vsel %vm1410, 0, %v1432
      %1434 = vst [vmem:[#allocation3 + $0x38] sm:$0xc0] %v1433
      %v1435 = vld [vmem:[#allocation3 + $0x40] sm:$0xc0]
      %v1436 = vsel %vm1410, 0, %v1435
      %1437 = vst [vmem:[#allocation3 + $0x40] sm:$0xc0] %v1436
      %v1438 = vld [vmem:[#allocation3 + $0x48] sm:$0xc0]
      %v1439 = vsel %vm1410, 0, %v1438
      %1440 = vst [vmem:[#allocation3 + $0x48] sm:$0xc0] %v1439
      %v1441 = vld [vmem:[#allocation3 + $0x50] sm:$0xc0]
      %v1442 = vsel %vm1410, 0, %v1441
      %1443 = vst [vmem:[#allocation3 + $0x50] sm:$0xc0] %v1442
      %v1444 = vld [vmem:[#allocation3 + $0x58] sm:$0xc0]
      %v1445 = vsel %vm1410, 0, %v1444
      %1446 = vst [vmem:[#allocation3 + $0x58] sm:$0xc0] %v1445
      %v1447 = vld [vmem:[#allocation3 + $0x60] sm:$0xc0]
      %v1448 = vsel %vm1410, 0, %v1447
      %1449 = vst [vmem:[#allocation3 + $0x60] sm:$0xc0] %v1448
      %v1450 = vld [vmem:[%s606] sm:$0xf]
      %v1451 = vld [vmem:[%s606 + $0x4] sm:$0x7]
      %v1452 = vld [vmem:[%s606 + $0x8] sm:$0xf]
      %v1453 = vld [vmem:[%s606 + $0xc] sm:$0x7]
      %v1454 = vld [vmem:[%s606 + $0x10] sm:$0xf]
      %v1455 = vld [vmem:[%s606 + $0x14] sm:$0x7]
      %v1456 = vld [vmem:[%s606 + $0x18] sm:$0xf]
      %v1457 = vld [vmem:[%s606 + $0x1c] sm:$0x7]
      %v1458 = vld [vmem:[%s606 + $0x20] sm:$0xf]
      %v1459 = vld [vmem:[%s606 + $0x24] sm:$0x7]
      %v1460 = vld [vmem:[%s606 + $0x28] sm:$0xf]
      %v1461 = vld [vmem:[%s606 + $0x2c] sm:$0x7]
      %v1462 = vld [vmem:[%s606 + $0x30] sm:$0xf]
      %v1463 = vld [vmem:[%s606 + $0x34] sm:$0x7]
      %v1464 = vld [vmem:[%s606 + $0x38] sm:$0xf]
      %v1465 = vld [vmem:[%s606 + $0x3c] sm:$0x7]
      %v1466 = vld [vmem:[%s606 + $0x40] sm:$0xf]
      %v1467 = vld [vmem:[%s606 + $0x44] sm:$0x7]
      %v1468 = vld [vmem:[%s606 + $0x48] sm:$0xf]
      %v1469 = vld [vmem:[%s606 + $0x4c] sm:$0x7]
      %v1470 = vld [vmem:[%s606 + $0x50] sm:$0xf]
      %v1471 = vld [vmem:[%s606 + $0x54] sm:$0x7]
      %v1472 = vld [vmem:[%s606 + $0x58] sm:$0xf]
      %v1473 = vld [vmem:[%s606 + $0x5c] sm:$0x7]
      %v1474 = vld [vmem:[%s606 + $0x60] sm:$0xf]
      %v1475 = vld [vmem:[%s606 + $0x64] sm:$0x7]
      %v1502 = vunpack.c.l.b16 %v1450
      %v1503 = vunpack.c.l.b16 %v1451
      %v1504 = vunpack.c.l.b16 %v1452
      %v1505 = vunpack.c.l.b16 %v1453
      %v1506 = vunpack.c.l.b16 %v1454
      %v1507 = vunpack.c.l.b16 %v1455
      %v1508 = vunpack.c.l.b16 %v1456
      %v1509 = vunpack.c.l.b16 %v1457
      %v1510 = vunpack.c.l.b16 %v1458
      %v1511 = vunpack.c.l.b16 %v1459
      %v1512 = vunpack.c.l.b16 %v1460
      %v1513 = vunpack.c.l.b16 %v1461
      %v1514 = vunpack.c.l.b16 %v1462
      %v1515 = vunpack.c.l.b16 %v1463
      %v1516 = vunpack.c.l.b16 %v1464
      %v1517 = vunpack.c.l.b16 %v1465
      %v1518 = vunpack.c.l.b16 %v1466
      %v1519 = vunpack.c.l.b16 %v1467
      %v1520 = vunpack.c.l.b16 %v1468
      %v1521 = vunpack.c.l.b16 %v1469
      %v1522 = vunpack.c.l.b16 %v1470
      %v1523 = vunpack.c.l.b16 %v1471
      %v1524 = vunpack.c.l.b16 %v1472
      %v1525 = vunpack.c.l.b16 %v1473
      %v1526 = vunpack.c.l.b16 %v1474
      %v1527 = vunpack.c.l.b16 %v1475
      %v1528 = vpack.c.b16 %v1503, %v1502
      %v1529 = vpack.c.b16 %v1505, %v1504
      %v1530 = vpack.c.b16 %v1507, %v1506
      %v1531 = vpack.c.b16 %v1509, %v1508
      %v1532 = vpack.c.b16 %v1511, %v1510
      %v1533 = vpack.c.b16 %v1513, %v1512
      %v1534 = vpack.c.b16 %v1515, %v1514
      %v1535 = vpack.c.b16 %v1517, %v1516
      %v1536 = vpack.c.b16 %v1519, %v1518
      %v1537 = vpack.c.b16 %v1521, %v1520
      %v1538 = vpack.c.b16 %v1523, %v1522
      %v1539 = vpack.c.b16 %v1525, %v1524
      %v1540 = vpack.c.b16 %v1527, %v1526
      %vm1554 = vcmask 30720
      %vm1555 = vsmask.f32 6400
      %vm1556 = vmand %vm1554, %vm1555
      %v1557 = vld [vmem:[#allocation3] sm:$0x7f]
      %v1558 = vsel %vm1556, %v1528, %v1557
      %1559 = vst [vmem:[#allocation3] sm:$0x7f] %v1558
      %v1560 = vld [vmem:[#allocation3 + $0x8] sm:$0x7f]
      %v1561 = vsel %vm1556, %v1529, %v1560
      %1562 = vst [vmem:[#allocation3 + $0x8] sm:$0x7f] %v1561
      %v1563 = vld [vmem:[#allocation3 + $0x10] sm:$0x7f]
      %v1564 = vsel %vm1556, %v1530, %v1563
      %1565 = vst [vmem:[#allocation3 + $0x10] sm:$0x7f] %v1564
      %v1566 = vld [vmem:[#allocation3 + $0x18] sm:$0x7f]
      %v1567 = vsel %vm1556, %v1531, %v1566
      %1568 = vst [vmem:[#allocation3 + $0x18] sm:$0x7f] %v1567
      %v1569 = vld [vmem:[#allocation3 + $0x20] sm:$0x7f]
      %v1570 = vsel %vm1556, %v1532, %v1569
      %1571 = vst [vmem:[#allocation3 + $0x20] sm:$0x7f] %v1570
      %v1572 = vld [vmem:[#allocation3 + $0x28] sm:$0x7f]
      %v1573 = vsel %vm1556, %v1533, %v1572
      %1574 = vst [vmem:[#allocation3 + $0x28] sm:$0x7f] %v1573
      %v1575 = vld [vmem:[#allocation3 + $0x30] sm:$0x7f]
      %v1576 = vsel %vm1556, %v1534, %v1575
      %1577 = vst [vmem:[#allocation3 + $0x30] sm:$0x7f] %v1576
      %v1578 = vld [vmem:[#allocation3 + $0x38] sm:$0x7f]
      %v1579 = vsel %vm1556, %v1535, %v1578
      %1580 = vst [vmem:[#allocation3 + $0x38] sm:$0x7f] %v1579
      %v1581 = vld [vmem:[#allocation3 + $0x40] sm:$0x7f]
      %v1582 = vsel %vm1556, %v1536, %v1581
      %1583 = vst [vmem:[#allocation3 + $0x40] sm:$0x7f] %v1582
      %v1584 = vld [vmem:[#allocation3 + $0x48] sm:$0x7f]
      %v1585 = vsel %vm1556, %v1537, %v1584
      %1586 = vst [vmem:[#allocation3 + $0x48] sm:$0x7f] %v1585
      %v1587 = vld [vmem:[#allocation3 + $0x50] sm:$0x7f]
      %v1588 = vsel %vm1556, %v1538, %v1587
      %1589 = vst [vmem:[#allocation3 + $0x50] sm:$0x7f] %v1588
      %v1590 = vld [vmem:[#allocation3 + $0x58] sm:$0x7f]
      %v1591 = vsel %vm1556, %v1539, %v1590
      %1592 = vst [vmem:[#allocation3 + $0x58] sm:$0x7f] %v1591
      %v1593 = vld [vmem:[#allocation3 + $0x60] sm:$0x7f]
      %v1594 = vsel %vm1556, %v1540, %v1593
      %1595 = vst [vmem:[#allocation3 + $0x60] sm:$0x7f] %v1594
      %v1596 = vld [vmem:[%s606] sm:$0xf]
      %v1597 = vld [vmem:[%s606 + $0x4] sm:$0x7]
      %v1598 = vld [vmem:[%s606 + $0x8] sm:$0xf]
      %v1599 = vld [vmem:[%s606 + $0xc] sm:$0x7]
      %v1600 = vld [vmem:[%s606 + $0x10] sm:$0xf]
      %v1601 = vld [vmem:[%s606 + $0x14] sm:$0x7]
      %v1602 = vld [vmem:[%s606 + $0x18] sm:$0xf]
      %v1603 = vld [vmem:[%s606 + $0x1c] sm:$0x7]
      %v1604 = vld [vmem:[%s606 + $0x20] sm:$0xf]
      %v1605 = vld [vmem:[%s606 + $0x24] sm:$0x7]
      %v1606 = vld [vmem:[%s606 + $0x28] sm:$0xf]
      %v1607 = vld [vmem:[%s606 + $0x2c] sm:$0x7]
      %v1608 = vld [vmem:[%s606 + $0x30] sm:$0xf]
      %v1609 = vld [vmem:[%s606 + $0x34] sm:$0x7]
      %v1610 = vld [vmem:[%s606 + $0x38] sm:$0xf]
      %v1611 = vld [vmem:[%s606 + $0x3c] sm:$0x7]
      %v1612 = vld [vmem:[%s606 + $0x40] sm:$0xf]
      %v1613 = vld [vmem:[%s606 + $0x44] sm:$0x7]
      %v1614 = vld [vmem:[%s606 + $0x48] sm:$0xf]
      %v1615 = vld [vmem:[%s606 + $0x4c] sm:$0x7]
      %v1616 = vld [vmem:[%s606 + $0x50] sm:$0xf]
      %v1617 = vld [vmem:[%s606 + $0x54] sm:$0x7]
      %v1618 = vld [vmem:[%s606 + $0x58] sm:$0xf]
      %v1619 = vld [vmem:[%s606 + $0x5c] sm:$0x7]
      %v1620 = vld [vmem:[%s606 + $0x60] sm:$0xf]
      %v1621 = vld [vmem:[%s606 + $0x64] sm:$0x7]
      %v1648 = vunpack.c.l.b16 %v1596
      %v1649 = vunpack.c.l.b16 %v1597
      %v1650 = vunpack.c.l.b16 %v1598
      %v1651 = vunpack.c.l.b16 %v1599
      %v1652 = vunpack.c.l.b16 %v1600
      %v1653 = vunpack.c.l.b16 %v1601
      %v1654 = vunpack.c.l.b16 %v1602
      %v1655 = vunpack.c.l.b16 %v1603
      %v1656 = vunpack.c.l.b16 %v1604
      %v1657 = vunpack.c.l.b16 %v1605
      %v1658 = vunpack.c.l.b16 %v1606
      %v1659 = vunpack.c.l.b16 %v1607
      %v1660 = vunpack.c.l.b16 %v1608
      %v1661 = vunpack.c.l.b16 %v1609
      %v1662 = vunpack.c.l.b16 %v1610
      %v1663 = vunpack.c.l.b16 %v1611
      %v1664 = vunpack.c.l.b16 %v1612
      %v1665 = vunpack.c.l.b16 %v1613
      %v1666 = vunpack.c.l.b16 %v1614
      %v1667 = vunpack.c.l.b16 %v1615
      %v1668 = vunpack.c.l.b16 %v1616
      %v1669 = vunpack.c.l.b16 %v1617
      %v1670 = vunpack.c.l.b16 %v1618
      %v1671 = vunpack.c.l.b16 %v1619
      %v1672 = vunpack.c.l.b16 %v1620
      %v1673 = vunpack.c.l.b16 %v1621
      %v1674 = vpack.c.b16 %v1649, %v1648
      %v1675 = vpack.c.b16 %v1651, %v1650
      %v1676 = vpack.c.b16 %v1653, %v1652
      %v1677 = vpack.c.b16 %v1655, %v1654
      %v1678 = vpack.c.b16 %v1657, %v1656
      %v1679 = vpack.c.b16 %v1659, %v1658
      %v1680 = vpack.c.b16 %v1661, %v1660
      %v1681 = vpack.c.b16 %v1663, %v1662
      %v1682 = vpack.c.b16 %v1665, %v1664
      %v1683 = vpack.c.b16 %v1667, %v1666
      %v1684 = vpack.c.b16 %v1669, %v1668
      %v1685 = vpack.c.b16 %v1671, %v1670
      %v1686 = vpack.c.b16 %v1673, %v1672
      %v1688 = vshrl.u32 %v1674, 16
      %v1690 = vshll.u32 %v1674, 16
      %v1692 = vrot.slane %v1690, 1
      %v1693 = vor.u32 %v1688, %v1692
      %v1695 = vshrl.u32 %v1675, 16
      %v1697 = vshll.u32 %v1675, 16
      %v1699 = vrot.slane %v1697, 1
      %v1700 = vor.u32 %v1695, %v1699
      %v1702 = vshrl.u32 %v1676, 16
      %v1704 = vshll.u32 %v1676, 16
      %v1706 = vrot.slane %v1704, 1
      %v1707 = vor.u32 %v1702, %v1706
      %v1709 = vshrl.u32 %v1677, 16
      %v1711 = vshll.u32 %v1677, 16
      %v1713 = vrot.slane %v1711, 1
      %v1714 = vor.u32 %v1709, %v1713
      %v1716 = vshrl.u32 %v1678, 16
      %v1718 = vshll.u32 %v1678, 16
      %v1720 = vrot.slane %v1718, 1
      %v1721 = vor.u32 %v1716, %v1720
      %v1723 = vshrl.u32 %v1679, 16
      %v1725 = vshll.u32 %v1679, 16
      %v1727 = vrot.slane %v1725, 1
      %v1728 = vor.u32 %v1723, %v1727
      %v1730 = vshrl.u32 %v1680, 16
      %v1732 = vshll.u32 %v1680, 16
      %v1734 = vrot.slane %v1732, 1
      %v1735 = vor.u32 %v1730, %v1734
      %v1737 = vshrl.u32 %v1681, 16
      %v1739 = vshll.u32 %v1681, 16
      %v1741 = vrot.slane %v1739, 1
      %v1742 = vor.u32 %v1737, %v1741
      %v1744 = vshrl.u32 %v1682, 16
      %v1746 = vshll.u32 %v1682, 16
      %v1748 = vrot.slane %v1746, 1
      %v1749 = vor.u32 %v1744, %v1748
      %v1751 = vshrl.u32 %v1683, 16
      %v1753 = vshll.u32 %v1683, 16
      %v1755 = vrot.slane %v1753, 1
      %v1756 = vor.u32 %v1751, %v1755
      %v1758 = vshrl.u32 %v1684, 16
      %v1760 = vshll.u32 %v1684, 16
      %v1762 = vrot.slane %v1760, 1
      %v1763 = vor.u32 %v1758, %v1762
      %v1765 = vshrl.u32 %v1685, 16
      %v1767 = vshll.u32 %v1685, 16
      %v1769 = vrot.slane %v1767, 1
      %v1770 = vor.u32 %v1765, %v1769
      %v1772 = vshrl.u32 %v1686, 16
      %v1774 = vshll.u32 %v1686, 16
      %v1776 = vrot.slane %v1774, 1
      %v1777 = vor.u32 %v1772, %v1776
      %1778 = vrot.lane.b32.xlu0 %v1693, 4
      %v1779 = vpop.permute.xlu0 %1778
      %1780 = vrot.lane.b32.xlu0 %v1700, 4
      %v1781 = vpop.permute.xlu0 %1780
      %1782 = vrot.lane.b32.xlu0 %v1707, 4
      %v1783 = vpop.permute.xlu0 %1782
      %1784 = vrot.lane.b32.xlu0 %v1714, 4
      %v1785 = vpop.permute.xlu0 %1784
      %1786 = vrot.lane.b32.xlu0 %v1721, 4
      %v1787 = vpop.permute.xlu0 %1786
      %1788 = vrot.lane.b32.xlu0 %v1728, 4
      %v1789 = vpop.permute.xlu0 %1788
      %1790 = vrot.lane.b32.xlu0 %v1735, 4
      %v1791 = vpop.permute.xlu0 %1790
      %1792 = vrot.lane.b32.xlu0 %v1742, 4
      %v1793 = vpop.permute.xlu0 %1792
      %1794 = vrot.lane.b32.xlu0 %v1749, 4
      %v1795 = vpop.permute.xlu0 %1794
      %1796 = vrot.lane.b32.xlu0 %v1756, 4
      %v1797 = vpop.permute.xlu0 %1796
      %1798 = vrot.lane.b32.xlu0 %v1763, 4
      %v1799 = vpop.permute.xlu0 %1798
      %1800 = vrot.lane.b32.xlu0 %v1770, 4
      %v1801 = vpop.permute.xlu0 %1800
      %1802 = vrot.lane.b32.xlu0 %v1777, 4
      %v1803 = vpop.permute.xlu0 %1802
      %vm1817 = vcmask 63520
      %vm1818 = vmand %vm1817, %vm1555
      %v1819 = vld [vmem:[#allocation3] sm:$0x7f]
      %v1820 = vsel %vm1818, %v1779, %v1819
      %1821 = vst [vmem:[#allocation3] sm:$0x7f] %v1820
      %v1822 = vld [vmem:[#allocation3 + $0x8] sm:$0x7f]
      %v1823 = vsel %vm1818, %v1781, %v1822
      %1824 = vst [vmem:[#allocation3 + $0x8] sm:$0x7f] %v1823
      %v1825 = vld [vmem:[#allocation3 + $0x10] sm:$0x7f]
      %v1826 = vsel %vm1818, %v1783, %v1825
      %1827 = vst [vmem:[#allocation3 + $0x10] sm:$0x7f] %v1826
      %v1828 = vld [vmem:[#allocation3 + $0x18] sm:$0x7f]
      %v1829 = vsel %vm1818, %v1785, %v1828
      %1830 = vst [vmem:[#allocation3 + $0x18] sm:$0x7f] %v1829
      %v1831 = vld [vmem:[#allocation3 + $0x20] sm:$0x7f]
      %v1832 = vsel %vm1818, %v1787, %v1831
      %1833 = vst [vmem:[#allocation3 + $0x20] sm:$0x7f] %v1832
      %v1834 = vld [vmem:[#allocation3 + $0x28] sm:$0x7f]
      %v1835 = vsel %vm1818, %v1789, %v1834
      %1836 = vst [vmem:[#allocation3 + $0x28] sm:$0x7f] %v1835
      %v1837 = vld [vmem:[#allocation3 + $0x30] sm:$0x7f]
      %v1838 = vsel %vm1818, %v1791, %v1837
      %1839 = vst [vmem:[#allocation3 + $0x30] sm:$0x7f] %v1838
      %v1840 = vld [vmem:[#allocation3 + $0x38] sm:$0x7f]
      %v1841 = vsel %vm1818, %v1793, %v1840
      %1842 = vst [vmem:[#allocation3 + $0x38] sm:$0x7f] %v1841
      %v1843 = vld [vmem:[#allocation3 + $0x40] sm:$0x7f]
      %v1844 = vsel %vm1818, %v1795, %v1843
      %1845 = vst [vmem:[#allocation3 + $0x40] sm:$0x7f] %v1844
      %v1846 = vld [vmem:[#allocation3 + $0x48] sm:$0x7f]
      %v1847 = vsel %vm1818, %v1797, %v1846
      %1848 = vst [vmem:[#allocation3 + $0x48] sm:$0x7f] %v1847
      %v1849 = vld [vmem:[#allocation3 + $0x50] sm:$0x7f]
      %v1850 = vsel %vm1818, %v1799, %v1849
      %1851 = vst [vmem:[#allocation3 + $0x50] sm:$0x7f] %v1850
      %v1852 = vld [vmem:[#allocation3 + $0x58] sm:$0x7f]
      %v1853 = vsel %vm1818, %v1801, %v1852
      %1854 = vst [vmem:[#allocation3 + $0x58] sm:$0x7f] %v1853
      %v1855 = vld [vmem:[#allocation3 + $0x60] sm:$0x7f]
      %v1856 = vsel %vm1818, %v1803, %v1855
      %1857 = vst [vmem:[#allocation3 + $0x60] sm:$0x7f] %v1856
      %v1858 = vld [vmem:[%s606] sm:$0xe]
      %v1859 = vld [vmem:[%s606 + $0x4] sm:$0xf]
      %v1860 = vld [vmem:[%s606 + $0x8] sm:$0xe]
      %v1861 = vld [vmem:[%s606 + $0xc] sm:$0xf]
      %v1862 = vld [vmem:[%s606 + $0x10] sm:$0xe]
      %v1863 = vld [vmem:[%s606 + $0x14] sm:$0xf]
      %v1864 = vld [vmem:[%s606 + $0x18] sm:$0xe]
      %v1865 = vld [vmem:[%s606 + $0x1c] sm:$0xf]
      %v1866 = vld [vmem:[%s606 + $0x20] sm:$0xe]
      %v1867 = vld [vmem:[%s606 + $0x24] sm:$0xf]
      %v1868 = vld [vmem:[%s606 + $0x28] sm:$0xe]
      %v1869 = vld [vmem:[%s606 + $0x2c] sm:$0xf]
      %v1870 = vld [vmem:[%s606 + $0x30] sm:$0xe]
      %v1871 = vld [vmem:[%s606 + $0x34] sm:$0xf]
      %v1872 = vld [vmem:[%s606 + $0x38] sm:$0xe]
      %v1873 = vld [vmem:[%s606 + $0x3c] sm:$0xf]
      %v1874 = vld [vmem:[%s606 + $0x40] sm:$0xe]
      %v1875 = vld [vmem:[%s606 + $0x44] sm:$0xf]
      %v1876 = vld [vmem:[%s606 + $0x48] sm:$0xe]
      %v1877 = vld [vmem:[%s606 + $0x4c] sm:$0xf]
      %v1878 = vld [vmem:[%s606 + $0x50] sm:$0xe]
      %v1879 = vld [vmem:[%s606 + $0x54] sm:$0xf]
      %v1880 = vld [vmem:[%s606 + $0x58] sm:$0xe]
      %v1881 = vld [vmem:[%s606 + $0x5c] sm:$0xf]
      %v1882 = vld [vmem:[%s606 + $0x60] sm:$0xe]
      %v1883 = vld [vmem:[%s606 + $0x64] sm:$0xf]
      %v1910 = vunpack.c.l.b16 %v1858
      %v1911 = vunpack.c.l.b16 %v1859
      %v1912 = vunpack.c.l.b16 %v1860
      %v1913 = vunpack.c.l.b16 %v1861
      %v1914 = vunpack.c.l.b16 %v1862
      %v1915 = vunpack.c.l.b16 %v1863
      %v1916 = vunpack.c.l.b16 %v1864
      %v1917 = vunpack.c.l.b16 %v1865
      %v1918 = vunpack.c.l.b16 %v1866
      %v1919 = vunpack.c.l.b16 %v1867
      %v1920 = vunpack.c.l.b16 %v1868
      %v1921 = vunpack.c.l.b16 %v1869
      %v1922 = vunpack.c.l.b16 %v1870
      %v1923 = vunpack.c.l.b16 %v1871
      %v1924 = vunpack.c.l.b16 %v1872
      %v1925 = vunpack.c.l.b16 %v1873
      %v1926 = vunpack.c.l.b16 %v1874
      %v1927 = vunpack.c.l.b16 %v1875
      %v1928 = vunpack.c.l.b16 %v1876
      %v1929 = vunpack.c.l.b16 %v1877
      %v1930 = vunpack.c.l.b16 %v1878
      %v1931 = vunpack.c.l.b16 %v1879
      %v1932 = vunpack.c.l.b16 %v1880
      %v1933 = vunpack.c.l.b16 %v1881
      %v1934 = vunpack.c.l.b16 %v1882
      %v1935 = vunpack.c.l.b16 %v1883
      %v1936 = vpack.c.b16 %v1911, %v1910
      %v1937 = vpack.c.b16 %v1913, %v1912
      %v1938 = vpack.c.b16 %v1915, %v1914
      %v1939 = vpack.c.b16 %v1917, %v1916
      %v1940 = vpack.c.b16 %v1919, %v1918
      %v1941 = vpack.c.b16 %v1921, %v1920
      %v1942 = vpack.c.b16 %v1923, %v1922
      %v1943 = vpack.c.b16 %v1925, %v1924
      %v1944 = vpack.c.b16 %v1927, %v1926
      %v1945 = vpack.c.b16 %v1929, %v1928
      %v1946 = vpack.c.b16 %v1931, %v1930
      %v1947 = vpack.c.b16 %v1933, %v1932
      %v1948 = vpack.c.b16 %v1935, %v1934
      %v1949 = vrot.slane %v1936, 1
      %v1950 = vrot.slane %v1937, 1
      %v1951 = vrot.slane %v1938, 1
      %v1952 = vrot.slane %v1939, 1
      %v1953 = vrot.slane %v1940, 1
      %v1954 = vrot.slane %v1941, 1
      %v1955 = vrot.slane %v1942, 1
      %v1956 = vrot.slane %v1943, 1
      %v1957 = vrot.slane %v1944, 1
      %v1958 = vrot.slane %v1945, 1
      %v1959 = vrot.slane %v1946, 1
      %v1960 = vrot.slane %v1947, 1
      %v1961 = vrot.slane %v1948, 1
      %1962 = vrot.lane.b32.xlu0 %v1949, 8
      %v1963 = vpop.permute.xlu0 %1962
      %1964 = vrot.lane.b32.xlu0 %v1950, 8
      %v1965 = vpop.permute.xlu0 %1964
      %1966 = vrot.lane.b32.xlu0 %v1951, 8
      %v1967 = vpop.permute.xlu0 %1966
      %1968 = vrot.lane.b32.xlu0 %v1952, 8
      %v1969 = vpop.permute.xlu0 %1968
      %1970 = vrot.lane.b32.xlu0 %v1953, 8
      %v1971 = vpop.permute.xlu0 %1970
      %1972 = vrot.lane.b32.xlu0 %v1954, 8
      %v1973 = vpop.permute.xlu0 %1972
      %1974 = vrot.lane.b32.xlu0 %v1955, 8
      %v1975 = vpop.permute.xlu0 %1974
      %1976 = vrot.lane.b32.xlu0 %v1956, 8
      %v1977 = vpop.permute.xlu0 %1976
      %1978 = vrot.lane.b32.xlu0 %v1957, 8
      %v1979 = vpop.permute.xlu0 %1978
      %1980 = vrot.lane.b32.xlu0 %v1958, 8
      %v1981 = vpop.permute.xlu0 %1980
      %1982 = vrot.lane.b32.xlu0 %v1959, 8
      %v1983 = vpop.permute.xlu0 %1982
      %1984 = vrot.lane.b32.xlu0 %v1960, 8
      %v1985 = vpop.permute.xlu0 %1984
      %1986 = vrot.lane.b32.xlu0 %v1961, 8
      %v1987 = vpop.permute.xlu0 %1986
      %vm2001 = vcmask 96320
      %vm2002 = vmand %vm2001, %vm1555
      %v2003 = vld [vmem:[#allocation3] sm:$0x7f]
      %v2004 = vsel %vm2002, %v1963, %v2003
      %2005 = vst [vmem:[#allocation3] sm:$0x7f] %v2004
      %v2006 = vld [vmem:[#allocation3 + $0x8] sm:$0x7f]
      %v2007 = vsel %vm2002, %v1965, %v2006
      %2008 = vst [vmem:[#allocation3 + $0x8] sm:$0x7f] %v2007
      %v2009 = vld [vmem:[#allocation3 + $0x10] sm:$0x7f]
      %v2010 = vsel %vm2002, %v1967, %v2009
      %2011 = vst [vmem:[#allocation3 + $0x10] sm:$0x7f] %v2010
      %v2012 = vld [vmem:[#allocation3 + $0x18] sm:$0x7f]
      %v2013 = vsel %vm2002, %v1969, %v2012
      %2014 = vst [vmem:[#allocation3 + $0x18] sm:$0x7f] %v2013
      %v2015 = vld [vmem:[#allocation3 + $0x20] sm:$0x7f]
      %v2016 = vsel %vm2002, %v1971, %v2015
      %2017 = vst [vmem:[#allocation3 + $0x20] sm:$0x7f] %v2016
      %v2018 = vld [vmem:[#allocation3 + $0x28] sm:$0x7f]
      %v2019 = vsel %vm2002, %v1973, %v2018
      %2020 = vst [vmem:[#allocation3 + $0x28] sm:$0x7f] %v2019
      %v2021 = vld [vmem:[#allocation3 + $0x30] sm:$0x7f]
      %v2022 = vsel %vm2002, %v1975, %v2021
      %2023 = vst [vmem:[#allocation3 + $0x30] sm:$0x7f] %v2022
      %v2024 = vld [vmem:[#allocation3 + $0x38] sm:$0x7f]
      %v2025 = vsel %vm2002, %v1977, %v2024
      %2026 = vst [vmem:[#allocation3 + $0x38] sm:$0x7f] %v2025
      %v2027 = vld [vmem:[#allocation3 + $0x40] sm:$0x7f]
      %v2028 = vsel %vm2002, %v1979, %v2027
      %2029 = vst [vmem:[#allocation3 + $0x40] sm:$0x7f] %v2028
      %v2030 = vld [vmem:[#allocation3 + $0x48] sm:$0x7f]
      %v2031 = vsel %vm2002, %v1981, %v2030
      %2032 = vst [vmem:[#allocation3 + $0x48] sm:$0x7f] %v2031
      %v2033 = vld [vmem:[#allocation3 + $0x50] sm:$0x7f]
      %v2034 = vsel %vm2002, %v1983, %v2033
      %2035 = vst [vmem:[#allocation3 + $0x50] sm:$0x7f] %v2034
      %v2036 = vld [vmem:[#allocation3 + $0x58] sm:$0x7f]
      %v2037 = vsel %vm2002, %v1985, %v2036
      %2038 = vst [vmem:[#allocation3 + $0x58] sm:$0x7f] %v2037
      %v2039 = vld [vmem:[#allocation3 + $0x60] sm:$0x7f]
      %v2040 = vsel %vm2002, %v1987, %v2039
      %2041 = vst [vmem:[#allocation3 + $0x60] sm:$0x7f] %v2040
      %s2042 = scalar_lea.vmem %s606, 8
      %v2043 = vld [vmem:[%s2042] sm:$0xf]
      %v2044 = vld [vmem:[%s2042 + $0x4] sm:$0x7]
      %v2045 = vld [vmem:[%s2042 + $0x8] sm:$0xf]
      %v2046 = vld [vmem:[%s2042 + $0xc] sm:$0x7]
      %v2047 = vld [vmem:[%s2042 + $0x10] sm:$0xf]
      %v2048 = vld [vmem:[%s2042 + $0x14] sm:$0x7]
      %v2049 = vld [vmem:[%s2042 + $0x18] sm:$0xf]
      %v2050 = vld [vmem:[%s2042 + $0x1c] sm:$0x7]
      %v2051 = vld [vmem:[%s2042 + $0x20] sm:$0xf]
      %v2052 = vld [vmem:[%s2042 + $0x24] sm:$0x7]
      %v2053 = vld [vmem:[%s2042 + $0x28] sm:$0xf]
      %v2054 = vld [vmem:[%s2042 + $0x2c] sm:$0x7]
      %v2055 = vld [vmem:[%s2042 + $0x30] sm:$0xf]
      %v2056 = vld [vmem:[%s2042 + $0x34] sm:$0x7]
      %v2057 = vld [vmem:[%s2042 + $0x38] sm:$0xf]
      %v2058 = vld [vmem:[%s2042 + $0x3c] sm:$0x7]
      %v2059 = vld [vmem:[%s2042 + $0x40] sm:$0xf]
      %v2060 = vld [vmem:[%s2042 + $0x44] sm:$0x7]
      %v2061 = vld [vmem:[%s2042 + $0x48] sm:$0xf]
      %v2062 = vld [vmem:[%s2042 + $0x4c] sm:$0x7]
      %v2063 = vld [vmem:[%s2042 + $0x50] sm:$0xf]
      %v2064 = vld [vmem:[%s2042 + $0x54] sm:$0x7]
      %v2065 = vld [vmem:[%s2042 + $0x58] sm:$0xf]
      %v2066 = vld [vmem:[%s2042 + $0x5c] sm:$0x7]
      %v2067 = vld [vmem:[%s2042 + $0x60] sm:$0xf]
      %v2068 = vld [vmem:[%s2042 + $0x64] sm:$0x7]
      %v2095 = vunpack.c.l.b16 %v2043
      %v2096 = vunpack.c.l.b16 %v2044
      %v2097 = vunpack.c.l.b16 %v2045
      %v2098 = vunpack.c.l.b16 %v2046
      %v2099 = vunpack.c.l.b16 %v2047
      %v2100 = vunpack.c.l.b16 %v2048
      %v2101 = vunpack.c.l.b16 %v2049
      %v2102 = vunpack.c.l.b16 %v2050
      %v2103 = vunpack.c.l.b16 %v2051
      %v2104 = vunpack.c.l.b16 %v2052
      %v2105 = vunpack.c.l.b16 %v2053
      %v2106 = vunpack.c.l.b16 %v2054
      %v2107 = vunpack.c.l.b16 %v2055
      %v2108 = vunpack.c.l.b16 %v2056
      %v2109 = vunpack.c.l.b16 %v2057
      %v2110 = vunpack.c.l.b16 %v2058
      %v2111 = vunpack.c.l.b16 %v2059
      %v2112 = vunpack.c.l.b16 %v2060
      %v2113 = vunpack.c.l.b16 %v2061
      %v2114 = vunpack.c.l.b16 %v2062
      %v2115 = vunpack.c.l.b16 %v2063
      %v2116 = vunpack.c.l.b16 %v2064
      %v2117 = vunpack.c.l.b16 %v2065
      %v2118 = vunpack.c.l.b16 %v2066
      %v2119 = vunpack.c.l.b16 %v2067
      %v2120 = vunpack.c.l.b16 %v2068
      %v2121 = vpack.c.b16 %v2096, %v2095
      %v2122 = vpack.c.b16 %v2098, %v2097
      %v2123 = vpack.c.b16 %v2100, %v2099
      %v2124 = vpack.c.b16 %v2102, %v2101
      %v2125 = vpack.c.b16 %v2104, %v2103
      %v2126 = vpack.c.b16 %v2106, %v2105
      %v2127 = vpack.c.b16 %v2108, %v2107
      %v2128 = vpack.c.b16 %v2110, %v2109
      %v2129 = vpack.c.b16 %v2112, %v2111
      %v2130 = vpack.c.b16 %v2114, %v2113
      %v2131 = vpack.c.b16 %v2116, %v2115
      %v2132 = vpack.c.b16 %v2118, %v2117
      %v2133 = vpack.c.b16 %v2120, %v2119
      %2134 = vrot.lane.b32.xlu0 %v2121, 12
      %v2135 = vpop.permute.xlu0 %2134
      %2136 = vrot.lane.b32.xlu0 %v2122, 12
      %v2137 = vpop.permute.xlu0 %2136
      %2138 = vrot.lane.b32.xlu0 %v2123, 12
      %v2139 = vpop.permute.xlu0 %2138
      %2140 = vrot.lane.b32.xlu0 %v2124, 12
      %v2141 = vpop.permute.xlu0 %2140
      %2142 = vrot.lane.b32.xlu0 %v2125, 12
      %v2143 = vpop.permute.xlu0 %2142
      %2144 = vrot.lane.b32.xlu0 %v2126, 12
      %v2145 = vpop.permute.xlu0 %2144
      %2146 = vrot.lane.b32.xlu0 %v2127, 12
      %v2147 = vpop.permute.xlu0 %2146
      %2148 = vrot.lane.b32.xlu0 %v2128, 12
      %v2149 = vpop.permute.xlu0 %2148
      %2150 = vrot.lane.b32.xlu0 %v2129, 12
      %v2151 = vpop.permute.xlu0 %2150
      %2152 = vrot.lane.b32.xlu0 %v2130, 12
      %v2153 = vpop.permute.xlu0 %2152
      %2154 = vrot.lane.b32.xlu0 %v2131, 12
      %v2155 = vpop.permute.xlu0 %2154
      %2156 = vrot.lane.b32.xlu0 %v2132, 12
      %v2157 = vpop.permute.xlu0 %2156
      %2158 = vrot.lane.b32.xlu0 %v2133, 12
      %v2159 = vpop.permute.xlu0 %2158
      %vm2173 = vcmask 129120
      %vm2174 = vmand %vm2173, %vm1555
      %v2175 = vld [vmem:[#allocation3] sm:$0x7f]
      %v2176 = vsel %vm2174, %v2135, %v2175
      %2177 = vst [vmem:[#allocation3] sm:$0x7f] %v2176
      %v2178 = vld [vmem:[#allocation3 + $0x8] sm:$0x7f]
      %v2179 = vsel %vm2174, %v2137, %v2178
      %2180 = vst [vmem:[#allocation3 + $0x8] sm:$0x7f] %v2179
      %v2181 = vld [vmem:[#allocation3 + $0x10] sm:$0x7f]
      %v2182 = vsel %vm2174, %v2139, %v2181
      %2183 = vst [vmem:[#allocation3 + $0x10] sm:$0x7f] %v2182
      %v2184 = vld [vmem:[#allocation3 + $0x18] sm:$0x7f]
      %v2185 = vsel %vm2174, %v2141, %v2184
      %2186 = vst [vmem:[#allocation3 + $0x18] sm:$0x7f] %v2185
      %v2187 = vld [vmem:[#allocation3 + $0x20] sm:$0x7f]
      %v2188 = vsel %vm2174, %v2143, %v2187
      %2189 = vst [vmem:[#allocation3 + $0x20] sm:$0x7f] %v2188
      %v2190 = vld [vmem:[#allocation3 + $0x28] sm:$0x7f]
      %v2191 = vsel %vm2174, %v2145, %v2190
      %2192 = vst [vmem:[#allocation3 + $0x28] sm:$0x7f] %v2191
      %v2193 = vld [vmem:[#allocation3 + $0x30] sm:$0x7f]
      %v2194 = vsel %vm2174, %v2147, %v2193
      %2195 = vst [vmem:[#allocation3 + $0x30] sm:$0x7f] %v2194
      %v2196 = vld [vmem:[#allocation3 + $0x38] sm:$0x7f]
      %v2197 = vsel %vm2174, %v2149, %v2196
      %2198 = vst [vmem:[#allocation3 + $0x38] sm:$0x7f] %v2197
      %v2199 = vld [vmem:[#allocation3 + $0x40] sm:$0x7f]
      %v2200 = vsel %vm2174, %v2151, %v2199
      %2201 = vst [vmem:[#allocation3 + $0x40] sm:$0x7f] %v2200
      %v2202 = vld [vmem:[#allocation3 + $0x48] sm:$0x7f]
      %v2203 = vsel %vm2174, %v2153, %v2202
      %2204 = vst [vmem:[#allocation3 + $0x48] sm:$0x7f] %v2203
      %v2205 = vld [vmem:[#allocation3 + $0x50] sm:$0x7f]
      %v2206 = vsel %vm2174, %v2155, %v2205
      %2207 = vst [vmem:[#allocation3 + $0x50] sm:$0x7f] %v2206
      %v2208 = vld [vmem:[#allocation3 + $0x58] sm:$0x7f]
      %v2209 = vsel %vm2174, %v2157, %v2208
      %2210 = vst [vmem:[#allocation3 + $0x58] sm:$0x7f] %v2209
      %v2211 = vld [vmem:[#allocation3 + $0x60] sm:$0x7f]
      %v2212 = vsel %vm2174, %v2159, %v2211
      %2213 = vst [vmem:[#allocation3 + $0x60] sm:$0x7f] %v2212
      %v2214 = vld [vmem:[%s2042] sm:$0xf]
      %v2215 = vld [vmem:[%s2042 + $0x4] sm:$0x7]
      %v2216 = vld [vmem:[%s2042 + $0x8] sm:$0xf]
      %v2217 = vld [vmem:[%s2042 + $0xc] sm:$0x7]
      %v2218 = vld [vmem:[%s2042 + $0x10] sm:$0xf]
      %v2219 = vld [vmem:[%s2042 + $0x14] sm:$0x7]
      %v2220 = vld [vmem:[%s2042 + $0x18] sm:$0xf]
      %v2221 = vld [vmem:[%s2042 + $0x1c] sm:$0x7]
      %v2222 = vld [vmem:[%s2042 + $0x20] sm:$0xf]
      %v2223 = vld [vmem:[%s2042 + $0x24] sm:$0x7]
      %v2224 = vld [vmem:[%s2042 + $0x28] sm:$0xf]
      %v2225 = vld [vmem:[%s2042 + $0x2c] sm:$0x7]
      %v2226 = vld [vmem:[%s2042 + $0x30] sm:$0xf]
      %v2227 = vld [vmem:[%s2042 + $0x34] sm:$0x7]
      %v2228 = vld [vmem:[%s2042 + $0x38] sm:$0xf]
      %v2229 = vld [vmem:[%s2042 + $0x3c] sm:$0x7]
      %v2230 = vld [vmem:[%s2042 + $0x40] sm:$0xf]
      %v2231 = vld [vmem:[%s2042 + $0x44] sm:$0x7]
      %v2232 = vld [vmem:[%s2042 + $0x48] sm:$0xf]
      %v2233 = vld [vmem:[%s2042 + $0x4c] sm:$0x7]
      %v2234 = vld [vmem:[%s2042 + $0x50] sm:$0xf]
      %v2235 = vld [vmem:[%s2042 + $0x54] sm:$0x7]
      %v2236 = vld [vmem:[%s2042 + $0x58] sm:$0xf]
      %v2237 = vld [vmem:[%s2042 + $0x5c] sm:$0x7]
      %v2238 = vld [vmem:[%s2042 + $0x60] sm:$0xf]
      %v2239 = vld [vmem:[%s2042 + $0x64] sm:$0x7]
      %v2266 = vunpack.c.l.b16 %v2214
      %v2267 = vunpack.c.l.b16 %v2215
      %v2268 = vunpack.c.l.b16 %v2216
      %v2269 = vunpack.c.l.b16 %v2217
      %v2270 = vunpack.c.l.b16 %v2218
      %v2271 = vunpack.c.l.b16 %v2219
      %v2272 = vunpack.c.l.b16 %v2220
      %v2273 = vunpack.c.l.b16 %v2221
      %v2274 = vunpack.c.l.b16 %v2222
      %v2275 = vunpack.c.l.b16 %v2223
      %v2276 = vunpack.c.l.b16 %v2224
      %v2277 = vunpack.c.l.b16 %v2225
      %v2278 = vunpack.c.l.b16 %v2226
      %v2279 = vunpack.c.l.b16 %v2227
      %v2280 = vunpack.c.l.b16 %v2228
      %v2281 = vunpack.c.l.b16 %v2229
      %v2282 = vunpack.c.l.b16 %v2230
      %v2283 = vunpack.c.l.b16 %v2231
      %v2284 = vunpack.c.l.b16 %v2232
      %v2285 = vunpack.c.l.b16 %v2233
      %v2286 = vunpack.c.l.b16 %v2234
      %v2287 = vunpack.c.l.b16 %v2235
      %v2288 = vunpack.c.l.b16 %v2236
      %v2289 = vunpack.c.l.b16 %v2237
      %v2290 = vunpack.c.l.b16 %v2238
      %v2291 = vunpack.c.l.b16 %v2239
      %v2292 = vpack.c.b16 %v2267, %v2266
      %v2293 = vpack.c.b16 %v2269, %v2268
      %v2294 = vpack.c.b16 %v2271, %v2270
      %v2295 = vpack.c.b16 %v2273, %v2272
      %v2296 = vpack.c.b16 %v2275, %v2274
      %v2297 = vpack.c.b16 %v2277, %v2276
      %v2298 = vpack.c.b16 %v2279, %v2278
      %v2299 = vpack.c.b16 %v2281, %v2280
      %v2300 = vpack.c.b16 %v2283, %v2282
      %v2301 = vpack.c.b16 %v2285, %v2284
      %v2302 = vpack.c.b16 %v2287, %v2286
      %v2303 = vpack.c.b16 %v2289, %v2288
      %v2304 = vpack.c.b16 %v2291, %v2290
      %v2306 = vshrl.u32 %v2292, 16
      %v2308 = vshll.u32 %v2292, 16
      %v2310 = vrot.slane %v2308, 1
      %v2311 = vor.u32 %v2306, %v2310
      %v2313 = vshrl.u32 %v2293, 16
      %v2315 = vshll.u32 %v2293, 16
      %v2317 = vrot.slane %v2315, 1
      %v2318 = vor.u32 %v2313, %v2317
      %v2320 = vshrl.u32 %v2294, 16
      %v2322 = vshll.u32 %v2294, 16
      %v2324 = vrot.slane %v2322, 1
      %v2325 = vor.u32 %v2320, %v2324
      %v2327 = vshrl.u32 %v2295, 16
      %v2329 = vshll.u32 %v2295, 16
      %v2331 = vrot.slane %v2329, 1
      %v2332 = vor.u32 %v2327, %v2331
      %v2334 = vshrl.u32 %v2296, 16
      %v2336 = vshll.u32 %v2296, 16
      %v2338 = vrot.slane %v2336, 1
      %v2339 = vor.u32 %v2334, %v2338
      %v2341 = vshrl.u32 %v2297, 16
      %v2343 = vshll.u32 %v2297, 16
      %v2345 = vrot.slane %v2343, 1
      %v2346 = vor.u32 %v2341, %v2345
      %v2348 = vshrl.u32 %v2298, 16
      %v2350 = vshll.u32 %v2298, 16
      %v2352 = vrot.slane %v2350, 1
      %v2353 = vor.u32 %v2348, %v2352
      %v2355 = vshrl.u32 %v2299, 16
      %v2357 = vshll.u32 %v2299, 16
      %v2359 = vrot.slane %v2357, 1
      %v2360 = vor.u32 %v2355, %v2359
      %v2362 = vshrl.u32 %v2300, 16
      %v2364 = vshll.u32 %v2300, 16
      %v2366 = vrot.slane %v2364, 1
      %v2367 = vor.u32 %v2362, %v2366
      %v2369 = vshrl.u32 %v2301, 16
      %v2371 = vshll.u32 %v2301, 16
      %v2373 = vrot.slane %v2371, 1
      %v2374 = vor.u32 %v2369, %v2373
      %v2376 = vshrl.u32 %v2302, 16
      %v2378 = vshll.u32 %v2302, 16
      %v2380 = vrot.slane %v2378, 1
      %v2381 = vor.u32 %v2376, %v2380
      %v2383 = vshrl.u32 %v2303, 16
      %v2385 = vshll.u32 %v2303, 16
      %v2387 = vrot.slane %v2385, 1
      %v2388 = vor.u32 %v2383, %v2387
      %v2390 = vshrl.u32 %v2304, 16
      %v2392 = vshll.u32 %v2304, 16
      %v2394 = vrot.slane %v2392, 1
      %v2395 = vor.u32 %v2390, %v2394
      %2396 = vrot.lane.b32.xlu0 %v2311, 16
      %v2397 = vpop.permute.xlu0 %2396
      %2398 = vrot.lane.b32.xlu0 %v2318, 16
      %v2399 = vpop.permute.xlu0 %2398
      %2400 = vrot.lane.b32.xlu0 %v2325, 16
      %v2401 = vpop.permute.xlu0 %2400
      %2402 = vrot.lane.b32.xlu0 %v2332, 16
      %v2403 = vpop.permute.xlu0 %2402
      %2404 = vrot.lane.b32.xlu0 %v2339, 16
      %v2405 = vpop.permute.xlu0 %2404
      %2406 = vrot.lane.b32.xlu0 %v2346, 16
      %v2407 = vpop.permute.xlu0 %2406
      %2408 = vrot.lane.b32.xlu0 %v2353, 16
      %v2409 = vpop.permute.xlu0 %2408
      %2410 = vrot.lane.b32.xlu0 %v2360, 16
      %v2411 = vpop.permute.xlu0 %2410
      %2412 = vrot.lane.b32.xlu0 %v2367, 16
      %v2413 = vpop.permute.xlu0 %2412
      %2414 = vrot.lane.b32.xlu0 %v2374, 16
      %v2415 = vpop.permute.xlu0 %2414
      %2416 = vrot.lane.b32.xlu0 %v2381, 16
      %v2417 = vpop.permute.xlu0 %2416
      %2418 = vrot.lane.b32.xlu0 %v2388, 16
      %v2419 = vpop.permute.xlu0 %2418
      %2420 = vrot.lane.b32.xlu0 %v2395, 16
      %v2421 = vpop.permute.xlu0 %2420
      %vm2435 = vcmask 161920
      %vm2436 = vmand %vm2435, %vm1555
      %v2437 = vld [vmem:[#allocation3] sm:$0x7f]
      %v2438 = vsel %vm2436, %v2397, %v2437
      %2439 = vst [vmem:[#allocation3] sm:$0x7f] %v2438
      %v2440 = vld [vmem:[#allocation3 + $0x8] sm:$0x7f]
      %v2441 = vsel %vm2436, %v2399, %v2440
      %2442 = vst [vmem:[#allocation3 + $0x8] sm:$0x7f] %v2441
      %v2443 = vld [vmem:[#allocation3 + $0x10] sm:$0x7f]
      %v2444 = vsel %vm2436, %v2401, %v2443
      %2445 = vst [vmem:[#allocation3 + $0x10] sm:$0x7f] %v2444
      %v2446 = vld [vmem:[#allocation3 + $0x18] sm:$0x7f]
      %v2447 = vsel %vm2436, %v2403, %v2446
      %2448 = vst [vmem:[#allocation3 + $0x18] sm:$0x7f] %v2447
      %v2449 = vld [vmem:[#allocation3 + $0x20] sm:$0x7f]
      %v2450 = vsel %vm2436, %v2405, %v2449
      %2451 = vst [vmem:[#allocation3 + $0x20] sm:$0x7f] %v2450
      %v2452 = vld [vmem:[#allocation3 + $0x28] sm:$0x7f]
      %v2453 = vsel %vm2436, %v2407, %v2452
      %2454 = vst [vmem:[#allocation3 + $0x28] sm:$0x7f] %v2453
      %v2455 = vld [vmem:[#allocation3 + $0x30] sm:$0x7f]
      %v2456 = vsel %vm2436, %v2409, %v2455
      %2457 = vst [vmem:[#allocation3 + $0x30] sm:$0x7f] %v2456
      %v2458 = vld [vmem:[#allocation3 + $0x38] sm:$0x7f]
      %v2459 = vsel %vm2436, %v2411, %v2458
      %2460 = vst [vmem:[#allocation3 + $0x38] sm:$0x7f] %v2459
      %v2461 = vld [vmem:[#allocation3 + $0x40] sm:$0x7f]
      %v2462 = vsel %vm2436, %v2413, %v2461
      %2463 = vst [vmem:[#allocation3 + $0x40] sm:$0x7f] %v2462
      %v2464 = vld [vmem:[#allocation3 + $0x48] sm:$0x7f]
      %v2465 = vsel %vm2436, %v2415, %v2464
      %2466 = vst [vmem:[#allocation3 + $0x48] sm:$0x7f] %v2465
      %v2467 = vld [vmem:[#allocation3 + $0x50] sm:$0x7f]
      %v2468 = vsel %vm2436, %v2417, %v2467
      %2469 = vst [vmem:[#allocation3 + $0x50] sm:$0x7f] %v2468
      %v2470 = vld [vmem:[#allocation3 + $0x58] sm:$0x7f]
      %v2471 = vsel %vm2436, %v2419, %v2470
      %2472 = vst [vmem:[#allocation3 + $0x58] sm:$0x7f] %v2471
      %v2473 = vld [vmem:[#allocation3 + $0x60] sm:$0x7f]
      %v2474 = vsel %vm2436, %v2421, %v2473
      %2475 = vst [vmem:[#allocation3 + $0x60] sm:$0x7f] %v2474
      %v2476 = vld [vmem:[%s2042] sm:$0xe]
      %v2477 = vld [vmem:[%s2042 + $0x4] sm:$0xf]
      %v2478 = vld [vmem:[%s2042 + $0x8] sm:$0xe]
      %v2479 = vld [vmem:[%s2042 + $0xc] sm:$0xf]
      %v2480 = vld [vmem:[%s2042 + $0x10] sm:$0xe]
      %v2481 = vld [vmem:[%s2042 + $0x14] sm:$0xf]
      %v2482 = vld [vmem:[%s2042 + $0x18] sm:$0xe]
      %v2483 = vld [vmem:[%s2042 + $0x1c] sm:$0xf]
      %v2484 = vld [vmem:[%s2042 + $0x20] sm:$0xe]
      %v2485 = vld [vmem:[%s2042 + $0x24] sm:$0xf]
      %v2486 = vld [vmem:[%s2042 + $0x28] sm:$0xe]
      %v2487 = vld [vmem:[%s2042 + $0x2c] sm:$0xf]
      %v2488 = vld [vmem:[%s2042 + $0x30] sm:$0xe]
      %v2489 = vld [vmem:[%s2042 + $0x34] sm:$0xf]
      %v2490 = vld [vmem:[%s2042 + $0x38] sm:$0xe]
      %v2491 = vld [vmem:[%s2042 + $0x3c] sm:$0xf]
      %v2492 = vld [vmem:[%s2042 + $0x40] sm:$0xe]
      %v2493 = vld [vmem:[%s2042 + $0x44] sm:$0xf]
      %v2494 = vld [vmem:[%s2042 + $0x48] sm:$0xe]
      %v2495 = vld [vmem:[%s2042 + $0x4c] sm:$0xf]
      %v2496 = vld [vmem:[%s2042 + $0x50] sm:$0xe]
      %v2497 = vld [vmem:[%s2042 + $0x54] sm:$0xf]
      %v2498 = vld [vmem:[%s2042 + $0x58] sm:$0xe]
      %v2499 = vld [vmem:[%s2042 + $0x5c] sm:$0xf]
      %v2500 = vld [vmem:[%s2042 + $0x60] sm:$0xe]
      %v2501 = vld [vmem:[%s2042 + $0x64] sm:$0xf]
      %v2528 = vunpack.c.l.b16 %v2476
      %v2529 = vunpack.c.l.b16 %v2477
      %v2530 = vunpack.c.l.b16 %v2478
      %v2531 = vunpack.c.l.b16 %v2479
      %v2532 = vunpack.c.l.b16 %v2480
      %v2533 = vunpack.c.l.b16 %v2481
      %v2534 = vunpack.c.l.b16 %v2482
      %v2535 = vunpack.c.l.b16 %v2483
      %v2536 = vunpack.c.l.b16 %v2484
      %v2537 = vunpack.c.l.b16 %v2485
      %v2538 = vunpack.c.l.b16 %v2486
      %v2539 = vunpack.c.l.b16 %v2487
      %v2540 = vunpack.c.l.b16 %v2488
      %v2541 = vunpack.c.l.b16 %v2489
      %v2542 = vunpack.c.l.b16 %v2490
      %v2543 = vunpack.c.l.b16 %v2491
      %v2544 = vunpack.c.l.b16 %v2492
      %v2545 = vunpack.c.l.b16 %v2493
      %v2546 = vunpack.c.l.b16 %v2494
      %v2547 = vunpack.c.l.b16 %v2495
      %v2548 = vunpack.c.l.b16 %v2496
      %v2549 = vunpack.c.l.b16 %v2497
      %v2550 = vunpack.c.l.b16 %v2498
      %v2551 = vunpack.c.l.b16 %v2499
      %v2552 = vunpack.c.l.b16 %v2500
      %v2553 = vunpack.c.l.b16 %v2501
      %v2554 = vpack.c.b16 %v2529, %v2528
      %v2555 = vpack.c.b16 %v2531, %v2530
      %v2556 = vpack.c.b16 %v2533, %v2532
      %v2557 = vpack.c.b16 %v2535, %v2534
      %v2558 = vpack.c.b16 %v2537, %v2536
      %v2559 = vpack.c.b16 %v2539, %v2538
      %v2560 = vpack.c.b16 %v2541, %v2540
      %v2561 = vpack.c.b16 %v2543, %v2542
      %v2562 = vpack.c.b16 %v2545, %v2544
      %v2563 = vpack.c.b16 %v2547, %v2546
      %v2564 = vpack.c.b16 %v2549, %v2548
      %v2565 = vpack.c.b16 %v2551, %v2550
      %v2566 = vpack.c.b16 %v2553, %v2552
      %v2567 = vrot.slane %v2554, 1
      %v2568 = vrot.slane %v2555, 1
      %v2569 = vrot.slane %v2556, 1
      %v2570 = vrot.slane %v2557, 1
      %v2571 = vrot.slane %v2558, 1
      %v2572 = vrot.slane %v2559, 1
      %v2573 = vrot.slane %v2560, 1
      %v2574 = vrot.slane %v2561, 1
      %v2575 = vrot.slane %v2562, 1
      %v2576 = vrot.slane %v2563, 1
      %v2577 = vrot.slane %v2564, 1
      %v2578 = vrot.slane %v2565, 1
      %v2579 = vrot.slane %v2566, 1
      %2580 = vrot.lane.b32.xlu0 %v2567, 20
      %v2581 = vpop.permute.xlu0 %2580
      %2582 = vrot.lane.b32.xlu0 %v2568, 20
      %v2583 = vpop.permute.xlu0 %2582
      %2584 = vrot.lane.b32.xlu0 %v2569, 20
      %v2585 = vpop.permute.xlu0 %2584
      %2586 = vrot.lane.b32.xlu0 %v2570, 20
      %v2587 = vpop.permute.xlu0 %2586
      %2588 = vrot.lane.b32.xlu0 %v2571, 20
      %v2589 = vpop.permute.xlu0 %2588
      %2590 = vrot.lane.b32.xlu0 %v2572, 20
      %v2591 = vpop.permute.xlu0 %2590
      %2592 = vrot.lane.b32.xlu0 %v2573, 20
      %v2593 = vpop.permute.xlu0 %2592
      %2594 = vrot.lane.b32.xlu0 %v2574, 20
      %v2595 = vpop.permute.xlu0 %2594
      %2596 = vrot.lane.b32.xlu0 %v2575, 20
      %v2597 = vpop.permute.xlu0 %2596
      %2598 = vrot.lane.b32.xlu0 %v2576, 20
      %v2599 = vpop.permute.xlu0 %2598
      %2600 = vrot.lane.b32.xlu0 %v2577, 20
      %v2601 = vpop.permute.xlu0 %2600
      %2602 = vrot.lane.b32.xlu0 %v2578, 20
      %v2603 = vpop.permute.xlu0 %2602
      %2604 = vrot.lane.b32.xlu0 %v2579, 20
      %v2605 = vpop.permute.xlu0 %2604
      %vm2619 = vcmask 194720
      %vm2620 = vmand %vm2619, %vm1555
      %v2621 = vld [vmem:[#allocation3] sm:$0x7f]
      %v2622 = vsel %vm2620, %v2581, %v2621
      %2623 = vst [vmem:[#allocation3] sm:$0x7f] %v2622
      %v2624 = vld [vmem:[#allocation3 + $0x8] sm:$0x7f]
      %v2625 = vsel %vm2620, %v2583, %v2624
      %2626 = vst [vmem:[#allocation3 + $0x8] sm:$0x7f] %v2625
      %v2627 = vld [vmem:[#allocation3 + $0x10] sm:$0x7f]
      %v2628 = vsel %vm2620, %v2585, %v2627
      %2629 = vst [vmem:[#allocation3 + $0x10] sm:$0x7f] %v2628
      %v2630 = vld [vmem:[#allocation3 + $0x18] sm:$0x7f]
      %v2631 = vsel %vm2620, %v2587, %v2630
      %2632 = vst [vmem:[#allocation3 + $0x18] sm:$0x7f] %v2631
      %v2633 = vld [vmem:[#allocation3 + $0x20] sm:$0x7f]
      %v2634 = vsel %vm2620, %v2589, %v2633
      %2635 = vst [vmem:[#allocation3 + $0x20] sm:$0x7f] %v2634
      %v2636 = vld [vmem:[#allocation3 + $0x28] sm:$0x7f]
      %v2637 = vsel %vm2620, %v2591, %v2636
      %2638 = vst [vmem:[#allocation3 + $0x28] sm:$0x7f] %v2637
      %v2639 = vld [vmem:[#allocation3 + $0x30] sm:$0x7f]
      %v2640 = vsel %vm2620, %v2593, %v2639
      %2641 = vst [vmem:[#allocation3 + $0x30] sm:$0x7f] %v2640
      %v2642 = vld [vmem:[#allocation3 + $0x38] sm:$0x7f]
      %v2643 = vsel %vm2620, %v2595, %v2642
      %2644 = vst [vmem:[#allocation3 + $0x38] sm:$0x7f] %v2643
      %v2645 = vld [vmem:[#allocation3 + $0x40] sm:$0x7f]
      %v2646 = vsel %vm2620, %v2597, %v2645
      %2647 = vst [vmem:[#allocation3 + $0x40] sm:$0x7f] %v2646
      %v2648 = vld [vmem:[#allocation3 + $0x48] sm:$0x7f]
      %v2649 = vsel %vm2620, %v2599, %v2648
      %2650 = vst [vmem:[#allocation3 + $0x48] sm:$0x7f] %v2649
      %v2651 = vld [vmem:[#allocation3 + $0x50] sm:$0x7f]
      %v2652 = vsel %vm2620, %v2601, %v2651
      %2653 = vst [vmem:[#allocation3 + $0x50] sm:$0x7f] %v2652
      %v2654 = vld [vmem:[#allocation3 + $0x58] sm:$0x7f]
      %v2655 = vsel %vm2620, %v2603, %v2654
      %2656 = vst [vmem:[#allocation3 + $0x58] sm:$0x7f] %v2655
      %v2657 = vld [vmem:[#allocation3 + $0x60] sm:$0x7f]
      %v2658 = vsel %vm2620, %v2605, %v2657
      %2659 = vst [vmem:[#allocation3 + $0x60] sm:$0x7f] %v2658
      %s2660 = scalar_lea.vmem %s606, 16
      %v2661 = vld [vmem:[%s2660] sm:$0xf]
      %v2662 = vld [vmem:[%s2660 + $0x4] sm:$0x7]
      %v2663 = vld [vmem:[%s2660 + $0x8] sm:$0xf]
      %v2664 = vld [vmem:[%s2660 + $0xc] sm:$0x7]
      %v2665 = vld [vmem:[%s2660 + $0x10] sm:$0xf]
      %v2666 = vld [vmem:[%s2660 + $0x14] sm:$0x7]
      %v2667 = vld [vmem:[%s2660 + $0x18] sm:$0xf]
      %v2668 = vld [vmem:[%s2660 + $0x1c] sm:$0x7]
      %v2669 = vld [vmem:[%s2660 + $0x20] sm:$0xf]
      %v2670 = vld [vmem:[%s2660 + $0x24] sm:$0x7]
      %v2671 = vld [vmem:[%s2660 + $0x28] sm:$0xf]
      %v2672 = vld [vmem:[%s2660 + $0x2c] sm:$0x7]
      %v2673 = vld [vmem:[%s2660 + $0x30] sm:$0xf]
      %v2674 = vld [vmem:[%s2660 + $0x34] sm:$0x7]
      %v2675 = vld [vmem:[%s2660 + $0x38] sm:$0xf]
      %v2676 = vld [vmem:[%s2660 + $0x3c] sm:$0x7]
      %v2677 = vld [vmem:[%s2660 + $0x40] sm:$0xf]
      %v2678 = vld [vmem:[%s2660 + $0x44] sm:$0x7]
      %v2679 = vld [vmem:[%s2660 + $0x48] sm:$0xf]
      %v2680 = vld [vmem:[%s2660 + $0x4c] sm:$0x7]
      %v2681 = vld [vmem:[%s2660 + $0x50] sm:$0xf]
      %v2682 = vld [vmem:[%s2660 + $0x54] sm:$0x7]
      %v2683 = vld [vmem:[%s2660 + $0x58] sm:$0xf]
      %v2684 = vld [vmem:[%s2660 + $0x5c] sm:$0x7]
      %v2685 = vld [vmem:[%s2660 + $0x60] sm:$0xf]
      %v2686 = vld [vmem:[%s2660 + $0x64] sm:$0x7]
      %v2713 = vunpack.c.l.b16 %v2661
      %v2714 = vunpack.c.l.b16 %v2662
      %v2715 = vunpack.c.l.b16 %v2663
      %v2716 = vunpack.c.l.b16 %v2664
      %v2717 = vunpack.c.l.b16 %v2665
      %v2718 = vunpack.c.l.b16 %v2666
      %v2719 = vunpack.c.l.b16 %v2667
      %v2720 = vunpack.c.l.b16 %v2668
      %v2721 = vunpack.c.l.b16 %v2669
      %v2722 = vunpack.c.l.b16 %v2670
      %v2723 = vunpack.c.l.b16 %v2671
      %v2724 = vunpack.c.l.b16 %v2672
      %v2725 = vunpack.c.l.b16 %v2673
      %v2726 = vunpack.c.l.b16 %v2674
      %v2727 = vunpack.c.l.b16 %v2675
      %v2728 = vunpack.c.l.b16 %v2676
      %v2729 = vunpack.c.l.b16 %v2677
      %v2730 = vunpack.c.l.b16 %v2678
      %v2731 = vunpack.c.l.b16 %v2679
      %v2732 = vunpack.c.l.b16 %v2680
      %v2733 = vunpack.c.l.b16 %v2681
      %v2734 = vunpack.c.l.b16 %v2682
      %v2735 = vunpack.c.l.b16 %v2683
      %v2736 = vunpack.c.l.b16 %v2684
      %v2737 = vunpack.c.l.b16 %v2685
      %v2738 = vunpack.c.l.b16 %v2686
      %v2739 = vpack.c.b16 %v2714, %v2713
      %v2740 = vpack.c.b16 %v2716, %v2715
      %v2741 = vpack.c.b16 %v2718, %v2717
      %v2742 = vpack.c.b16 %v2720, %v2719
      %v2743 = vpack.c.b16 %v2722, %v2721
      %v2744 = vpack.c.b16 %v2724, %v2723
      %v2745 = vpack.c.b16 %v2726, %v2725
      %v2746 = vpack.c.b16 %v2728, %v2727
      %v2747 = vpack.c.b16 %v2730, %v2729
      %v2748 = vpack.c.b16 %v2732, %v2731
      %v2749 = vpack.c.b16 %v2734, %v2733
      %v2750 = vpack.c.b16 %v2736, %v2735
      %v2751 = vpack.c.b16 %v2738, %v2737
      %2752 = vrot.lane.b32.xlu0 %v2739, 24
      %v2753 = vpop.permute.xlu0 %2752
      %2754 = vrot.lane.b32.xlu0 %v2740, 24
      %v2755 = vpop.permute.xlu0 %2754
      %2756 = vrot.lane.b32.xlu0 %v2741, 24
      %v2757 = vpop.permute.xlu0 %2756
      %2758 = vrot.lane.b32.xlu0 %v2742, 24
      %v2759 = vpop.permute.xlu0 %2758
      %2760 = vrot.lane.b32.xlu0 %v2743, 24
      %v2761 = vpop.permute.xlu0 %2760
      %2762 = vrot.lane.b32.xlu0 %v2744, 24
      %v2763 = vpop.permute.xlu0 %2762
      %2764 = vrot.lane.b32.xlu0 %v2745, 24
      %v2765 = vpop.permute.xlu0 %2764
      %2766 = vrot.lane.b32.xlu0 %v2746, 24
      %v2767 = vpop.permute.xlu0 %2766
      %2768 = vrot.lane.b32.xlu0 %v2747, 24
      %v2769 = vpop.permute.xlu0 %2768
      %2770 = vrot.lane.b32.xlu0 %v2748, 24
      %v2771 = vpop.permute.xlu0 %2770
      %2772 = vrot.lane.b32.xlu0 %v2749, 24
      %v2773 = vpop.permute.xlu0 %2772
      %2774 = vrot.lane.b32.xlu0 %v2750, 24
      %v2775 = vpop.permute.xlu0 %2774
      %2776 = vrot.lane.b32.xlu0 %v2751, 24
      %v2777 = vpop.permute.xlu0 %2776
      %vm2791 = vcmask 227520
      %vm2792 = vmand %vm2791, %vm1555
      %v2793 = vld [vmem:[#allocation3] sm:$0x7f]
      %v2794 = vsel %vm2792, %v2753, %v2793
      %2795 = vst [vmem:[#allocation3] sm:$0x7f] %v2794
      %v2796 = vld [vmem:[#allocation3 + $0x8] sm:$0x7f]
      %v2797 = vsel %vm2792, %v2755, %v2796
      %2798 = vst [vmem:[#allocation3 + $0x8] sm:$0x7f] %v2797
      %v2799 = vld [vmem:[#allocation3 + $0x10] sm:$0x7f]
      %v2800 = vsel %vm2792, %v2757, %v2799
      %2801 = vst [vmem:[#allocation3 + $0x10] sm:$0x7f] %v2800
      %v2802 = vld [vmem:[#allocation3 + $0x18] sm:$0x7f]
      %v2803 = vsel %vm2792, %v2759, %v2802
      %2804 = vst [vmem:[#allocation3 + $0x18] sm:$0x7f] %v2803
      %v2805 = vld [vmem:[#allocation3 + $0x20] sm:$0x7f]
      %v2806 = vsel %vm2792, %v2761, %v2805
      %2807 = vst [vmem:[#allocation3 + $0x20] sm:$0x7f] %v2806
      %v2808 = vld [vmem:[#allocation3 + $0x28] sm:$0x7f]
      %v2809 = vsel %vm2792, %v2763, %v2808
      %2810 = vst [vmem:[#allocation3 + $0x28] sm:$0x7f] %v2809
      %v2811 = vld [vmem:[#allocation3 + $0x30] sm:$0x7f]
      %v2812 = vsel %vm2792, %v2765, %v2811
      %2813 = vst [vmem:[#allocation3 + $0x30] sm:$0x7f] %v2812
      %v2814 = vld [vmem:[#allocation3 + $0x38] sm:$0x7f]
      %v2815 = vsel %vm2792, %v2767, %v2814
      %2816 = vst [vmem:[#allocation3 + $0x38] sm:$0x7f] %v2815
      %v2817 = vld [vmem:[#allocation3 + $0x40] sm:$0x7f]
      %v2818 = vsel %vm2792, %v2769, %v2817
      %2819 = vst [vmem:[#allocation3 + $0x40] sm:$0x7f] %v2818
      %v2820 = vld [vmem:[#allocation3 + $0x48] sm:$0x7f]
      %v2821 = vsel %vm2792, %v2771, %v2820
      %2822 = vst [vmem:[#allocation3 + $0x48] sm:$0x7f] %v2821
      %v2823 = vld [vmem:[#allocation3 + $0x50] sm:$0x7f]
      %v2824 = vsel %vm2792, %v2773, %v2823
      %2825 = vst [vmem:[#allocation3 + $0x50] sm:$0x7f] %v2824
      %v2826 = vld [vmem:[#allocation3 + $0x58] sm:$0x7f]
      %v2827 = vsel %vm2792, %v2775, %v2826
      %2828 = vst [vmem:[#allocation3 + $0x58] sm:$0x7f] %v2827
      %v2829 = vld [vmem:[#allocation3 + $0x60] sm:$0x7f]
      %v2830 = vsel %vm2792, %v2777, %v2829
      %2831 = vst [vmem:[#allocation3 + $0x60] sm:$0x7f] %v2830
      %v2832 = vld [vmem:[%s2660] sm:$0xf]
      %v2833 = vld [vmem:[%s2660 + $0x4] sm:$0x7]
      %v2834 = vld [vmem:[%s2660 + $0x8] sm:$0xf]
      %v2835 = vld [vmem:[%s2660 + $0xc] sm:$0x7]
      %v2836 = vld [vmem:[%s2660 + $0x10] sm:$0xf]
      %v2837 = vld [vmem:[%s2660 + $0x14] sm:$0x7]
      %v2838 = vld [vmem:[%s2660 + $0x18] sm:$0xf]
      %v2839 = vld [vmem:[%s2660 + $0x1c] sm:$0x7]
      %v2840 = vld [vmem:[%s2660 + $0x20] sm:$0xf]
      %v2841 = vld [vmem:[%s2660 + $0x24] sm:$0x7]
      %v2842 = vld [vmem:[%s2660 + $0x28] sm:$0xf]
      %v2843 = vld [vmem:[%s2660 + $0x2c] sm:$0x7]
      %v2844 = vld [vmem:[%s2660 + $0x30] sm:$0xf]
      %v2845 = vld [vmem:[%s2660 + $0x34] sm:$0x7]
      %v2846 = vld [vmem:[%s2660 + $0x38] sm:$0xf]
      %v2847 = vld [vmem:[%s2660 + $0x3c] sm:$0x7]
      %v2848 = vld [vmem:[%s2660 + $0x40] sm:$0xf]
      %v2849 = vld [vmem:[%s2660 + $0x44] sm:$0x7]
      %v2850 = vld [vmem:[%s2660 + $0x48] sm:$0xf]
      %v2851 = vld [vmem:[%s2660 + $0x4c] sm:$0x7]
      %v2852 = vld [vmem:[%s2660 + $0x50] sm:$0xf]
      %v2853 = vld [vmem:[%s2660 + $0x54] sm:$0x7]
      %v2854 = vld [vmem:[%s2660 + $0x58] sm:$0xf]
      %v2855 = vld [vmem:[%s2660 + $0x5c] sm:$0x7]
      %v2856 = vld [vmem:[%s2660 + $0x60] sm:$0xf]
      %v2857 = vld [vmem:[%s2660 + $0x64] sm:$0x7]
      %v2884 = vunpack.c.l.b16 %v2832
      %v2885 = vunpack.c.l.b16 %v2833
      %v2886 = vunpack.c.l.b16 %v2834
      %v2887 = vunpack.c.l.b16 %v2835
      %v2888 = vunpack.c.l.b16 %v2836
      %v2889 = vunpack.c.l.b16 %v2837
      %v2890 = vunpack.c.l.b16 %v2838
      %v2891 = vunpack.c.l.b16 %v2839
      %v2892 = vunpack.c.l.b16 %v2840
      %v2893 = vunpack.c.l.b16 %v2841
      %v2894 = vunpack.c.l.b16 %v2842
      %v2895 = vunpack.c.l.b16 %v2843
      %v2896 = vunpack.c.l.b16 %v2844
      %v2897 = vunpack.c.l.b16 %v2845
      %v2898 = vunpack.c.l.b16 %v2846
      %v2899 = vunpack.c.l.b16 %v2847
      %v2900 = vunpack.c.l.b16 %v2848
      %v2901 = vunpack.c.l.b16 %v2849
      %v2902 = vunpack.c.l.b16 %v2850
      %v2903 = vunpack.c.l.b16 %v2851
      %v2904 = vunpack.c.l.b16 %v2852
      %v2905 = vunpack.c.l.b16 %v2853
      %v2906 = vunpack.c.l.b16 %v2854
      %v2907 = vunpack.c.l.b16 %v2855
      %v2908 = vunpack.c.l.b16 %v2856
      %v2909 = vunpack.c.l.b16 %v2857
      %v2910 = vpack.c.b16 %v2885, %v2884
      %v2911 = vpack.c.b16 %v2887, %v2886
      %v2912 = vpack.c.b16 %v2889, %v2888
      %v2913 = vpack.c.b16 %v2891, %v2890
      %v2914 = vpack.c.b16 %v2893, %v2892
      %v2915 = vpack.c.b16 %v2895, %v2894
      %v2916 = vpack.c.b16 %v2897, %v2896
      %v2917 = vpack.c.b16 %v2899, %v2898
      %v2918 = vpack.c.b16 %v2901, %v2900
      %v2919 = vpack.c.b16 %v2903, %v2902
      %v2920 = vpack.c.b16 %v2905, %v2904
      %v2921 = vpack.c.b16 %v2907, %v2906
      %v2922 = vpack.c.b16 %v2909, %v2908
      %v2924 = vshrl.u32 %v2910, 16
      %v2926 = vshll.u32 %v2910, 16
      %v2928 = vrot.slane %v2926, 1
      %v2929 = vor.u32 %v2924, %v2928
      %v2931 = vshrl.u32 %v2911, 16
      %v2933 = vshll.u32 %v2911, 16
      %v2935 = vrot.slane %v2933, 1
      %v2936 = vor.u32 %v2931, %v2935
      %v2938 = vshrl.u32 %v2912, 16
      %v2940 = vshll.u32 %v2912, 16
      %v2942 = vrot.slane %v2940, 1
      %v2943 = vor.u32 %v2938, %v2942
      %v2945 = vshrl.u32 %v2913, 16
      %v2947 = vshll.u32 %v2913, 16
      %v2949 = vrot.slane %v2947, 1
      %v2950 = vor.u32 %v2945, %v2949
      %v2952 = vshrl.u32 %v2914, 16
      %v2954 = vshll.u32 %v2914, 16
      %v2956 = vrot.slane %v2954, 1
      %v2957 = vor.u32 %v2952, %v2956
      %v2959 = vshrl.u32 %v2915, 16
      %v2961 = vshll.u32 %v2915, 16
      %v2963 = vrot.slane %v2961, 1
      %v2964 = vor.u32 %v2959, %v2963
      %v2966 = vshrl.u32 %v2916, 16
      %v2968 = vshll.u32 %v2916, 16
      %v2970 = vrot.slane %v2968, 1
      %v2971 = vor.u32 %v2966, %v2970
      %v2973 = vshrl.u32 %v2917, 16
      %v2975 = vshll.u32 %v2917, 16
      %v2977 = vrot.slane %v2975, 1
      %v2978 = vor.u32 %v2973, %v2977
      %v2980 = vshrl.u32 %v2918, 16
      %v2982 = vshll.u32 %v2918, 16
      %v2984 = vrot.slane %v2982, 1
      %v2985 = vor.u32 %v2980, %v2984
      %v2987 = vshrl.u32 %v2919, 16
      %v2989 = vshll.u32 %v2919, 16
      %v2991 = vrot.slane %v2989, 1
      %v2992 = vor.u32 %v2987, %v2991
      %v2994 = vshrl.u32 %v2920, 16
      %v2996 = vshll.u32 %v2920, 16
      %v2998 = vrot.slane %v2996, 1
      %v2999 = vor.u32 %v2994, %v2998
      %v3001 = vshrl.u32 %v2921, 16
      %v3003 = vshll.u32 %v2921, 16
      %v3005 = vrot.slane %v3003, 1
      %v3006 = vor.u32 %v3001, %v3005
      %v3008 = vshrl.u32 %v2922, 16
      %v3010 = vshll.u32 %v2922, 16
      %v3012 = vrot.slane %v3010, 1
      %v3013 = vor.u32 %v3008, %v3012
      %3014 = vrot.lane.b32.xlu0 %v2929, 28
      %v3015 = vpop.permute.xlu0 %3014
      %3016 = vrot.lane.b32.xlu0 %v2936, 28
      %v3017 = vpop.permute.xlu0 %3016
      %3018 = vrot.lane.b32.xlu0 %v2943, 28
      %v3019 = vpop.permute.xlu0 %3018
      %3020 = vrot.lane.b32.xlu0 %v2950, 28
      %v3021 = vpop.permute.xlu0 %3020
      %3022 = vrot.lane.b32.xlu0 %v2957, 28
      %v3023 = vpop.permute.xlu0 %3022
      %3024 = vrot.lane.b32.xlu0 %v2964, 28
      %v3025 = vpop.permute.xlu0 %3024
      %3026 = vrot.lane.b32.xlu0 %v2971, 28
      %v3027 = vpop.permute.xlu0 %3026
      %3028 = vrot.lane.b32.xlu0 %v2978, 28
      %v3029 = vpop.permute.xlu0 %3028
      %3030 = vrot.lane.b32.xlu0 %v2985, 28
      %v3031 = vpop.permute.xlu0 %3030
      %3032 = vrot.lane.b32.xlu0 %v2992, 28
      %v3033 = vpop.permute.xlu0 %3032
      %3034 = vrot.lane.b32.xlu0 %v2999, 28
      %v3035 = vpop.permute.xlu0 %3034
      %3036 = vrot.lane.b32.xlu0 %v3006, 28
      %v3037 = vpop.permute.xlu0 %3036
      %3038 = vrot.lane.b32.xlu0 %v3013, 28
      %v3039 = vpop.permute.xlu0 %3038
      %vm3053 = vcmask 260320
      %vm3054 = vmand %vm3053, %vm1555
      %v3055 = vld [vmem:[#allocation3] sm:$0x7f]
      %v3056 = vsel %vm3054, %v3015, %v3055
      %3057 = vst [vmem:[#allocation3] sm:$0x7f] %v3056
      %v3058 = vld [vmem:[#allocation3 + $0x8] sm:$0x7f]
      %v3059 = vsel %vm3054, %v3017, %v3058
      %3060 = vst [vmem:[#allocation3 + $0x8] sm:$0x7f] %v3059
      %v3061 = vld [vmem:[#allocation3 + $0x10] sm:$0x7f]
      %v3062 = vsel %vm3054, %v3019, %v3061
      %3063 = vst [vmem:[#allocation3 + $0x10] sm:$0x7f] %v3062
      %v3064 = vld [vmem:[#allocation3 + $0x18] sm:$0x7f]
      %v3065 = vsel %vm3054, %v3021, %v3064
      %3066 = vst [vmem:[#allocation3 + $0x18] sm:$0x7f] %v3065
      %v3067 = vld [vmem:[#allocation3 + $0x20] sm:$0x7f]
      %v3068 = vsel %vm3054, %v3023, %v3067
      %3069 = vst [vmem:[#allocation3 + $0x20] sm:$0x7f] %v3068
      %v3070 = vld [vmem:[#allocation3 + $0x28] sm:$0x7f]
      %v3071 = vsel %vm3054, %v3025, %v3070
      %3072 = vst [vmem:[#allocation3 + $0x28] sm:$0x7f] %v3071
      %v3073 = vld [vmem:[#allocation3 + $0x30] sm:$0x7f]
      %v3074 = vsel %vm3054, %v3027, %v3073
      %3075 = vst [vmem:[#allocation3 + $0x30] sm:$0x7f] %v3074
      %v3076 = vld [vmem:[#allocation3 + $0x38] sm:$0x7f]
      %v3077 = vsel %vm3054, %v3029, %v3076
      %3078 = vst [vmem:[#allocation3 + $0x38] sm:$0x7f] %v3077
      %v3079 = vld [vmem:[#allocation3 + $0x40] sm:$0x7f]
      %v3080 = vsel %vm3054, %v3031, %v3079
      %3081 = vst [vmem:[#allocation3 + $0x40] sm:$0x7f] %v3080
      %v3082 = vld [vmem:[#allocation3 + $0x48] sm:$0x7f]
      %v3083 = vsel %vm3054, %v3033, %v3082
      %3084 = vst [vmem:[#allocation3 + $0x48] sm:$0x7f] %v3083
      %v3085 = vld [vmem:[#allocation3 + $0x50] sm:$0x7f]
      %v3086 = vsel %vm3054, %v3035, %v3085
      %3087 = vst [vmem:[#allocation3 + $0x50] sm:$0x7f] %v3086
      %v3088 = vld [vmem:[#allocation3 + $0x58] sm:$0x7f]
      %v3089 = vsel %vm3054, %v3037, %v3088
      %3090 = vst [vmem:[#allocation3 + $0x58] sm:$0x7f] %v3089
      %v3091 = vld [vmem:[#allocation3 + $0x60] sm:$0x7f]
      %v3092 = vsel %vm3054, %v3039, %v3091
      %3093 = vst [vmem:[#allocation3 + $0x60] sm:$0x7f] %v3092
      %v3094 = vld [vmem:[%s2660] sm:$0xe]
      %v3095 = vld [vmem:[%s2660 + $0x4] sm:$0xf]
      %v3096 = vld [vmem:[%s2660 + $0x8] sm:$0xe]
      %v3097 = vld [vmem:[%s2660 + $0xc] sm:$0xf]
      %v3098 = vld [vmem:[%s2660 + $0x10] sm:$0xe]
      %v3099 = vld [vmem:[%s2660 + $0x14] sm:$0xf]
      %v3100 = vld [vmem:[%s2660 + $0x18] sm:$0xe]
      %v3101 = vld [vmem:[%s2660 + $0x1c] sm:$0xf]
      %v3102 = vld [vmem:[%s2660 + $0x20] sm:$0xe]
      %v3103 = vld [vmem:[%s2660 + $0x24] sm:$0xf]
      %v3104 = vld [vmem:[%s2660 + $0x28] sm:$0xe]
      %v3105 = vld [vmem:[%s2660 + $0x2c] sm:$0xf]
      %v3106 = vld [vmem:[%s2660 + $0x30] sm:$0xe]
      %v3107 = vld [vmem:[%s2660 + $0x34] sm:$0xf]
      %v3108 = vld [vmem:[%s2660 + $0x38] sm:$0xe]
      %v3109 = vld [vmem:[%s2660 + $0x3c] sm:$0xf]
      %v3110 = vld [vmem:[%s2660 + $0x40] sm:$0xe]
      %v3111 = vld [vmem:[%s2660 + $0x44] sm:$0xf]
      %v3112 = vld [vmem:[%s2660 + $0x48] sm:$0xe]
      %v3113 = vld [vmem:[%s2660 + $0x4c] sm:$0xf]
      %v3114 = vld [vmem:[%s2660 + $0x50] sm:$0xe]
      %v3115 = vld [vmem:[%s2660 + $0x54] sm:$0xf]
      %v3116 = vld [vmem:[%s2660 + $0x58] sm:$0xe]
      %v3117 = vld [vmem:[%s2660 + $0x5c] sm:$0xf]
      %v3118 = vld [vmem:[%s2660 + $0x60] sm:$0xe]
      %v3119 = vld [vmem:[%s2660 + $0x64] sm:$0xf]
      %v3146 = vunpack.c.l.b16 %v3094
      %v3147 = vunpack.c.l.b16 %v3095
      %v3148 = vunpack.c.l.b16 %v3096
      %v3149 = vunpack.c.l.b16 %v3097
      %v3150 = vunpack.c.l.b16 %v3098
      %v3151 = vunpack.c.l.b16 %v3099
      %v3152 = vunpack.c.l.b16 %v3100
      %v3153 = vunpack.c.l.b16 %v3101
      %v3154 = vunpack.c.l.b16 %v3102
      %v3155 = vunpack.c.l.b16 %v3103
      %v3156 = vunpack.c.l.b16 %v3104
      %v3157 = vunpack.c.l.b16 %v3105
      %v3158 = vunpack.c.l.b16 %v3106
      %v3159 = vunpack.c.l.b16 %v3107
      %v3160 = vunpack.c.l.b16 %v3108
      %v3161 = vunpack.c.l.b16 %v3109
      %v3162 = vunpack.c.l.b16 %v3110
      %v3163 = vunpack.c.l.b16 %v3111
      %v3164 = vunpack.c.l.b16 %v3112
      %v3165 = vunpack.c.l.b16 %v3113
      %v3166 = vunpack.c.l.b16 %v3114
      %v3167 = vunpack.c.l.b16 %v3115
      %v3168 = vunpack.c.l.b16 %v3116
      %v3169 = vunpack.c.l.b16 %v3117
      %v3170 = vunpack.c.l.b16 %v3118
      %v3171 = vunpack.c.l.b16 %v3119
      %v3172 = vpack.c.b16 %v3147, %v3146
      %v3173 = vpack.c.b16 %v3149, %v3148
      %v3174 = vpack.c.b16 %v3151, %v3150
      %v3175 = vpack.c.b16 %v3153, %v3152
      %v3176 = vpack.c.b16 %v3155, %v3154
      %v3177 = vpack.c.b16 %v3157, %v3156
      %v3178 = vpack.c.b16 %v3159, %v3158
      %v3179 = vpack.c.b16 %v3161, %v3160
      %v3180 = vpack.c.b16 %v3163, %v3162
      %v3181 = vpack.c.b16 %v3165, %v3164
      %v3182 = vpack.c.b16 %v3167, %v3166
      %v3183 = vpack.c.b16 %v3169, %v3168
      %v3184 = vpack.c.b16 %v3171, %v3170
      %v3185 = vrot.slane %v3172, 1
      %v3186 = vrot.slane %v3173, 1
      %v3187 = vrot.slane %v3174, 1
      %v3188 = vrot.slane %v3175, 1
      %v3189 = vrot.slane %v3176, 1
      %v3190 = vrot.slane %v3177, 1
      %v3191 = vrot.slane %v3178, 1
      %v3192 = vrot.slane %v3179, 1
      %v3193 = vrot.slane %v3180, 1
      %v3194 = vrot.slane %v3181, 1
      %v3195 = vrot.slane %v3182, 1
      %v3196 = vrot.slane %v3183, 1
      %v3197 = vrot.slane %v3184, 1
      %3198 = vrot.lane.b32.xlu0 %v3185, 32
      %v3199 = vpop.permute.xlu0 %3198
      %3200 = vrot.lane.b32.xlu0 %v3186, 32
      %v3201 = vpop.permute.xlu0 %3200
      %3202 = vrot.lane.b32.xlu0 %v3187, 32
      %v3203 = vpop.permute.xlu0 %3202
      %3204 = vrot.lane.b32.xlu0 %v3188, 32
      %v3205 = vpop.permute.xlu0 %3204
      %3206 = vrot.lane.b32.xlu0 %v3189, 32
      %v3207 = vpop.permute.xlu0 %3206
      %3208 = vrot.lane.b32.xlu0 %v3190, 32
      %v3209 = vpop.permute.xlu0 %3208
      %3210 = vrot.lane.b32.xlu0 %v3191, 32
      %v3211 = vpop.permute.xlu0 %3210
      %3212 = vrot.lane.b32.xlu0 %v3192, 32
      %v3213 = vpop.permute.xlu0 %3212
      %3214 = vrot.lane.b32.xlu0 %v3193, 32
      %v3215 = vpop.permute.xlu0 %3214
      %3216 = vrot.lane.b32.xlu0 %v3194, 32
      %v3217 = vpop.permute.xlu0 %3216
      %3218 = vrot.lane.b32.xlu0 %v3195, 32
      %v3219 = vpop.permute.xlu0 %3218
      %3220 = vrot.lane.b32.xlu0 %v3196, 32
      %v3221 = vpop.permute.xlu0 %3220
      %3222 = vrot.lane.b32.xlu0 %v3197, 32
      %v3223 = vpop.permute.xlu0 %3222
      %vm3237 = vcmask 293120
      %vm3238 = vmand %vm3237, %vm1555
      %v3239 = vld [vmem:[#allocation3] sm:$0x7f]
      %v3240 = vsel %vm3238, %v3199, %v3239
      %3241 = vst [vmem:[#allocation3] sm:$0x7f] %v3240
      %v3242 = vld [vmem:[#allocation3 + $0x8] sm:$0x7f]
      %v3243 = vsel %vm3238, %v3201, %v3242
      %3244 = vst [vmem:[#allocation3 + $0x8] sm:$0x7f] %v3243
      %v3245 = vld [vmem:[#allocation3 + $0x10] sm:$0x7f]
      %v3246 = vsel %vm3238, %v3203, %v3245
      %3247 = vst [vmem:[#allocation3 + $0x10] sm:$0x7f] %v3246
      %v3248 = vld [vmem:[#allocation3 + $0x18] sm:$0x7f]
      %v3249 = vsel %vm3238, %v3205, %v3248
      %3250 = vst [vmem:[#allocation3 + $0x18] sm:$0x7f] %v3249
      %v3251 = vld [vmem:[#allocation3 + $0x20] sm:$0x7f]
      %v3252 = vsel %vm3238, %v3207, %v3251
      %3253 = vst [vmem:[#allocation3 + $0x20] sm:$0x7f] %v3252
      %v3254 = vld [vmem:[#allocation3 + $0x28] sm:$0x7f]
      %v3255 = vsel %vm3238, %v3209, %v3254
      %3256 = vst [vmem:[#allocation3 + $0x28] sm:$0x7f] %v3255
      %v3257 = vld [vmem:[#allocation3 + $0x30] sm:$0x7f]
      %v3258 = vsel %vm3238, %v3211, %v3257
      %3259 = vst [vmem:[#allocation3 + $0x30] sm:$0x7f] %v3258
      %v3260 = vld [vmem:[#allocation3 + $0x38] sm:$0x7f]
      %v3261 = vsel %vm3238, %v3213, %v3260
      %3262 = vst [vmem:[#allocation3 + $0x38] sm:$0x7f] %v3261
      %v3263 = vld [vmem:[#allocation3 + $0x40] sm:$0x7f]
      %v3264 = vsel %vm3238, %v3215, %v3263
      %3265 = vst [vmem:[#allocation3 + $0x40] sm:$0x7f] %v3264
      %v3266 = vld [vmem:[#allocation3 + $0x48] sm:$0x7f]
      %v3267 = vsel %vm3238, %v3217, %v3266
      %3268 = vst [vmem:[#allocation3 + $0x48] sm:$0x7f] %v3267
      %v3269 = vld [vmem:[#allocation3 + $0x50] sm:$0x7f]
      %v3270 = vsel %vm3238, %v3219, %v3269
      %3271 = vst [vmem:[#allocation3 + $0x50] sm:$0x7f] %v3270
      %v3272 = vld [vmem:[#allocation3 + $0x58] sm:$0x7f]
      %v3273 = vsel %vm3238, %v3221, %v3272
      %3274 = vst [vmem:[#allocation3 + $0x58] sm:$0x7f] %v3273
      %v3275 = vld [vmem:[#allocation3 + $0x60] sm:$0x7f]
      %v3276 = vsel %vm3238, %v3223, %v3275
      %3277 = vst [vmem:[#allocation3 + $0x60] sm:$0x7f] %v3276
      %v3278 = vld [vmem:[%s622] sm:$0xf]
      %v3279 = vld [vmem:[%s622 + $0x4] sm:$0xf]
      %v3280 = vld [vmem:[%s622 + $0x8] sm:$0xf]
      %v3281 = vld [vmem:[%s622 + $0xc] sm:$0xf]
      %v3282 = vld [vmem:[%s622 + $0x10] sm:$0x3]
      %v3283 = vld [vmem:[%s625] sm:$0x1]
      %v3284 = vld [vmem:[%s628] sm:$0x1]
      %v3285 = vld [vmem:[#allocation3] sm:$0xff]
      %v3286 = vld [vmem:[#allocation3 + $0x8] sm:$0xff]
      %v3287 = vld [vmem:[#allocation3 + $0x10] sm:$0xff]
      %v3288 = vld [vmem:[#allocation3 + $0x18] sm:$0xff]
      %v3289 = vld [vmem:[#allocation3 + $0x20] sm:$0xff]
      %v3290 = vld [vmem:[#allocation3 + $0x28] sm:$0xff]
      %v3291 = vld [vmem:[#allocation3 + $0x30] sm:$0xff]
      %v3292 = vld [vmem:[#allocation3 + $0x38] sm:$0xff]
      %v3293 = vld [vmem:[#allocation3 + $0x40] sm:$0xff]
      %v3294 = vld [vmem:[#allocation3 + $0x48] sm:$0xff]
      %v3295 = vld [vmem:[#allocation3 + $0x50] sm:$0xff]
      %v3296 = vld [vmem:[#allocation3 + $0x58] sm:$0xff]
      %v3297 = vld [vmem:[#allocation3 + $0x60] sm:$0xff]
      %v3303 = vunpack.c.l.b16 %v3278
      %v3304 = vunpack.c.l.b16 %v3279
      %v3305 = vunpack.c.l.b16 %v3280
      %v3306 = vunpack.c.l.b16 %v3281
      %v3307 = vunpack.c.l.b16 %v3282
      %v3308 = vpack.c.b16 %v3304, %v3303
      %v3309 = vpack.c.b16 %v3306, %v3305
      %v3310 = vpack.c.b16 %v3307, %v3307
      %v3314 = vsel %vm1262, %v3285, 0
      %v3317 = vsel %vm1262, %v3286, 0
      %v3320 = vsel %vm1262, %v3287, 0
      %v3323 = vsel %vm1262, %v3288, 0
      %v3326 = vsel %vm1262, %v3289, 0
      %v3329 = vsel %vm1262, %v3290, 0
      %v3332 = vsel %vm1262, %v3291, 0
      %v3335 = vsel %vm1262, %v3292, 0
      %v3338 = vsel %vm1262, %v3293, 0
      %v3341 = vsel %vm1262, %v3294, 0
      %v3344 = vsel %vm1262, %v3295, 0
      %v3347 = vsel %vm1262, %v3296, 0
      %v3350 = vsel %vm1262, %v3297, 0
      %v3353 = vsel %vm1278, %v3310, 0
      %3355 = vmatprep.subr.bf16.mxu0 0
      %3356 = vmatpush1.bf16.msra.mxu0 %v3308
      %3357 = vmatprep.subr.bf16.mxu0 0
      %3358 = vmatpush1.bf16.msra.mxu0 %v3309
      %3359 = vmatprep.subr.bf16.mxu0 0
      %3360 = vmatpush1.bf16.msra.mxu0 %v3353
      %3361 = vmatprep.subr.bf16.mxu0 0
      %3362 = vmatpush1.bf16.msra.mxu0 0
      %3363 = vmatprep.subr.bf16.mxu0 0
      %3364 = vmatpush1.bf16.msra.mxu0 0
      %3365 = vmatprep.subr.bf16.mxu0 0
      %3366 = vmatpush1.bf16.msra.mxu0 0
      %3367 = vmatprep.subr.bf16.mxu0 0
      %3368 = vmatpush1.bf16.msra.mxu0 0
      %3369 = vmatprep.subr.bf16.mxu0 0
      %3370 = vmatpush1.bf16.msra.mxu0 0
      %3371 = vmatprep.subr.bf16.mxu0 0
      %3372 = vmatpush1.bf16.msra.mxu0 0
      %3373 = vmatprep.subr.bf16.mxu0 0
      %3374 = vmatpush1.bf16.msra.mxu0 0
      %3375 = vmatprep.subr.bf16.mxu0 0
      %3376 = vmatpush1.bf16.msra.mxu0 0
      %3377 = vmatprep.subr.bf16.mxu0 0
      %3378 = vmatpush1.bf16.msra.mxu0 0
      %3379 = vmatprep.subr.bf16.mxu0 0
      %3380 = vmatpush1.bf16.msra.mxu0 0
      %3381 = vmatprep.subr.bf16.mxu0 0
      %3382 = vmatpush1.bf16.msra.mxu0 0
      %3383 = vmatprep.subr.bf16.mxu0 0
      %3384 = vmatpush1.bf16.msra.mxu0 0
      %3385 = vmatprep.subr.bf16.mxu0 0
      %3386 = vmatpush1.bf16.msra.mxu0 0
      %3387 = vmatprep.mubr.bf16.mxu0 0
      %3388 = vmatmul.mubr.bf16.gmra.mrb[0].mxu0 %v3314
      %v3389 = vpop.f32.mrb[0].mxu0
      %v3390 = vadd.f32 0.0, %v3389
      %v3391 = vpop.f32.mrb[0].mxu0
      %v3392 = vpop.f32.mrb[0].mxu0
      %v3393 = vadd.f32 0.0, %v3392
      %v3394 = vpop.f32.mrb[0].mxu0
      %3395 = vmatprep.mubr.bf16.mxu0 0
      %3396 = vmatmul.mubr.bf16.gmra.mrb[0].mxu0 %v3317
      %v3397 = vpop.f32.mrb[0].mxu0
      %v3398 = vadd.f32 0.0, %v3397
      %v3399 = vpop.f32.mrb[0].mxu0
      %v3400 = vpop.f32.mrb[0].mxu0
      %v3401 = vadd.f32 0.0, %v3400
      %v3402 = vpop.f32.mrb[0].mxu0
      %3403 = vmatprep.mubr.bf16.mxu0 0
      %3404 = vmatmul.mubr.bf16.gmra.mrb[0].mxu0 %v3320
      %v3405 = vpop.f32.mrb[0].mxu0
      %v3406 = vadd.f32 0.0, %v3405
      %v3407 = vpop.f32.mrb[0].mxu0
      %v3408 = vpop.f32.mrb[0].mxu0
      %v3409 = vadd.f32 0.0, %v3408
      %v3410 = vpop.f32.mrb[0].mxu0
      %3411 = vmatprep.mubr.bf16.mxu0 0
      %3412 = vmatmul.mubr.bf16.gmra.mrb[0].mxu0 %v3323
      %v3413 = vpop.f32.mrb[0].mxu0
      %v3414 = vadd.f32 0.0, %v3413
      %v3415 = vpop.f32.mrb[0].mxu0
      %v3416 = vpop.f32.mrb[0].mxu0
      %v3417 = vadd.f32 0.0, %v3416
      %v3418 = vpop.f32.mrb[0].mxu0
      %3419 = vmatprep.mubr.bf16.mxu0 0
      %3420 = vmatmul.mubr.bf16.gmra.mrb[0].mxu0 %v3326
      %v3421 = vpop.f32.mrb[0].mxu0
      %v3422 = vadd.f32 0.0, %v3421
      %v3423 = vpop.f32.mrb[0].mxu0
      %v3424 = vpop.f32.mrb[0].mxu0
      %v3425 = vadd.f32 0.0, %v3424
      %v3426 = vpop.f32.mrb[0].mxu0
      %3427 = vmatprep.mubr.bf16.mxu0 0
      %3428 = vmatmul.mubr.bf16.gmra.mrb[0].mxu0 %v3329
      %v3429 = vpop.f32.mrb[0].mxu0
      %v3430 = vadd.f32 0.0, %v3429
      %v3431 = vpop.f32.mrb[0].mxu0
      %v3432 = vpop.f32.mrb[0].mxu0
      %v3433 = vadd.f32 0.0, %v3432
      %v3434 = vpop.f32.mrb[0].mxu0
      %3435 = vmatprep.mubr.bf16.mxu0 0
      %3436 = vmatmul.mubr.bf16.gmra.mrb[0].mxu0 %v3332
      %v3437 = vpop.f32.mrb[0].mxu0
      %v3438 = vadd.f32 0.0, %v3437
      %v3439 = vpop.f32.mrb[0].mxu0
      %v3440 = vpop.f32.mrb[0].mxu0
      %v3441 = vadd.f32 0.0, %v3440
      %v3442 = vpop.f32.mrb[0].mxu0
      %3443 = vmatprep.mubr.bf16.mxu0 0
      %3444 = vmatmul.mubr.bf16.gmra.mrb[0].mxu0 %v3335
      %v3445 = vpop.f32.mrb[0].mxu0
      %v3446 = vadd.f32 0.0, %v3445
      %v3447 = vpop.f32.mrb[0].mxu0
      %v3448 = vpop.f32.mrb[0].mxu0
      %v3449 = vadd.f32 0.0, %v3448
      %v3450 = vpop.f32.mrb[0].mxu0
      %3451 = vmatprep.mubr.bf16.mxu0 0
      %3452 = vmatmul.mubr.bf16.gmra.mrb[0].mxu0 %v3338
      %v3453 = vpop.f32.mrb[0].mxu0
      %v3454 = vadd.f32 0.0, %v3453
      %v3455 = vpop.f32.mrb[0].mxu0
      %v3456 = vpop.f32.mrb[0].mxu0
      %v3457 = vadd.f32 0.0, %v3456
      %v3458 = vpop.f32.mrb[0].mxu0
      %3459 = vmatprep.mubr.bf16.mxu0 0
      %3460 = vmatmul.mubr.bf16.gmra.mrb[0].mxu0 %v3341
      %v3461 = vpop.f32.mrb[0].mxu0
      %v3462 = vadd.f32 0.0, %v3461
      %v3463 = vpop.f32.mrb[0].mxu0
      %v3464 = vpop.f32.mrb[0].mxu0
      %v3465 = vadd.f32 0.0, %v3464
      %v3466 = vpop.f32.mrb[0].mxu0
      %3467 = vmatprep.mubr.bf16.mxu0 0
      %3468 = vmatmul.mubr.bf16.gmra.mrb[0].mxu0 %v3344
      %v3469 = vpop.f32.mrb[0].mxu0
      %v3470 = vadd.f32 0.0, %v3469
      %v3471 = vpop.f32.mrb[0].mxu0
      %v3472 = vpop.f32.mrb[0].mxu0
      %v3473 = vadd.f32 0.0, %v3472
      %v3474 = vpop.f32.mrb[0].mxu0
      %3475 = vmatprep.mubr.bf16.mxu0 0
      %3476 = vmatmul.mubr.bf16.gmra.mrb[0].mxu0 %v3347
      %v3477 = vpop.f32.mrb[0].mxu0
      %v3478 = vadd.f32 0.0, %v3477
      %v3479 = vpop.f32.mrb[0].mxu0
      %v3480 = vpop.f32.mrb[0].mxu0
      %v3481 = vadd.f32 0.0, %v3480
      %v3482 = vpop.f32.mrb[0].mxu0
      %3483 = vmatprep.mubr.bf16.mxu0 0
      %3484 = vmatmul.mubr.bf16.gmra.mrb[0].mxu0 %v3350
      %v3485 = vpop.f32.mrb[0].mxu0
      %v3486 = vadd.f32 0.0, %v3485
      %v3487 = vpop.f32.mrb[0].mxu0
      %v3488 = vpop.f32.mrb[0].mxu0
      %v3489 = vadd.f32 0.0, %v3488
      %v3490 = vpop.f32.mrb[0].mxu0
      %3491 = vdwg.mxu0
      %v3493 = vlaneseq
      %v3494 = vshrl.u32 %v3493, 7
      %v3495 = vsub.s32 0, %v3494
      %v3496 = vrot.slane %v3283, %v3495
      %v3498 = vmul.f32 %v3390, %v3496
      %v3499 = vmul.f32 %v3393, %v3496
      %v3500 = vmul.f32 %v3398, %v3496
      %v3501 = vmul.f32 %v3401, %v3496
      %v3502 = vmul.f32 %v3406, %v3496
      %v3503 = vmul.f32 %v3409, %v3496
      %v3504 = vmul.f32 %v3414, %v3496
      %v3505 = vmul.f32 %v3417, %v3496
      %v3506 = vmul.f32 %v3422, %v3496
      %v3507 = vmul.f32 %v3425, %v3496
      %v3508 = vmul.f32 %v3430, %v3496
      %v3509 = vmul.f32 %v3433, %v3496
      %v3510 = vmul.f32 %v3438, %v3496
      %v3511 = vmul.f32 %v3441, %v3496
      %v3512 = vmul.f32 %v3446, %v3496
      %v3513 = vmul.f32 %v3449, %v3496
      %v3514 = vmul.f32 %v3454, %v3496
      %v3515 = vmul.f32 %v3457, %v3496
      %v3516 = vmul.f32 %v3462, %v3496
      %v3517 = vmul.f32 %v3465, %v3496
      %v3518 = vmul.f32 %v3470, %v3496
      %v3519 = vmul.f32 %v3473, %v3496
      %v3520 = vmul.f32 %v3478, %v3496
      %v3521 = vmul.f32 %v3481, %v3496
      %v3522 = vmul.f32 %v3486, %v3496
      %v3523 = vmul.f32 %v3489, %v3496
      %v3525 = vlaneseq
      %v3526 = vshrl.u32 %v3525, 7
      %v3527 = vsub.s32 0, %v3526
      %v3528 = vrot.slane %v3284, %v3527
      %v3530 = vadd.f32 %v3498, %v3528
      %v3531 = vadd.f32 %v3499, %v3528
      %v3532 = vadd.f32 %v3500, %v3528
      %v3533 = vadd.f32 %v3501, %v3528
      %v3534 = vadd.f32 %v3502, %v3528
      %v3535 = vadd.f32 %v3503, %v3528
      %v3536 = vadd.f32 %v3504, %v3528
      %v3537 = vadd.f32 %v3505, %v3528
      %v3538 = vadd.f32 %v3506, %v3528
      %v3539 = vadd.f32 %v3507, %v3528
      %v3540 = vadd.f32 %v3508, %v3528
      %v3541 = vadd.f32 %v3509, %v3528
      %v3542 = vadd.f32 %v3510, %v3528
      %v3543 = vadd.f32 %v3511, %v3528
      %v3544 = vadd.f32 %v3512, %v3528
      %v3545 = vadd.f32 %v3513, %v3528
      %v3546 = vadd.f32 %v3514, %v3528
      %v3547 = vadd.f32 %v3515, %v3528
      %v3548 = vadd.f32 %v3516, %v3528
      %v3549 = vadd.f32 %v3517, %v3528
      %v3550 = vadd.f32 %v3518, %v3528
      %v3551 = vadd.f32 %v3519, %v3528
      %v3552 = vadd.f32 %v3520, %v3528
      %v3553 = vadd.f32 %v3521, %v3528
      %v3554 = vadd.f32 %v3522, %v3528
      %v3555 = vadd.f32 %v3523, %v3528
      %v3556 = vmax.f32 %v3530, 0.0
      %v3557 = vmax.f32 %v3531, 0.0
      %v3558 = vmax.f32 %v3532, 0.0
      %v3559 = vmax.f32 %v3533, 0.0
      %v3560 = vmax.f32 %v3534, 0.0
      %v3561 = vmax.f32 %v3535, 0.0
      %v3562 = vmax.f32 %v3536, 0.0
      %v3563 = vmax.f32 %v3537, 0.0
      %v3564 = vmax.f32 %v3538, 0.0
      %v3565 = vmax.f32 %v3539, 0.0
      %v3566 = vmax.f32 %v3540, 0.0
      %v3567 = vmax.f32 %v3541, 0.0
      %v3568 = vmax.f32 %v3542, 0.0
      %v3569 = vmax.f32 %v3543, 0.0
      %v3570 = vmax.f32 %v3544, 0.0
      %v3571 = vmax.f32 %v3545, 0.0
      %v3572 = vmax.f32 %v3546, 0.0
      %v3573 = vmax.f32 %v3547, 0.0
      %v3574 = vmax.f32 %v3548, 0.0
      %v3575 = vmax.f32 %v3549, 0.0
      %v3576 = vmax.f32 %v3550, 0.0
      %v3577 = vmax.f32 %v3551, 0.0
      %v3578 = vmax.f32 %v3552, 0.0
      %v3579 = vmax.f32 %v3553, 0.0
      %v3580 = vmax.f32 %v3554, 0.0
      %v3581 = vmax.f32 %v3555, 0.0
      %3582 = vst.msk [vmem:[#allocation5] sm:$0xff] %vm1397, %v3556
      %3583 = vst.msk [vmem:[#allocation5 + $0x8] sm:$0xff] %vm1397, %v3557
      %3584 = vst.msk [vmem:[#allocation5 + $0x10] sm:$0xff] %vm1397, %v3558
      %3585 = vst.msk [vmem:[#allocation5 + $0x18] sm:$0xff] %vm1397, %v3559
      %3586 = vst.msk [vmem:[#allocation5 + $0x20] sm:$0xff] %vm1397, %v3560
      %3587 = vst.msk [vmem:[#allocation5 + $0x28] sm:$0xff] %vm1397, %v3561
      %3588 = vst.msk [vmem:[#allocation5 + $0x30] sm:$0xff] %vm1397, %v3562
      %3589 = vst.msk [vmem:[#allocation5 + $0x38] sm:$0xff] %vm1397, %v3563
      %3590 = vst.msk [vmem:[#allocation5 + $0x40] sm:$0xff] %vm1397, %v3564
      %3591 = vst.msk [vmem:[#allocation5 + $0x48] sm:$0xff] %vm1397, %v3565
      %3592 = vst.msk [vmem:[#allocation5 + $0x50] sm:$0xff] %vm1397, %v3566
      %3593 = vst.msk [vmem:[#allocation5 + $0x58] sm:$0xff] %vm1397, %v3567
      %3594 = vst.msk [vmem:[#allocation5 + $0x60] sm:$0xff] %vm1397, %v3568
      %3595 = vst.msk [vmem:[#allocation5 + $0x68] sm:$0xff] %vm1397, %v3569
      %3596 = vst.msk [vmem:[#allocation5 + $0x70] sm:$0xff] %vm1397, %v3570
      %3597 = vst.msk [vmem:[#allocation5 + $0x78] sm:$0xff] %vm1397, %v3571
      %3598 = vst.msk [vmem:[#allocation5 + $0x80] sm:$0xff] %vm1397, %v3572
      %3599 = vst.msk [vmem:[#allocation5 + $0x88] sm:$0xff] %vm1397, %v3573
      %3600 = vst.msk [vmem:[#allocation5 + $0x90] sm:$0xff] %vm1397, %v3574
      %3601 = vst.msk [vmem:[#allocation5 + $0x98] sm:$0xff] %vm1397, %v3575
      %3602 = vst.msk [vmem:[#allocation5 + $0xa0] sm:$0xff] %vm1397, %v3576
      %3603 = vst.msk [vmem:[#allocation5 + $0xa8] sm:$0xff] %vm1397, %v3577
      %3604 = vst.msk [vmem:[#allocation5 + $0xb0] sm:$0xff] %vm1397, %v3578
      %3605 = vst.msk [vmem:[#allocation5 + $0xb8] sm:$0xff] %vm1397, %v3579
      %3606 = vst.msk [vmem:[#allocation5 + $0xc0] sm:$0xff] %vm1397, %v3580
      %3607 = vst.msk [vmem:[#allocation5 + $0xc8] sm:$0xff] %vm1397, %v3581
      loop: start=0, step=1, limit=3
      $region73: #{depthwise_rpn_forward.1} parent=71 // loop_pre_header
        _
      $region74: #{depthwise_rpn_forward.1} parent=71 // loop_header
        %s3609 = sphi 0, %s3613
        %p3610 = scmp.ge.s32.totalorder %s3609, 3
      $region75: #{depthwise_rpn_forward.1} parent=71 // loop_header_branch
        %3612 = sbr.rel (%p3610) target = $region79
      $region76: #{depthwise_rpn_forward.1} parent=71 // loop_body
        %s3614 = smul.u32 %s3609, 3
        %s3615 = smul.u32 %s3609, 48
        %s3616 = scalar_lea.vmem [#allocation5], %s3615
        %v3617 = vld [vmem:[%s3616] sm:$0xff]
        %v3618 = vld [vmem:[%s3616 + $0x8] sm:$0xff]
        %v3619 = vld [vmem:[%s3616 + $0x10] sm:$0xff]
        %v3620 = vld [vmem:[%s3616 + $0x18] sm:$0xff]
        %v3621 = vld [vmem:[%s3616 + $0x20] sm:$0xff]
        %v3622 = vld [vmem:[%s3616 + $0x28] sm:$0xff]
        %v3623 = vld [vmem:[#allocation4] sm:$0x1]
        %v3624 = vlaneseq
        %v3625 = vshrl.u32 %v3624, 7
        %v3626 = vsub.s32 0, %v3625
        %v3627 = vrot.slane %v3623, %v3626
        %v3628 = vmul.f32 %v3617, %v3627
        %v3629 = vmul.f32 %v3618, %v3627
        %v3630 = vmul.f32 %v3619, %v3627
        %v3631 = vmul.f32 %v3620, %v3627
        %v3632 = vmul.f32 %v3621, %v3627
        %v3633 = vmul.f32 %v3622, %v3627
        %v3634 = vadd.f32 %v3628, 0.0
        %v3635 = vadd.f32 %v3629, 0.0
        %v3636 = vadd.f32 %v3630, 0.0
        %v3637 = vadd.f32 %v3631, 0.0
        %v3638 = vadd.f32 %v3632, 0.0
        %v3639 = vadd.f32 %v3633, 0.0
        %v3640 = vld [vmem:[#allocation4 + $0x1] sm:$0x1]
        %v3641 = vrot.slane %v3617, 1
        %v3642 = vrot.slane %v3618, 1
        %v3643 = vrot.slane %v3619, 1
        %v3644 = vrot.slane %v3620, 1
        %v3645 = vrot.slane %v3621, 1
        %v3646 = vrot.slane %v3622, 1
        %v3647 = vlaneseq
        %v3648 = vshrl.u32 %v3647, 7
        %vm3649 = vcmp.lt.s32.totalorder %v3648, 7
        %v3650 = vsel %vm3649, %v3645, %v3646
        %v3651 = vsel %vm3649, %v3644, %v3645
        %v3652 = vsel %vm3649, %v3643, %v3644
        %v3653 = vsel %vm3649, %v3642, %v3643
        %v3654 = vsel %vm3649, %v3641, %v3642
        %v3655 = vsel %vm3649, %v3646, %v3641
        %v3656 = vlaneseq
        %v3657 = vshrl.u32 %v3656, 7
        %v3658 = vsub.s32 0, %v3657
        %v3659 = vrot.slane %v3640, %v3658
        %v3660 = vmul.f32 %v3654, %v3659
        %v3661 = vmul.f32 %v3653, %v3659
        %v3662 = vmul.f32 %v3652, %v3659
        %v3663 = vmul.f32 %v3651, %v3659
        %v3664 = vmul.f32 %v3650, %v3659
        %v3665 = vmul.f32 %v3655, %v3659
        %v3666 = vadd.f32 %v3634, %v3660
        %v3667 = vadd.f32 %v3635, %v3661
        %v3668 = vadd.f32 %v3636, %v3662
        %v3669 = vadd.f32 %v3637, %v3663
        %v3670 = vadd.f32 %v3638, %v3664
        %v3671 = vadd.f32 %v3639, %v3665
        %v3672 = vld [vmem:[#allocation4 + $0x2] sm:$0x1]
        %v3673 = vrot.slane %v3617, 2
        %v3674 = vrot.slane %v3618, 2
        %v3675 = vrot.slane %v3619, 2
        %v3676 = vrot.slane %v3620, 2
        %v3677 = vrot.slane %v3621, 2
        %v3678 = vrot.slane %v3622, 2
        %vm3679 = vcmp.lt.s32.totalorder %v3648, 6
        %v3680 = vsel %vm3679, %v3677, %v3678
        %v3681 = vsel %vm3679, %v3676, %v3677
        %v3682 = vsel %vm3679, %v3675, %v3676
        %v3683 = vsel %vm3679, %v3674, %v3675
        %v3684 = vsel %vm3679, %v3673, %v3674
        %v3685 = vsel %vm3679, %v3678, %v3673
        %v3686 = vlaneseq
        %v3687 = vshrl.u32 %v3686, 7
        %v3688 = vsub.s32 0, %v3687
        %v3689 = vrot.slane %v3672, %v3688
        %v3690 = vmul.f32 %v3684, %v3689
        %v3691 = vmul.f32 %v3683, %v3689
        %v3692 = vmul.f32 %v3682, %v3689
        %v3693 = vmul.f32 %v3681, %v3689
        %v3694 = vmul.f32 %v3680, %v3689
        %v3695 = vmul.f32 %v3685, %v3689
        %v3696 = vadd.f32 %v3666, %v3690
        %v3697 = vadd.f32 %v3667, %v3691
        %v3698 = vadd.f32 %v3668, %v3692
        %v3699 = vadd.f32 %v3669, %v3693
        %v3700 = vadd.f32 %v3670, %v3694
        %v3701 = vadd.f32 %v3671, %v3695
        %v3702 = vld [vmem:[#allocation4 + $0x3] sm:$0x1]
        %v3703 = vrot.slane %v3617, 3
        %v3704 = vrot.slane %v3618, 3
        %v3705 = vrot.slane %v3619, 3
        %v3706 = vrot.slane %v3620, 3
        %v3707 = vrot.slane %v3621, 3
        %v3708 = vrot.slane %v3622, 3
        %vm3709 = vcmp.lt.s32.totalorder %v3648, 5
        %v3710 = vsel %vm3709, %v3707, %v3708
        %v3711 = vsel %vm3709, %v3706, %v3707
        %v3712 = vsel %vm3709, %v3705, %v3706
        %v3713 = vsel %vm3709, %v3704, %v3705
        %v3714 = vsel %vm3709, %v3703, %v3704
        %v3715 = vsel %vm3709, %v3708, %v3703
        %v3716 = vlaneseq
        %v3717 = vshrl.u32 %v3716, 7
        %v3718 = vsub.s32 0, %v3717
        %v3719 = vrot.slane %v3702, %v3718
        %v3720 = vmul.f32 %v3714, %v3719
        %v3721 = vmul.f32 %v3713, %v3719
        %v3722 = vmul.f32 %v3712, %v3719
        %v3723 = vmul.f32 %v3711, %v3719
        %v3724 = vmul.f32 %v3710, %v3719
        %v3725 = vmul.f32 %v3715, %v3719
        %v3726 = vadd.f32 %v3696, %v3720
        %v3727 = vadd.f32 %v3697, %v3721
        %v3728 = vadd.f32 %v3698, %v3722
        %v3729 = vadd.f32 %v3699, %v3723
        %v3730 = vadd.f32 %v3700, %v3724
        %v3731 = vadd.f32 %v3701, %v3725
        %v3732 = vld [vmem:[#allocation4 + $0x4] sm:$0x1]
        %v3733 = vrot.slane %v3617, 4
        %v3734 = vrot.slane %v3618, 4
        %v3735 = vrot.slane %v3619, 4
        %v3736 = vrot.slane %v3620, 4
        %v3737 = vrot.slane %v3621, 4
        %v3738 = vrot.slane %v3622, 4
        %vm3739 = vcmp.lt.s32.totalorder %v3648, 4
        %v3740 = vsel %vm3739, %v3737, %v3738
        %v3741 = vsel %vm3739, %v3736, %v3737
        %v3742 = vsel %vm3739, %v3735, %v3736
        %v3743 = vsel %vm3739, %v3734, %v3735
        %v3744 = vsel %vm3739, %v3733, %v3734
        %v3745 = vsel %vm3739, %v3738, %v3733
        %v3746 = vlaneseq
        %v3747 = vshrl.u32 %v3746, 7
        %v3748 = vsub.s32 0, %v3747
        %v3749 = vrot.slane %v3732, %v3748
        %v3750 = vmul.f32 %v3744, %v3749
        %v3751 = vmul.f32 %v3743, %v3749
        %v3752 = vmul.f32 %v3742, %v3749
        %v3753 = vmul.f32 %v3741, %v3749
        %v3754 = vmul.f32 %v3740, %v3749
        %v3755 = vmul.f32 %v3745, %v3749
        %v3756 = vadd.f32 %v3726, %v3750
        %v3757 = vadd.f32 %v3727, %v3751
        %v3758 = vadd.f32 %v3728, %v3752
        %v3759 = vadd.f32 %v3729, %v3753
        %v3760 = vadd.f32 %v3730, %v3754
        %v3761 = vadd.f32 %v3731, %v3755
        %s3762 = sadd.s32 %s3614, 1
        %s3763 = smul.u32 %s3762, 16
        %s3764 = scalar_lea.vmem [#allocation5], %s3763
        %v3765 = vld [vmem:[%s3764] sm:$0xff]
        %v3766 = vld [vmem:[%s3764 + $0x8] sm:$0xff]
        %v3767 = vld [vmem:[%s3764 + $0x10] sm:$0xff]
        %v3768 = vld [vmem:[%s3764 + $0x18] sm:$0xff]
        %v3769 = vld [vmem:[%s3764 + $0x20] sm:$0xff]
        %v3770 = vld [vmem:[%s3764 + $0x28] sm:$0xff]
        %v3771 = vld [vmem:[#allocation4 + $0x10] sm:$0x1]
        %v3772 = vlaneseq
        %v3773 = vshrl.u32 %v3772, 7
        %v3774 = vsub.s32 0, %v3773
        %v3775 = vrot.slane %v3771, %v3774
        %v3776 = vmul.f32 %v3765, %v3775
        %v3777 = vmul.f32 %v3766, %v3775
        %v3778 = vmul.f32 %v3767, %v3775
        %v3779 = vmul.f32 %v3768, %v3775
        %v3780 = vmul.f32 %v3769, %v3775
        %v3781 = vmul.f32 %v3770, %v3775
        %v3782 = vadd.f32 %v3756, %v3776
        %v3783 = vadd.f32 %v3757, %v3777
        %v3784 = vadd.f32 %v3758, %v3778
        %v3785 = vadd.f32 %v3759, %v3779
        %v3786 = vadd.f32 %v3760, %v3780
        %v3787 = vadd.f32 %v3761, %v3781
        %v3788 = vld [vmem:[#allocation4 + $0x11] sm:$0x1]
        %v3789 = vrot.slane %v3765, 1
        %v3790 = vrot.slane %v3766, 1
        %v3791 = vrot.slane %v3767, 1
        %v3792 = vrot.slane %v3768, 1
        %v3793 = vrot.slane %v3769, 1
        %v3794 = vrot.slane %v3770, 1
        %v3795 = vsel %vm3649, %v3793, %v3794
        %v3796 = vsel %vm3649, %v3792, %v3793
        %v3797 = vsel %vm3649, %v3791, %v3792
        %v3798 = vsel %vm3649, %v3790, %v3791
        %v3799 = vsel %vm3649, %v3789, %v3790
        %v3800 = vsel %vm3649, %v3794, %v3789
        %v3801 = vlaneseq
        %v3802 = vshrl.u32 %v3801, 7
        %v3803 = vsub.s32 0, %v3802
        %v3804 = vrot.slane %v3788, %v3803
        %v3805 = vmul.f32 %v3799, %v3804
        %v3806 = vmul.f32 %v3798, %v3804
        %v3807 = vmul.f32 %v3797, %v3804
        %v3808 = vmul.f32 %v3796, %v3804
        %v3809 = vmul.f32 %v3795, %v3804
        %v3810 = vmul.f32 %v3800, %v3804
        %v3811 = vadd.f32 %v3782, %v3805
        %v3812 = vadd.f32 %v3783, %v3806
        %v3813 = vadd.f32 %v3784, %v3807
        %v3814 = vadd.f32 %v3785, %v3808
        %v3815 = vadd.f32 %v3786, %v3809
        %v3816 = vadd.f32 %v3787, %v3810
        %v3817 = vld [vmem:[#allocation4 + $0x12] sm:$0x1]
        %v3818 = vrot.slane %v3765, 2
        %v3819 = vrot.slane %v3766, 2
        %v3820 = vrot.slane %v3767, 2
        %v3821 = vrot.slane %v3768, 2
        %v3822 = vrot.slane %v3769, 2
        %v3823 = vrot.slane %v3770, 2
        %v3824 = vsel %vm3679, %v3822, %v3823
        %v3825 = vsel %vm3679, %v3821, %v3822
        %v3826 = vsel %vm3679, %v3820, %v3821
        %v3827 = vsel %vm3679, %v3819, %v3820
        %v3828 = vsel %vm3679, %v3818, %v3819
        %v3829 = vsel %vm3679, %v3823, %v3818
        %v3830 = vlaneseq
        %v3831 = vshrl.u32 %v3830, 7
        %v3832 = vsub.s32 0, %v3831
        %v3833 = vrot.slane %v3817, %v3832
        %v3834 = vmul.f32 %v3828, %v3833
        %v3835 = vmul.f32 %v3827, %v3833
        %v3836 = vmul.f32 %v3826, %v3833
        %v3837 = vmul.f32 %v3825, %v3833
        %v3838 = vmul.f32 %v3824, %v3833
        %v3839 = vmul.f32 %v3829, %v3833
        %v3840 = vadd.f32 %v3811, %v3834
        %v3841 = vadd.f32 %v3812, %v3835
        %v3842 = vadd.f32 %v3813, %v3836
        %v3843 = vadd.f32 %v3814, %v3837
        %v3844 = vadd.f32 %v3815, %v3838
        %v3845 = vadd.f32 %v3816, %v3839
        %v3846 = vld [vmem:[#allocation4 + $0x13] sm:$0x1]
        %v3847 = vrot.slane %v3765, 3
        %v3848 = vrot.slane %v3766, 3
        %v3849 = vrot.slane %v3767, 3
        %v3850 = vrot.slane %v3768, 3
        %v3851 = vrot.slane %v3769, 3
        %v3852 = vrot.slane %v3770, 3
        %v3853 = vsel %vm3709, %v3851, %v3852
        %v3854 = vsel %vm3709, %v3850, %v3851
        %v3855 = vsel %vm3709, %v3849, %v3850
        %v3856 = vsel %vm3709, %v3848, %v3849
        %v3857 = vsel %vm3709, %v3847, %v3848
        %v3858 = vsel %vm3709, %v3852, %v3847
        %v3859 = vlaneseq
        %v3860 = vshrl.u32 %v3859, 7
        %v3861 = vsub.s32 0, %v3860
        %v3862 = vrot.slane %v3846, %v3861
        %v3863 = vmul.f32 %v3857, %v3862
        %v3864 = vmul.f32 %v3856, %v3862
        %v3865 = vmul.f32 %v3855, %v3862
        %v3866 = vmul.f32 %v3854, %v3862
        %v3867 = vmul.f32 %v3853, %v3862
        %v3868 = vmul.f32 %v3858, %v3862
        %v3869 = vadd.f32 %v3840, %v3863
        %v3870 = vadd.f32 %v3841, %v3864
        %v3871 = vadd.f32 %v3842, %v3865
        %v3872 = vadd.f32 %v3843, %v3866
        %v3873 = vadd.f32 %v3844, %v3867
        %v3874 = vadd.f32 %v3845, %v3868
        %v3875 = vld [vmem:[#allocation4 + $0x14] sm:$0x1]
        %v3876 = vrot.slane %v3765, 4
        %v3877 = vrot.slane %v3766, 4
        %v3878 = vrot.slane %v3767, 4
        %v3879 = vrot.slane %v3768, 4
        %v3880 = vrot.slane %v3769, 4
        %v3881 = vrot.slane %v3770, 4
        %v3882 = vsel %vm3739, %v3880, %v3881
        %v3883 = vsel %vm3739, %v3879, %v3880
        %v3884 = vsel %vm3739, %v3878, %v3879
        %v3885 = vsel %vm3739, %v3877, %v3878
        %v3886 = vsel %vm3739, %v3876, %v3877
        %v3887 = vsel %vm3739, %v3881, %v3876
        %v3888 = vlaneseq
        %v3889 = vshrl.u32 %v3888, 7
        %v3890 = vsub.s32 0, %v3889
        %v3891 = vrot.slane %v3875, %v3890
        %v3892 = vmul.f32 %v3886, %v3891
        %v3893 = vmul.f32 %v3885, %v3891
        %v3894 = vmul.f32 %v3884, %v3891
        %v3895 = vmul.f32 %v3883, %v3891
        %v3896 = vmul.f32 %v3882, %v3891
        %v3897 = vmul.f32 %v3887, %v3891
        %v3898 = vadd.f32 %v3869, %v3892
        %v3899 = vadd.f32 %v3870, %v3893
        %v3900 = vadd.f32 %v3871, %v3894
        %v3901 = vadd.f32 %v3872, %v3895
        %v3902 = vadd.f32 %v3873, %v3896
        %v3903 = vadd.f32 %v3874, %v3897
        %s3904 = sadd.s32 %s3614, 2
        %s3905 = smul.u32 %s3904, 16
        %s3906 = scalar_lea.vmem [#allocation5], %s3905
        %v3907 = vld [vmem:[%s3906] sm:$0xff]
        %v3908 = vld [vmem:[%s3906 + $0x8] sm:$0xff]
        %v3909 = vld [vmem:[%s3906 + $0x10] sm:$0xff]
        %v3910 = vld [vmem:[%s3906 + $0x18] sm:$0xff]
        %v3911 = vld [vmem:[%s3906 + $0x20] sm:$0xff]
        %v3912 = vld [vmem:[%s3906 + $0x28] sm:$0xff]
        %v3913 = vld [vmem:[#allocation4 + $0x20] sm:$0x1]
        %v3914 = vlaneseq
        %v3915 = vshrl.u32 %v3914, 7
        %v3916 = vsub.s32 0, %v3915
        %v3917 = vrot.slane %v3913, %v3916
        %v3918 = vmul.f32 %v3907, %v3917
        %v3919 = vmul.f32 %v3908, %v3917
        %v3920 = vmul.f32 %v3909, %v3917
        %v3921 = vmul.f32 %v3910, %v3917
        %v3922 = vmul.f32 %v3911, %v3917
        %v3923 = vmul.f32 %v3912, %v3917
        %v3924 = vadd.f32 %v3898, %v3918
        %v3925 = vadd.f32 %v3899, %v3919
        %v3926 = vadd.f32 %v3900, %v3920
        %v3927 = vadd.f32 %v3901, %v3921
        %v3928 = vadd.f32 %v3902, %v3922
        %v3929 = vadd.f32 %v3903, %v3923
        %v3930 = vld [vmem:[#allocation4 + $0x21] sm:$0x1]
        %v3931 = vrot.slane %v3907, 1
        %v3932 = vrot.slane %v3908, 1
        %v3933 = vrot.slane %v3909, 1
        %v3934 = vrot.slane %v3910, 1
        %v3935 = vrot.slane %v3911, 1
        %v3936 = vrot.slane %v3912, 1
        %v3937 = vsel %vm3649, %v3935, %v3936
        %v3938 = vsel %vm3649, %v3934, %v3935
        %v3939 = vsel %vm3649, %v3933, %v3934
        %v3940 = vsel %vm3649, %v3932, %v3933
        %v3941 = vsel %vm3649, %v3931, %v3932
        %v3942 = vsel %vm3649, %v3936, %v3931
        %v3943 = vlaneseq
        %v3944 = vshrl.u32 %v3943, 7
        %v3945 = vsub.s32 0, %v3944
        %v3946 = vrot.slane %v3930, %v3945
        %v3947 = vmul.f32 %v3941, %v3946
        %v3948 = vmul.f32 %v3940, %v3946
        %v3949 = vmul.f32 %v3939, %v3946
        %v3950 = vmul.f32 %v3938, %v3946
        %v3951 = vmul.f32 %v3937, %v3946
        %v3952 = vmul.f32 %v3942, %v3946
        %v3953 = vadd.f32 %v3924, %v3947
        %v3954 = vadd.f32 %v3925, %v3948
        %v3955 = vadd.f32 %v3926, %v3949
        %v3956 = vadd.f32 %v3927, %v3950
        %v3957 = vadd.f32 %v3928, %v3951
        %v3958 = vadd.f32 %v3929, %v3952
        %v3959 = vld [vmem:[#allocation4 + $0x22] sm:$0x1]
        %v3960 = vrot.slane %v3907, 2
        %v3961 = vrot.slane %v3908, 2
        %v3962 = vrot.slane %v3909, 2
        %v3963 = vrot.slane %v3910, 2
        %v3964 = vrot.slane %v3911, 2
        %v3965 = vrot.slane %v3912, 2
        %v3966 = vsel %vm3679, %v3964, %v3965
        %v3967 = vsel %vm3679, %v3963, %v3964
        %v3968 = vsel %vm3679, %v3962, %v3963
        %v3969 = vsel %vm3679, %v3961, %v3962
        %v3970 = vsel %vm3679, %v3960, %v3961
        %v3971 = vsel %vm3679, %v3965, %v3960
        %v3972 = vlaneseq
        %v3973 = vshrl.u32 %v3972, 7
        %v3974 = vsub.s32 0, %v3973
        %v3975 = vrot.slane %v3959, %v3974
        %v3976 = vmul.f32 %v3970, %v3975
        %v3977 = vmul.f32 %v3969, %v3975
        %v3978 = vmul.f32 %v3968, %v3975
        %v3979 = vmul.f32 %v3967, %v3975
        %v3980 = vmul.f32 %v3966, %v3975
        %v3981 = vmul.f32 %v3971, %v3975
        %v3982 = vadd.f32 %v3953, %v3976
        %v3983 = vadd.f32 %v3954, %v3977
        %v3984 = vadd.f32 %v3955, %v3978
        %v3985 = vadd.f32 %v3956, %v3979
        %v3986 = vadd.f32 %v3957, %v3980
        %v3987 = vadd.f32 %v3958, %v3981
        %v3988 = vld [vmem:[#allocation4 + $0x23] sm:$0x1]
        %v3989 = vrot.slane %v3907, 3
        %v3990 = vrot.slane %v3908, 3
        %v3991 = vrot.slane %v3909, 3
        %v3992 = vrot.slane %v3910, 3
        %v3993 = vrot.slane %v3911, 3
        %v3994 = vrot.slane %v3912, 3
        %v3995 = vsel %vm3709, %v3993, %v3994
        %v3996 = vsel %vm3709, %v3992, %v3993
        %v3997 = vsel %vm3709, %v3991, %v3992
        %v3998 = vsel %vm3709, %v3990, %v3991
        %v3999 = vsel %vm3709, %v3989, %v3990
        %v4000 = vsel %vm3709, %v3994, %v3989
        %v4001 = vlaneseq
        %v4002 = vshrl.u32 %v4001, 7
        %v4003 = vsub.s32 0, %v4002
        %v4004 = vrot.slane %v3988, %v4003
        %v4005 = vmul.f32 %v3999, %v4004
        %v4006 = vmul.f32 %v3998, %v4004
        %v4007 = vmul.f32 %v3997, %v4004
        %v4008 = vmul.f32 %v3996, %v4004
        %v4009 = vmul.f32 %v3995, %v4004
        %v4010 = vmul.f32 %v4000, %v4004
        %v4011 = vadd.f32 %v3982, %v4005
        %v4012 = vadd.f32 %v3983, %v4006
        %v4013 = vadd.f32 %v3984, %v4007
        %v4014 = vadd.f32 %v3985, %v4008
        %v4015 = vadd.f32 %v3986, %v4009
        %v4016 = vadd.f32 %v3987, %v4010
        %v4017 = vld [vmem:[#allocation4 + $0x24] sm:$0x1]
        %v4018 = vrot.slane %v3907, 4
        %v4019 = vrot.slane %v3908, 4
        %v4020 = vrot.slane %v3909, 4
        %v4021 = vrot.slane %v3910, 4
        %v4022 = vrot.slane %v3911, 4
        %v4023 = vrot.slane %v3912, 4
        %v4024 = vsel %vm3739, %v4022, %v4023
        %v4025 = vsel %vm3739, %v4021, %v4022
        %v4026 = vsel %vm3739, %v4020, %v4021
        %v4027 = vsel %vm3739, %v4019, %v4020
        %v4028 = vsel %vm3739, %v4018, %v4019
        %v4029 = vsel %vm3739, %v4023, %v4018
        %v4030 = vlaneseq
        %v4031 = vshrl.u32 %v4030, 7
        %v4032 = vsub.s32 0, %v4031
        %v4033 = vrot.slane %v4017, %v4032
        %v4034 = vmul.f32 %v4028, %v4033
        %v4035 = vmul.f32 %v4027, %v4033
        %v4036 = vmul.f32 %v4026, %v4033
        %v4037 = vmul.f32 %v4025, %v4033
        %v4038 = vmul.f32 %v4024, %v4033
        %v4039 = vmul.f32 %v4029, %v4033
        %v4040 = vadd.f32 %v4011, %v4034
        %v4041 = vadd.f32 %v4012, %v4035
        %v4042 = vadd.f32 %v4013, %v4036
        %v4043 = vadd.f32 %v4014, %v4037
        %v4044 = vadd.f32 %v4015, %v4038
        %v4045 = vadd.f32 %v4016, %v4039
        %s4046 = sadd.s32 %s3614, 3
        %s4047 = smul.u32 %s4046, 16
        %s4048 = scalar_lea.vmem [#allocation5], %s4047
        %v4049 = vld [vmem:[%s4048] sm:$0xff]
        %v4050 = vld [vmem:[%s4048 + $0x8] sm:$0xff]
        %v4051 = vld [vmem:[%s4048 + $0x10] sm:$0xff]
        %v4052 = vld [vmem:[%s4048 + $0x18] sm:$0xff]
        %v4053 = vld [vmem:[%s4048 + $0x20] sm:$0xff]
        %v4054 = vld [vmem:[%s4048 + $0x28] sm:$0xff]
        %v4055 = vld [vmem:[#allocation4 + $0x30] sm:$0x1]
        %v4056 = vlaneseq
        %v4057 = vshrl.u32 %v4056, 7
        %v4058 = vsub.s32 0, %v4057
        %v4059 = vrot.slane %v4055, %v4058
        %v4060 = vmul.f32 %v4049, %v4059
        %v4061 = vmul.f32 %v4050, %v4059
        %v4062 = vmul.f32 %v4051, %v4059
        %v4063 = vmul.f32 %v4052, %v4059
        %v4064 = vmul.f32 %v4053, %v4059
        %v4065 = vmul.f32 %v4054, %v4059
        %v4066 = vadd.f32 %v4040, %v4060
        %v4067 = vadd.f32 %v4041, %v4061
        %v4068 = vadd.f32 %v4042, %v4062
        %v4069 = vadd.f32 %v4043, %v4063
        %v4070 = vadd.f32 %v4044, %v4064
        %v4071 = vadd.f32 %v4045, %v4065
        %v4072 = vld [vmem:[#allocation4 + $0x31] sm:$0x1]
        %v4073 = vrot.slane %v4049, 1
        %v4074 = vrot.slane %v4050, 1
        %v4075 = vrot.slane %v4051, 1
        %v4076 = vrot.slane %v4052, 1
        %v4077 = vrot.slane %v4053, 1
        %v4078 = vrot.slane %v4054, 1
        %v4079 = vsel %vm3649, %v4077, %v4078
        %v4080 = vsel %vm3649, %v4076, %v4077
        %v4081 = vsel %vm3649, %v4075, %v4076
        %v4082 = vsel %vm3649, %v4074, %v4075
        %v4083 = vsel %vm3649, %v4073, %v4074
        %v4084 = vsel %vm3649, %v4078, %v4073
        %v4085 = vlaneseq
        %v4086 = vshrl.u32 %v4085, 7
        %v4087 = vsub.s32 0, %v4086
        %v4088 = vrot.slane %v4072, %v4087
        %v4089 = vmul.f32 %v4083, %v4088
        %v4090 = vmul.f32 %v4082, %v4088
        %v4091 = vmul.f32 %v4081, %v4088
        %v4092 = vmul.f32 %v4080, %v4088
        %v4093 = vmul.f32 %v4079, %v4088
        %v4094 = vmul.f32 %v4084, %v4088
        %v4095 = vadd.f32 %v4066, %v4089
        %v4096 = vadd.f32 %v4067, %v4090
        %v4097 = vadd.f32 %v4068, %v4091
        %v4098 = vadd.f32 %v4069, %v4092
        %v4099 = vadd.f32 %v4070, %v4093
        %v4100 = vadd.f32 %v4071, %v4094
        %v4101 = vld [vmem:[#allocation4 + $0x32] sm:$0x1]
        %v4102 = vrot.slane %v4049, 2
        %v4103 = vrot.slane %v4050, 2
        %v4104 = vrot.slane %v4051, 2
        %v4105 = vrot.slane %v4052, 2
        %v4106 = vrot.slane %v4053, 2
        %v4107 = vrot.slane %v4054, 2
        %v4108 = vsel %vm3679, %v4106, %v4107
        %v4109 = vsel %vm3679, %v4105, %v4106
        %v4110 = vsel %vm3679, %v4104, %v4105
        %v4111 = vsel %vm3679, %v4103, %v4104
        %v4112 = vsel %vm3679, %v4102, %v4103
        %v4113 = vsel %vm3679, %v4107, %v4102
        %v4114 = vlaneseq
        %v4115 = vshrl.u32 %v4114, 7
        %v4116 = vsub.s32 0, %v4115
        %v4117 = vrot.slane %v4101, %v4116
        %v4118 = vmul.f32 %v4112, %v4117
        %v4119 = vmul.f32 %v4111, %v4117
        %v4120 = vmul.f32 %v4110, %v4117
        %v4121 = vmul.f32 %v4109, %v4117
        %v4122 = vmul.f32 %v4108, %v4117
        %v4123 = vmul.f32 %v4113, %v4117
        %v4124 = vadd.f32 %v4095, %v4118
        %v4125 = vadd.f32 %v4096, %v4119
        %v4126 = vadd.f32 %v4097, %v4120
        %v4127 = vadd.f32 %v4098, %v4121
        %v4128 = vadd.f32 %v4099, %v4122
        %v4129 = vadd.f32 %v4100, %v4123
        %v4130 = vld [vmem:[#allocation4 + $0x33] sm:$0x1]
        %v4131 = vrot.slane %v4049, 3
        %v4132 = vrot.slane %v4050, 3
        %v4133 = vrot.slane %v4051, 3
        %v4134 = vrot.slane %v4052, 3
        %v4135 = vrot.slane %v4053, 3
        %v4136 = vrot.slane %v4054, 3
        %v4137 = vsel %vm3709, %v4135, %v4136
        %v4138 = vsel %vm3709, %v4134, %v4135
        %v4139 = vsel %vm3709, %v4133, %v4134
        %v4140 = vsel %vm3709, %v4132, %v4133
        %v4141 = vsel %vm3709, %v4131, %v4132
        %v4142 = vsel %vm3709, %v4136, %v4131
        %v4143 = vlaneseq
        %v4144 = vshrl.u32 %v4143, 7
        %v4145 = vsub.s32 0, %v4144
        %v4146 = vrot.slane %v4130, %v4145
        %v4147 = vmul.f32 %v4141, %v4146
        %v4148 = vmul.f32 %v4140, %v4146
        %v4149 = vmul.f32 %v4139, %v4146
        %v4150 = vmul.f32 %v4138, %v4146
        %v4151 = vmul.f32 %v4137, %v4146
        %v4152 = vmul.f32 %v4142, %v4146
        %v4153 = vadd.f32 %v4124, %v4147
        %v4154 = vadd.f32 %v4125, %v4148
        %v4155 = vadd.f32 %v4126, %v4149
        %v4156 = vadd.f32 %v4127, %v4150
        %v4157 = vadd.f32 %v4128, %v4151
        %v4158 = vadd.f32 %v4129, %v4152
        %v4159 = vld [vmem:[#allocation4 + $0x34] sm:$0x1]
        %v4160 = vrot.slane %v4049, 4
        %v4161 = vrot.slane %v4050, 4
        %v4162 = vrot.slane %v4051, 4
        %v4163 = vrot.slane %v4052, 4
        %v4164 = vrot.slane %v4053, 4
        %v4165 = vrot.slane %v4054, 4
        %v4166 = vsel %vm3739, %v4164, %v4165
        %v4167 = vsel %vm3739, %v4163, %v4164
        %v4168 = vsel %vm3739, %v4162, %v4163
        %v4169 = vsel %vm3739, %v4161, %v4162
        %v4170 = vsel %vm3739, %v4160, %v4161
        %v4171 = vsel %vm3739, %v4165, %v4160
        %v4172 = vlaneseq
        %v4173 = vshrl.u32 %v4172, 7
        %v4174 = vsub.s32 0, %v4173
        %v4175 = vrot.slane %v4159, %v4174
        %v4176 = vmul.f32 %v4170, %v4175
        %v4177 = vmul.f32 %v4169, %v4175
        %v4178 = vmul.f32 %v4168, %v4175
        %v4179 = vmul.f32 %v4167, %v4175
        %v4180 = vmul.f32 %v4166, %v4175
        %v4181 = vmul.f32 %v4171, %v4175
        %v4182 = vadd.f32 %v4153, %v4176
        %v4183 = vadd.f32 %v4154, %v4177
        %v4184 = vadd.f32 %v4155, %v4178
        %v4185 = vadd.f32 %v4156, %v4179
        %v4186 = vadd.f32 %v4157, %v4180
        %v4187 = vadd.f32 %v4158, %v4181
        %s4188 = sadd.s32 %s3614, 4
        %s4189 = smul.u32 %s4188, 16
        %s4190 = scalar_lea.vmem [#allocation5], %s4189
        %v4191 = vld [vmem:[%s4190] sm:$0xff]
        %v4192 = vld [vmem:[%s4190 + $0x8] sm:$0xff]
        %v4193 = vld [vmem:[%s4190 + $0x10] sm:$0xff]
        %v4194 = vld [vmem:[%s4190 + $0x18] sm:$0xff]
        %v4195 = vld [vmem:[%s4190 + $0x20] sm:$0xff]
        %v4196 = vld [vmem:[%s4190 + $0x28] sm:$0xff]
        %v4197 = vld [vmem:[#allocation4 + $0x40] sm:$0x1]
        %v4198 = vlaneseq
        %v4199 = vshrl.u32 %v4198, 7
        %v4200 = vsub.s32 0, %v4199
        %v4201 = vrot.slane %v4197, %v4200
        %v4202 = vmul.f32 %v4191, %v4201
        %v4203 = vmul.f32 %v4192, %v4201
        %v4204 = vmul.f32 %v4193, %v4201
        %v4205 = vmul.f32 %v4194, %v4201
        %v4206 = vmul.f32 %v4195, %v4201
        %v4207 = vmul.f32 %v4196, %v4201
        %v4208 = vadd.f32 %v4182, %v4202
        %v4209 = vadd.f32 %v4183, %v4203
        %v4210 = vadd.f32 %v4184, %v4204
        %v4211 = vadd.f32 %v4185, %v4205
        %v4212 = vadd.f32 %v4186, %v4206
        %v4213 = vadd.f32 %v4187, %v4207
        %v4214 = vld [vmem:[#allocation4 + $0x41] sm:$0x1]
        %v4215 = vrot.slane %v4191, 1
        %v4216 = vrot.slane %v4192, 1
        %v4217 = vrot.slane %v4193, 1
        %v4218 = vrot.slane %v4194, 1
        %v4219 = vrot.slane %v4195, 1
        %v4220 = vrot.slane %v4196, 1
        %v4221 = vsel %vm3649, %v4219, %v4220
        %v4222 = vsel %vm3649, %v4218, %v4219
        %v4223 = vsel %vm3649, %v4217, %v4218
        %v4224 = vsel %vm3649, %v4216, %v4217
        %v4225 = vsel %vm3649, %v4215, %v4216
        %v4226 = vsel %vm3649, %v4220, %v4215
        %v4227 = vlaneseq
        %v4228 = vshrl.u32 %v4227, 7
        %v4229 = vsub.s32 0, %v4228
        %v4230 = vrot.slane %v4214, %v4229
        %v4231 = vmul.f32 %v4225, %v4230
        %v4232 = vmul.f32 %v4224, %v4230
        %v4233 = vmul.f32 %v4223, %v4230
        %v4234 = vmul.f32 %v4222, %v4230
        %v4235 = vmul.f32 %v4221, %v4230
        %v4236 = vmul.f32 %v4226, %v4230
        %v4237 = vadd.f32 %v4208, %v4231
        %v4238 = vadd.f32 %v4209, %v4232
        %v4239 = vadd.f32 %v4210, %v4233
        %v4240 = vadd.f32 %v4211, %v4234
        %v4241 = vadd.f32 %v4212, %v4235
        %v4242 = vadd.f32 %v4213, %v4236
        %v4243 = vld [vmem:[#allocation4 + $0x42] sm:$0x1]
        %v4244 = vrot.slane %v4191, 2
        %v4245 = vrot.slane %v4192, 2
        %v4246 = vrot.slane %v4193, 2
        %v4247 = vrot.slane %v4194, 2
        %v4248 = vrot.slane %v4195, 2
        %v4249 = vrot.slane %v4196, 2
        %v4250 = vsel %vm3679, %v4248, %v4249
        %v4251 = vsel %vm3679, %v4247, %v4248
        %v4252 = vsel %vm3679, %v4246, %v4247
        %v4253 = vsel %vm3679, %v4245, %v4246
        %v4254 = vsel %vm3679, %v4244, %v4245
        %v4255 = vsel %vm3679, %v4249, %v4244
        %v4256 = vlaneseq
        %v4257 = vshrl.u32 %v4256, 7
        %v4258 = vsub.s32 0, %v4257
        %v4259 = vrot.slane %v4243, %v4258
        %v4260 = vmul.f32 %v4254, %v4259
        %v4261 = vmul.f32 %v4253, %v4259
        %v4262 = vmul.f32 %v4252, %v4259
        %v4263 = vmul.f32 %v4251, %v4259
        %v4264 = vmul.f32 %v4250, %v4259
        %v4265 = vmul.f32 %v4255, %v4259
        %v4266 = vadd.f32 %v4237, %v4260
        %v4267 = vadd.f32 %v4238, %v4261
        %v4268 = vadd.f32 %v4239, %v4262
        %v4269 = vadd.f32 %v4240, %v4263
        %v4270 = vadd.f32 %v4241, %v4264
        %v4271 = vadd.f32 %v4242, %v4265
        %v4272 = vld [vmem:[#allocation4 + $0x43] sm:$0x1]
        %v4273 = vrot.slane %v4191, 3
        %v4274 = vrot.slane %v4192, 3
        %v4275 = vrot.slane %v4193, 3
        %v4276 = vrot.slane %v4194, 3
        %v4277 = vrot.slane %v4195, 3
        %v4278 = vrot.slane %v4196, 3
        %v4279 = vsel %vm3709, %v4277, %v4278
        %v4280 = vsel %vm3709, %v4276, %v4277
        %v4281 = vsel %vm3709, %v4275, %v4276
        %v4282 = vsel %vm3709, %v4274, %v4275
        %v4283 = vsel %vm3709, %v4273, %v4274
        %v4284 = vsel %vm3709, %v4278, %v4273
        %v4285 = vlaneseq
        %v4286 = vshrl.u32 %v4285, 7
        %v4287 = vsub.s32 0, %v4286
        %v4288 = vrot.slane %v4272, %v4287
        %v4289 = vmul.f32 %v4283, %v4288
        %v4290 = vmul.f32 %v4282, %v4288
        %v4291 = vmul.f32 %v4281, %v4288
        %v4292 = vmul.f32 %v4280, %v4288
        %v4293 = vmul.f32 %v4279, %v4288
        %v4294 = vmul.f32 %v4284, %v4288
        %v4295 = vadd.f32 %v4266, %v4289
        %v4296 = vadd.f32 %v4267, %v4290
        %v4297 = vadd.f32 %v4268, %v4291
        %v4298 = vadd.f32 %v4269, %v4292
        %v4299 = vadd.f32 %v4270, %v4293
        %v4300 = vadd.f32 %v4271, %v4294
        %v4301 = vld [vmem:[#allocation4 + $0x44] sm:$0x1]
        %v4302 = vrot.slane %v4191, 4
        %v4303 = vrot.slane %v4192, 4
        %v4304 = vrot.slane %v4193, 4
        %v4305 = vrot.slane %v4194, 4
        %v4306 = vrot.slane %v4195, 4
        %v4307 = vrot.slane %v4196, 4
        %v4308 = vsel %vm3739, %v4306, %v4307
        %v4309 = vsel %vm3739, %v4305, %v4306
        %v4310 = vsel %vm3739, %v4304, %v4305
        %v4311 = vsel %vm3739, %v4303, %v4304
        %v4312 = vsel %vm3739, %v4302, %v4303
        %v4313 = vsel %vm3739, %v4307, %v4302
        %v4314 = vlaneseq
        %v4315 = vshrl.u32 %v4314, 7
        %v4316 = vsub.s32 0, %v4315
        %v4317 = vrot.slane %v4301, %v4316
        %v4318 = vmul.f32 %v4312, %v4317
        %v4319 = vmul.f32 %v4311, %v4317
        %v4320 = vmul.f32 %v4310, %v4317
        %v4321 = vmul.f32 %v4309, %v4317
        %v4322 = vmul.f32 %v4308, %v4317
        %v4323 = vmul.f32 %v4313, %v4317
        %v4324 = vadd.f32 %v4295, %v4318
        %v4325 = vadd.f32 %v4296, %v4319
        %v4326 = vadd.f32 %v4297, %v4320
        %v4327 = vadd.f32 %v4298, %v4321
        %v4328 = vadd.f32 %v4299, %v4322
        %v4329 = vadd.f32 %v4300, %v4323
        %v4330 = vpack.c.bf16 %v4325, %v4324
        %v4331 = vpack.c.bf16 %v4327, %v4326
        %v4332 = vpack.c.bf16 %v4329, %v4328
        %v4333 = vld [vmem:[%s632] sm:$0xf]
        %v4335 = vsel %vm1397, %v4330, 0
        %v4338 = vsel %vm1397, %v4331, 0
        %v4341 = vsel %vm1397, %v4332, 0
        %vm4343 = vcmask 1043456
        %v4345 = vsel %vm4343, %v4333, 0
        %4347 = vmatprep.subr.bf16.mxu0 0
        %4348 = vmatpush1.bf16.msra.mxu0 %v4345
        %4349 = vmatprep.subr.bf16.mxu0 0
        %4350 = vmatpush1.bf16.msra.mxu0 0
        %4351 = vmatprep.subr.bf16.mxu0 0
        %4352 = vmatpush1.bf16.msra.mxu0 0
        %4353 = vmatprep.subr.bf16.mxu0 0
        %4354 = vmatpush1.bf16.msra.mxu0 0
        %4355 = vmatprep.subr.bf16.mxu0 0
        %4356 = vmatpush1.bf16.msra.mxu0 0
        %4357 = vmatprep.subr.bf16.mxu0 0
        %4358 = vmatpush1.bf16.msra.mxu0 0
        %4359 = vmatprep.subr.bf16.mxu0 0
        %4360 = vmatpush1.bf16.msra.mxu0 0
        %4361 = vmatprep.subr.bf16.mxu0 0
        %4362 = vmatpush1.bf16.msra.mxu0 0
        %4363 = vmatprep.subr.bf16.mxu0 0
        %4364 = vmatpush1.bf16.msra.mxu0 0
        %4365 = vmatprep.subr.bf16.mxu0 0
        %4366 = vmatpush1.bf16.msra.mxu0 0
        %4367 = vmatprep.subr.bf16.mxu0 0
        %4368 = vmatpush1.bf16.msra.mxu0 0
        %4369 = vmatprep.subr.bf16.mxu0 0
        %4370 = vmatpush1.bf16.msra.mxu0 0
        %4371 = vmatprep.subr.bf16.mxu0 0
        %4372 = vmatpush1.bf16.msra.mxu0 0
        %4373 = vmatprep.subr.bf16.mxu0 0
        %4374 = vmatpush1.bf16.msra.mxu0 0
        %4375 = vmatprep.subr.bf16.mxu0 0
        %4376 = vmatpush1.bf16.msra.mxu0 0
        %4377 = vmatprep.subr.bf16.mxu0 0
        %4378 = vmatpush1.bf16.msra.mxu0 0
        %4379 = vmatprep.mubr.bf16.mxu0 0
        %4380 = vmatmul.mubr.bf16.gmra.mrb[0].mxu0 %v4335
        %v4381 = vpop.f32.mrb[0].mxu0
        %v4382 = vadd.f32 0.0, %v4381
        %v4383 = vpop.f32.mrb[0].mxu0
        %v4384 = vpop.f32.mrb[0].mxu0
        %v4385 = vadd.f32 0.0, %v4384
        %v4386 = vpop.f32.mrb[0].mxu0
        %4387 = vmatprep.mubr.bf16.mxu0 0
        %4388 = vmatmul.mubr.bf16.gmra.mrb[0].mxu0 %v4338
        %v4389 = vpop.f32.mrb[0].mxu0
        %v4390 = vadd.f32 0.0, %v4389
        %v4391 = vpop.f32.mrb[0].mxu0
        %v4392 = vpop.f32.mrb[0].mxu0
        %v4393 = vadd.f32 0.0, %v4392
        %v4394 = vpop.f32.mrb[0].mxu0
        %4395 = vmatprep.mubr.bf16.mxu0 0
        %4396 = vmatmul.mubr.bf16.gmra.mrb[0].mxu0 %v4341
        %v4397 = vpop.f32.mrb[0].mxu0
        %v4398 = vadd.f32 0.0, %v4397
        %v4399 = vpop.f32.mrb[0].mxu0
        %v4400 = vpop.f32.mrb[0].mxu0
        %v4401 = vadd.f32 0.0, %v4400
        %v4402 = vpop.f32.mrb[0].mxu0
        %4403 = vdwg.mxu0
        %v4404 = vld [vmem:[%s635] sm:$0x1]
        %v4406 = vlaneseq
        %v4407 = vshrl.u32 %v4406, 7
        %v4408 = vsub.s32 0, %v4407
        %v4409 = vrot.slane %v4404, %v4408
        %v4411 = vmul.f32 %v4382, %v4409
        %v4412 = vmul.f32 %v4385, %v4409
        %v4413 = vmul.f32 %v4390, %v4409
        %v4414 = vmul.f32 %v4393, %v4409
        %v4415 = vmul.f32 %v4398, %v4409
        %v4416 = vmul.f32 %v4401, %v4409
        %v4417 = vld [vmem:[%s638] sm:$0x1]
        %v4419 = vlaneseq
        %v4420 = vshrl.u32 %v4419, 7
        %v4421 = vsub.s32 0, %v4420
        %v4422 = vrot.slane %v4417, %v4421
        %v4424 = vadd.f32 %v4411, %v4422
        %v4425 = vadd.f32 %v4412, %v4422
        %v4426 = vadd.f32 %v4413, %v4422
        %v4427 = vadd.f32 %v4414, %v4422
        %v4428 = vadd.f32 %v4415, %v4422
        %v4429 = vadd.f32 %v4416, %v4422
        %v4430 = vmax.f32 %v4424, 0.0
        %v4431 = vmax.f32 %v4425, 0.0
        %v4432 = vmax.f32 %v4426, 0.0
        %v4433 = vmax.f32 %v4427, 0.0
        %v4434 = vmax.f32 %v4428, 0.0
        %v4435 = vmax.f32 %v4429, 0.0
        %v4436 = vpack.c.bf16 %v4431, %v4430
        %v4437 = vpack.c.bf16 %v4433, %v4432
        %v4438 = vpack.c.bf16 %v4435, %v4434
        %v4439 = vld [vmem:[%s642] sm:$0xf]
        %v4440 = vld [vmem:[%s645] sm:$0x1]
        %v4442 = vlaneseq
        %v4443 = vshrl.u32 %v4442, 7
        %v4444 = vsub.s32 0, %v4443
        %v4445 = vrot.slane %v4440, %v4444
        %v4448 = vsel %vm1397, %v4436, 0
        %v4451 = vsel %vm1397, %v4437, 0
        %v4454 = vsel %vm1397, %v4438, 0
        %v4457 = vsel %vm4343, %v4439, 0
        %4459 = vmatprep.subr.bf16.mxu0 0
        %4460 = vmatpush1.bf16.msra.mxu0 %v4457
        %4461 = vmatprep.subr.bf16.mxu0 0
        %4462 = vmatpush1.bf16.msra.mxu0 0
        %4463 = vmatprep.subr.bf16.mxu0 0
        %4464 = vmatpush1.bf16.msra.mxu0 0
        %4465 = vmatprep.subr.bf16.mxu0 0
        %4466 = vmatpush1.bf16.msra.mxu0 0
        %4467 = vmatprep.subr.bf16.mxu0 0
        %4468 = vmatpush1.bf16.msra.mxu0 0
        %4469 = vmatprep.subr.bf16.mxu0 0
        %4470 = vmatpush1.bf16.msra.mxu0 0
        %4471 = vmatprep.subr.bf16.mxu0 0
        %4472 = vmatpush1.bf16.msra.mxu0 0
        %4473 = vmatprep.subr.bf16.mxu0 0
        %4474 = vmatpush1.bf16.msra.mxu0 0
        %4475 = vmatprep.subr.bf16.mxu0 0
        %4476 = vmatpush1.bf16.msra.mxu0 0
        %4477 = vmatprep.subr.bf16.mxu0 0
        %4478 = vmatpush1.bf16.msra.mxu0 0
        %4479 = vmatprep.subr.bf16.mxu0 0
        %4480 = vmatpush1.bf16.msra.mxu0 0
        %4481 = vmatprep.subr.bf16.mxu0 0
        %4482 = vmatpush1.bf16.msra.mxu0 0
        %4483 = vmatprep.subr.bf16.mxu0 0
        %4484 = vmatpush1.bf16.msra.mxu0 0
        %4485 = vmatprep.subr.bf16.mxu0 0
        %4486 = vmatpush1.bf16.msra.mxu0 0
        %4487 = vmatprep.subr.bf16.mxu0 0
        %4488 = vmatpush1.bf16.msra.mxu0 0
        %4489 = vmatprep.subr.bf16.mxu0 0
        %4490 = vmatpush1.bf16.msra.mxu0 0
        %4491 = vmatprep.mubr.bf16.mxu0 0
        %4492 = vmatmul.mubr.bf16.gmra.mrb[0].mxu0 %v4448
        %v4493 = vpop.f32.mrb[0].mxu0
        %v4494 = vadd.f32 %v4445, %v4493
        %v4495 = vpop.f32.mrb[0].mxu0
        %v4496 = vpop.f32.mrb[0].mxu0
        %v4497 = vadd.f32 %v4445, %v4496
        %v4498 = vpop.f32.mrb[0].mxu0
        %4499 = vmatprep.mubr.bf16.mxu0 0
        %4500 = vmatmul.mubr.bf16.gmra.mrb[0].mxu0 %v4451
        %v4501 = vpop.f32.mrb[0].mxu0
        %v4502 = vadd.f32 %v4445, %v4501
        %v4503 = vpop.f32.mrb[0].mxu0
        %v4504 = vpop.f32.mrb[0].mxu0
        %v4505 = vadd.f32 %v4445, %v4504
        %v4506 = vpop.f32.mrb[0].mxu0
        %4507 = vmatprep.mubr.bf16.mxu0 0
        %4508 = vmatmul.mubr.bf16.gmra.mrb[0].mxu0 %v4454
        %v4509 = vpop.f32.mrb[0].mxu0
        %v4510 = vadd.f32 %v4445, %v4509
        %v4511 = vpop.f32.mrb[0].mxu0
        %v4512 = vpop.f32.mrb[0].mxu0
        %v4513 = vadd.f32 %v4445, %v4512
        %v4514 = vpop.f32.mrb[0].mxu0
        %4515 = vdwg.mxu0
        %s4516 = scalar_lea.vmem %s654, %s3615
        %4517 = vst [vmem:[%s4516] sm:$0xff] %v4494
        %4518 = vst [vmem:[%s4516 + $0x8] sm:$0xff] %v4497
        %4519 = vst [vmem:[%s4516 + $0x10] sm:$0xff] %v4502
        %4520 = vst [vmem:[%s4516 + $0x18] sm:$0xff] %v4505
        %4521 = vst [vmem:[%s4516 + $0x20] sm:$0xff] %v4510
        %4522 = vst [vmem:[%s4516 + $0x28] sm:$0xff] %v4513
      $region77: #{depthwise_rpn_forward.1} parent=71 // loop_footer
        %s3613 = sadd.s32 1, %s3609
      $region78: #{depthwise_rpn_forward.1} parent=71 // loop_footer_branch
        %3608 = sbr.rel target = $region74
      $region79: #{depthwise_rpn_forward.1} parent=71 // loop_exit
        _
      %p4523 = scmp.lt.s32.totalorder %s29, 1
      %s4524 = scalar_select %p4523, %s29, 1
      %p4525 = scmp.lt.s32.totalorder %s28, 1
      %s4526 = scalar_select %p4525, %s28, 1
      %s4527 = smul.addr %s4526, 18
      %s4528 = smul.addr %s4524, 36
      %s4529 = sadd.s32 %s4527, %s4528
      %s4530 = smul.addr %s4529, 8
      %s4531 = scalar_lea.vmem %s13, %s4530
      // Predicated region
      $region80: #{depthwise_rpn_forward.1} parent=71 // pred_check
        %p4532 = pneg %p394
      $region81: #{depthwise_rpn_forward.1} parent=71 // pred_check_branch
        %4534 = sbr.rel (%p4532) target = $region83
      $region82: #{depthwise_rpn_forward.1} parent=71 // pred_region
        _
      $region83: #{depthwise_rpn_forward.1} parent=71 // pred_fallthru
        _
    $region72: #{depthwise_rpn_forward.1} parent=5 // pred_fallthru
      _
    %p4535 = scmp.le.s32.totalorder 2, %s19
    // Predicated region
    $region84: #{depthwise_rpn_forward.1} parent=5 // pred_check
      %p4536 = pneg %p4535
    $region85: #{depthwise_rpn_forward.1} parent=5 // pred_check_branch
      %4538 = sbr.rel (%p4536) target = $region87
    $region86: #{depthwise_rpn_forward.1} parent=5 // pred_region
      %s4539 = ssub.s32 %s19, 2
      // Predicated region
      $region88: #{depthwise_rpn_forward.1} parent=86 // pred_check
        %p4540 = pneg %p400
      $region89: #{depthwise_rpn_forward.1} parent=86 // pred_check_branch
        %4542 = sbr.rel (%p4540) target = $region91
      $region90: #{depthwise_rpn_forward.1} parent=86 // pred_region
        %p4543 = scmp.lt.s32.totalorder %s31, 1
        %s4544 = scalar_select %p4543, %s31, 1
        %p4545 = scmp.lt.s32.totalorder %s30, 1
        %s4546 = scalar_select %p4545, %s30, 1
        %s4547 = smul.addr %s4546, 18
        %s4548 = smul.addr %s4544, 36
        %s4549 = sadd.s32 %s4547, %s4548
        %s4550 = smul.addr %s4549, 8
        %s4551 = scalar_lea.vmem %s13, %s4550
      $region91: #{depthwise_rpn_forward.1} parent=86 // pred_fallthru
        _
    $region87: #{depthwise_rpn_forward.1} parent=5 // pred_fallthru
      _
  $region6: #{depthwise_rpn_forward.1} parent=0 // loop_footer
    %s23 = sadd.s32 1, %s19
  $region7: #{depthwise_rpn_forward.1} parent=0 // loop_footer_branch
    %18 = sbr.rel target = $region3
  $region8: #{depthwise_rpn_forward.1} parent=0 // loop_exit
    _

</llo_original>
